<compile_context>
chip_gen: v7x
topology: tpu7x:2x2x1
jax: 0.10.0
libtpu: 0.0.40
codegen_flags: <defaults>
</compile_context>

<pallas_src>
import jax
import jax.numpy as jnp
from jax.experimental import pallas as pl
from jax.experimental.pallas import tpu as pltpu

HIDDEN_SIZE = 500
NUM_CLASSES = 10
IN_FEATURES = 28 * 28          # 784 (kept unpadded; full-array last-dim block)

# Lane-friendly padded dims (multiples of 128) for hidden/output features.
HIDDEN_PAD = 512               # 4 * 128
OUT_PAD = 128                  # logits padded to a full lane tile, sliced to 10 outside

MAX_TILE_B = 512               # multiple of 256; amortizes ~0.35us/step overhead,
                               # ~10 MiB VMEM -> safe on v5e/v6e/v7x.
MIN_TILE_B = 128               # smallest tile we split down to for 2-step grids (v7x)


def _round_up(n, m):
    return ((n + m - 1) // m) * m


def _choose_tile_b(n):
    """n: 8-aligned row count. Pick a batch tile that (a) amortizes per-step
    overhead, (b) fits VMEM on every generation, and (c) gives the 'parallel'
    batch axis >=2 steps when the batch is big enough so both v7x TCs get work."""
    tile_b = min(MAX_TILE_B, n)
    if pl.cdiv(n, tile_b) < 2 and n >= 2 * MIN_TILE_B:
        tile_b = _round_up(pl.cdiv(n, 2), 8)
    return tile_b


def mlp_kernel(x_ref, w1_ref, b1_ref, w2_ref, b2_ref, w3_ref, b3_ref,
               w4_ref, b4_ref, o_ref):
    """Fused 4-layer MLP on one batch tile.

    x arrives as f32 and is cast to bf16 in-kernel (removes the wrapper pad/cast
    op and halves x HBM traffic).  MXU operands are bf16, accumulation is f32
    (preferred_element_type), bias adds stay f32 on the VPU (v5e has no bf16 VPU).
    """
    x = x_ref[...].astype(jnp.bfloat16)
    h = jnp.dot(x, w1_ref[...],
                preferred_element_type=jnp.float32) + b1_ref[...]
    h = jnp.dot(h.astype(jnp.bfloat16), w2_ref[...],
                preferred_element_type=jnp.float32) + b2_ref[...]
    h = jnp.dot(h.astype(jnp.bfloat16), w3_ref[...],
                preferred_element_type=jnp.float32) + b3_ref[...]
    out = jnp.dot(h.astype(jnp.bfloat16), w4_ref[...],
                  preferred_element_type=jnp.float32) + b4_ref[...]
    o_ref[...] = out.astype(o_ref.dtype)


def init_params(key, hidden_size=HIDDEN_SIZE, num_classes=NUM_CLASSES):
    """PyTorch-style (Kaiming-uniform-ish) init; weights stored (out_features, in_features)."""
    dims = [(IN_FEATURES, hidden_size),
            (hidden_size, hidden_size),
            (hidden_size, hidden_size),
            (hidden_size, num_classes)]
    params = []
    for (fan_in, fan_out) in dims:
        key, kw, kb = jax.random.split(key, 3)
        bound = 1.0 / jnp.sqrt(jnp.float32(fan_in))
        w = jax.random.uniform(kw, (fan_out, fan_in), jnp.float32, -bound, bound)
        bias = jax.random.uniform(kb, (fan_out,), jnp.float32, -bound, bound)
        params.append((w, bias))
    return params


def pack_params(params):
    """One-time prep: (out,in) f32 -> zero-padded (in_pad, out_pad) bf16 weights and
    (1, out_pad) f32 bias rows.  Zero padding guarantees padded lanes/sublanes
    contribute exactly 0, so results match the unpadded math.  The first layer's
    input dim stays at 784 (matches the unpadded x)."""
    pad_dims = [(IN_FEATURES, HIDDEN_PAD), (HIDDEN_PAD, HIDDEN_PAD),
                (HIDDEN_PAD, HIDDEN_PAD), (HIDDEN_PAD, OUT_PAD)]
    packed = []
    for (w, bias), (in_pad, out_pad) in zip(params, pad_dims):
        wt = w.T  # (in, out)
        wt = jnp.pad(wt, ((0, in_pad - wt.shape[0]), (0, out_pad - wt.shape[1])))
        b_row = jnp.pad(bias, (0, out_pad - bias.shape[0])).reshape(1, out_pad)
        packed.append((wt.astype(jnp.bfloat16), b_row.astype(jnp.float32)))
    return packed


def mymlp_forward(x_nchw, packed_params):
    """Forward pass of myMLP. x_nchw: (b, c, 28, 28) float32; returns (rows, 10) f32
    where rows = b*c*28*28 // 784 (matches torch's x.reshape(-1, 28*28))."""
    # Matches torch .reshape(-1, 28*28) exactly (rows == b only when c == 1).
    x = x_nchw.reshape(-1, IN_FEATURES).astype(jnp.float32)
    n = x.shape[0]

    # Sublane-align the batch; this pad is skipped for 8-aligned batches (common case).
    n8 = _round_up(n, 8)
    if n8 != n:
        x = jnp.pad(x, ((0, n8 - n), (0, 0)))

    tile_b = _choose_tile_b(n8)
    n_steps = pl.cdiv(n8, tile_b)          # ragged last block handled by Pallas
    grid = (n_steps,)

    (w1, b1), (w2, b2), (w3, b3), (w4, b4) = packed_params
    args = (x, w1, b1, w2, b2, w3, b3, w4, b4)

    def resident(shape):
        # Full-array block whose block index never changes: stays in VMEM across
        # all batch-grid iterations (no per-iteration re-DMA of weights/biases).
        return pl.BlockSpec(shape, lambda i: (0, 0))

    flops = 2 * n_steps * tile_b * (IN_FEATURES * HIDDEN_PAD
                                    + 2 * HIDDEN_PAD * HIDDEN_PAD
                                    + HIDDEN_PAD * OUT_PAD)
    bytes_accessed = (x.size * 4
                      + sum(w.size * 2 + bb.size * 4 for w, bb in packed_params)
                      + n8 * OUT_PAD * 4)

    # TODO(synk): for latency-critical small-batch calls (1-step grid) the kernel is
    # weight-DMA-latency bound; a cross-pallas_call weight prefetch (P10: start the
    # ~2 MiB bf16 weight DMAs in a preceding call, return sem + VMEM refs) would
    # roughly halve small-batch latency.
    out = pl.pallas_call(
        mlp_kernel,
        out_shape=jax.ShapeDtypeStruct((n8, OUT_PAD), jnp.float32),
        grid_spec=pltpu.PrefetchScalarGridSpec(
            num_scalar_prefetch=0,
            grid=grid,
            in_specs=[
                pl.BlockSpec((tile_b, IN_FEATURES), lambda i: (i, 0)),
                resident(w1.shape), resident(b1.shape),
                resident(w2.shape), resident(b2.shape),
                resident(w3.shape), resident(b3.shape),
                resident(w4.shape), resident(b4.shape),
            ],
            out_specs=pl.BlockSpec((tile_b, OUT_PAD), lambda i: (i, 0)),
        ),
        compiler_params=pltpu.CompilerParams(
            dimension_semantics=("parallel",),      # shard batch steps across v7x's 2 TCs
            vmem_limit_bytes=32 * 1024 * 1024,      # explicit headroom (v5e default is 16 MiB)
        ),
        cost_estimate=pl.CostEstimate(flops=flops, transcendentals=0,
                                      bytes_accessed=bytes_accessed),
    )(*args)

    return out[:n, :NUM_CLASSES]


def reference_forward(x_nchw, params):
    """Pure-JAX f32 reference matching nn.Linear semantics (x @ W.T + b)."""
    h = x_nchw.reshape(-1, IN_FEATURES)
    for (w, bias) in params:
        h = h @ w.T + bias
    return h


if __name__ == "__main__":
    key = jax.random.PRNGKey(0)
    key, kx = jax.random.split(key)
    # MNIST-like input: batch=2, channels=1, 28x28.
    x = jax.random.normal(kx, (2, 1, 28, 28), jnp.float32)

    params = init_params(key)
    packed = pack_params(params)  # one-time weight transpose/pad/cast (not per call)

    out = mymlp_forward(x, packed)
    out = jax.block_until_ready(out)

    ref = reference_forward(x, params)
    assert out.shape == (2, NUM_CLASSES)
    # bf16 MXU operands with f32 accumulation: loosen tolerance vs the pure-f32 reference.
    assert jnp.allclose(out, ref, atol=5e-2, rtol=5e-2), \
        float(jnp.max(jnp.abs(out - ref)))

    print("KERNEL_OK")
</pallas_src>

<mosaic_0001>
module attributes {stable_mosaic.version = 11 : i64} {
  func.func @mlp_kernel(%arg0: i32, %arg1: memref<8x784xf32, #tpu.memory_space<vmem>>, %arg2: memref<784x512xbf16, #tpu.memory_space<vmem>>, %arg3: memref<1x512xf32, #tpu.memory_space<vmem>>, %arg4: memref<512x512xbf16, #tpu.memory_space<vmem>>, %arg5: memref<1x512xf32, #tpu.memory_space<vmem>>, %arg6: memref<512x512xbf16, #tpu.memory_space<vmem>>, %arg7: memref<1x512xf32, #tpu.memory_space<vmem>>, %arg8: memref<512x128xbf16, #tpu.memory_space<vmem>>, %arg9: memref<1x128xf32, #tpu.memory_space<vmem>>, %arg10: memref<8x128xf32, #tpu.memory_space<vmem>>) attributes {dimension_semantics = [#tpu.dimension_semantics<parallel>], iteration_bounds = array<i64: 1>, scalar_prefetch = 0 : i64, scratch_operands = 0 : i64, tpu.core_type = #tpu.core_type<tc>, window_params = [{transform_indices = @transform_0, window_bounds = array<i64: 8, 784>}, {pipeline_mode = #tpu.pipeline_mode<synchronous>, transform_indices = @transform_1, window_bounds = array<i64: 784, 512>}, {pipeline_mode = #tpu.pipeline_mode<synchronous>, transform_indices = @transform_2, window_bounds = array<i64: 1, 512>}, {pipeline_mode = #tpu.pipeline_mode<synchronous>, transform_indices = @transform_3, window_bounds = array<i64: 512, 512>}, {pipeline_mode = #tpu.pipeline_mode<synchronous>, transform_indices = @transform_4, window_bounds = array<i64: 1, 512>}, {pipeline_mode = #tpu.pipeline_mode<synchronous>, transform_indices = @transform_5, window_bounds = array<i64: 512, 512>}, {pipeline_mode = #tpu.pipeline_mode<synchronous>, transform_indices = @transform_6, window_bounds = array<i64: 1, 512>}, {pipeline_mode = #tpu.pipeline_mode<synchronous>, transform_indices = @transform_7, window_bounds = array<i64: 512, 128>}, {pipeline_mode = #tpu.pipeline_mode<synchronous>, transform_indices = @transform_8, window_bounds = array<i64: 1, 128>}, {transform_indices = @transform_9, window_bounds = array<i64: 8, 128>}]} {
    %c0 = arith.constant 0 : index
    %c0_0 = arith.constant 0 : index
    %0 = vector.load %arg1[%c0, %c0_0] : memref<8x784xf32, #tpu.memory_space<vmem>>, vector<8x784xf32>
    %1 = arith.truncf %0 : vector<8x784xf32> to vector<8x784xbf16>
    %c0_1 = arith.constant 0 : index
    %c0_2 = arith.constant 0 : index
    %2 = vector.load %arg2[%c0_1, %c0_2] : memref<784x512xbf16, #tpu.memory_space<vmem>>, vector<784x512xbf16>
    %cst = arith.constant dense<0.000000e+00> : vector<8x512xf32>
    %3 = tpu.matmul %1, %2, %cst {dimension_numbers = #tpu.dot_dimension_numbers<[1], [0], [0], [1], [0, 0, 1, 1], [], []>} : vector<8x784xbf16>, vector<784x512xbf16>, vector<8x512xf32> -> vector<8x512xf32>
    %c0_3 = arith.constant 0 : index
    %c0_4 = arith.constant 0 : index
    %4 = vector.load %arg3[%c0_3, %c0_4] : memref<1x512xf32, #tpu.memory_space<vmem>>, vector<1x512xf32>
    %5 = vector.broadcast %4 : vector<1x512xf32> to vector<8x512xf32>
    %6 = arith.addf %3, %5 : vector<8x512xf32>
    %7 = arith.truncf %6 : vector<8x512xf32> to vector<8x512xbf16>
    %c0_5 = arith.constant 0 : index
    %c0_6 = arith.constant 0 : index
    %8 = vector.load %arg4[%c0_5, %c0_6] : memref<512x512xbf16, #tpu.memory_space<vmem>>, vector<512x512xbf16>
    %cst_7 = arith.constant dense<0.000000e+00> : vector<8x512xf32>
    %9 = tpu.matmul %7, %8, %cst_7 {dimension_numbers = #tpu.dot_dimension_numbers<[1], [0], [0], [1], [0, 0, 1, 1], [], []>} : vector<8x512xbf16>, vector<512x512xbf16>, vector<8x512xf32> -> vector<8x512xf32>
    %c0_8 = arith.constant 0 : index
    %c0_9 = arith.constant 0 : index
    %10 = vector.load %arg5[%c0_8, %c0_9] : memref<1x512xf32, #tpu.memory_space<vmem>>, vector<1x512xf32>
    %11 = vector.broadcast %10 : vector<1x512xf32> to vector<8x512xf32>
    %12 = arith.addf %9, %11 : vector<8x512xf32>
    %13 = arith.truncf %12 : vector<8x512xf32> to vector<8x512xbf16>
    %c0_10 = arith.constant 0 : index
    %c0_11 = arith.constant 0 : index
    %14 = vector.load %arg6[%c0_10, %c0_11] : memref<512x512xbf16, #tpu.memory_space<vmem>>, vector<512x512xbf16>
    %cst_12 = arith.constant dense<0.000000e+00> : vector<8x512xf32>
    %15 = tpu.matmul %13, %14, %cst_12 {dimension_numbers = #tpu.dot_dimension_numbers<[1], [0], [0], [1], [0, 0, 1, 1], [], []>} : vector<8x512xbf16>, vector<512x512xbf16>, vector<8x512xf32> -> vector<8x512xf32>
    %c0_13 = arith.constant 0 : index
    %c0_14 = arith.constant 0 : index
    %16 = vector.load %arg7[%c0_13, %c0_14] : memref<1x512xf32, #tpu.memory_space<vmem>>, vector<1x512xf32>
    %17 = vector.broadcast %16 : vector<1x512xf32> to vector<8x512xf32>
    %18 = arith.addf %15, %17 : vector<8x512xf32>
    %19 = arith.truncf %18 : vector<8x512xf32> to vector<8x512xbf16>
    %c0_15 = arith.constant 0 : index
    %c0_16 = arith.constant 0 : index
    %20 = vector.load %arg8[%c0_15, %c0_16] : memref<512x128xbf16, #tpu.memory_space<vmem>>, vector<512x128xbf16>
    %cst_17 = arith.constant dense<0.000000e+00> : vector<8x128xf32>
    %21 = tpu.matmul %19, %20, %cst_17 {dimension_numbers = #tpu.dot_dimension_numbers<[1], [0], [0], [1], [0, 0, 1, 1], [], []>} : vector<8x512xbf16>, vector<512x128xbf16>, vector<8x128xf32> -> vector<8x128xf32>
    %c0_18 = arith.constant 0 : index
    %c0_19 = arith.constant 0 : index
    %22 = vector.load %arg9[%c0_18, %c0_19] : memref<1x128xf32, #tpu.memory_space<vmem>>, vector<1x128xf32>
    %23 = vector.broadcast %22 : vector<1x128xf32> to vector<8x128xf32>
    %24 = arith.addf %21, %23 : vector<8x128xf32>
    %c0_20 = arith.constant 0 : index
    %c0_21 = arith.constant 0 : index
    %25 = vector.load %arg10[%c0_20, %c0_21] : memref<8x128xf32, #tpu.memory_space<vmem>>, vector<8x128xf32>
    tpu.vector_store %arg10[%c0_20, %c0_21], %24 {strides = array<i32>} : memref<8x128xf32, #tpu.memory_space<vmem>>, vector<8x128xf32>,
    return
  }
  func.func @transform_0(%arg0: i32) -> (i32, i32) {
    %c0_i32 = arith.constant 0 : i32
    %c0_i32_0 = arith.constant 0 : i32
    return %arg0, %c0_i32 : i32, i32
  }
  func.func @transform_1(%arg0: i32) -> (i32, i32) {
    %c0_i32 = arith.constant 0 : i32
    %c0_i32_0 = arith.constant 0 : i32
    %c0_i32_1 = arith.constant 0 : i32
    return %c0_i32, %c0_i32_0 : i32, i32
  }
  func.func @transform_2(%arg0: i32) -> (i32, i32) {
    %c0_i32 = arith.constant 0 : i32
    %c0_i32_0 = arith.constant 0 : i32
    %c0_i32_1 = arith.constant 0 : i32
    return %c0_i32, %c0_i32_0 : i32, i32
  }
  func.func @transform_3(%arg0: i32) -> (i32, i32) {
    %c0_i32 = arith.constant 0 : i32
    %c0_i32_0 = arith.constant 0 : i32
    %c0_i32_1 = arith.constant 0 : i32
    return %c0_i32, %c0_i32_0 : i32, i32
  }
  func.func @transform_4(%arg0: i32) -> (i32, i32) {
    %c0_i32 = arith.constant 0 : i32
    %c0_i32_0 = arith.constant 0 : i32
    %c0_i32_1 = arith.constant 0 : i32
    return %c0_i32, %c0_i32_0 : i32, i32
  }
  func.func @transform_5(%arg0: i32) -> (i32, i32) {
    %c0_i32 = arith.constant 0 : i32
    %c0_i32_0 = arith.constant 0 : i32
    %c0_i32_1 = arith.constant 0 : i32
    return %c0_i32, %c0_i32_0 : i32, i32
  }
  func.func @transform_6(%arg0: i32) -> (i32, i32) {
    %c0_i32 = arith.constant 0 : i32
    %c0_i32_0 = arith.constant 0 : i32
    %c0_i32_1 = arith.constant 0 : i32
    return %c0_i32, %c0_i32_0 : i32, i32
  }
  func.func @transform_7(%arg0: i32) -> (i32, i32) {
    %c0_i32 = arith.constant 0 : i32
    %c0_i32_0 = arith.constant 0 : i32
    %c0_i32_1 = arith.constant 0 : i32
    return %c0_i32, %c0_i32_0 : i32, i32
  }
  func.func @transform_8(%arg0: i32) -> (i32, i32) {
    %c0_i32 = arith.constant 0 : i32
    %c0_i32_0 = arith.constant 0 : i32
    %c0_i32_1 = arith.constant 0 : i32
    return %c0_i32, %c0_i32_0 : i32, i32
  }
  func.func @transform_9(%arg0: i32) -> (i32, i32) {
    %c0_i32 = arith.constant 0 : i32
    %c0_i32_0 = arith.constant 0 : i32
    return %arg0, %c0_i32 : i32, i32
  }
}

</mosaic_0001>

<llo_original>
// kernel: tpu_custom_call.1
$region0: #{tpu_custom_call.1}
  #allocation0 [shape = 'u32[]', space=smem, size = 0x4, offset = 0x4, fixed_abs, tag = 'smem constant byte address 0x4 - core index']
  #allocation1 [shape = 'u32[144,128]{1,0:T(1,128)}', space=vmem, size = 0x12000, scoped, tag = 'internal scratch']
  %s0 = inlined_call_operand.hbm [shape: f32[8,784], index: 0, kind: input, shape index: {}]
  %s1 = inlined_call_operand.hbm [shape: bf16[784,512], index: 1, kind: input, shape index: {}]
  %s2 = inlined_call_operand.vmem [shape: f32[1,512], index: 2, kind: input, shape index: {}]
  %s3 = inlined_call_operand.hbm [shape: bf16[512,512], index: 3, kind: input, shape index: {}]
  %s4 = inlined_call_operand.vmem [shape: f32[1,512], index: 4, kind: input, shape index: {}]
  %s5 = inlined_call_operand.hbm [shape: bf16[512,512], index: 5, kind: input, shape index: {}]
  %s6 = inlined_call_operand.vmem [shape: f32[1,512], index: 6, kind: input, shape index: {}]
  %s7 = inlined_call_operand.hbm [shape: bf16[512,128], index: 7, kind: input, shape index: {}]
  %s8 = inlined_call_operand.vmem [shape: f32[1,128], index: 8, kind: input, shape index: {}]
  %s9 = inlined_call_operand.hbm [shape: f32[8,128], index: 9, kind: output, shape index: {}]
  %s10 = sld [smem:[#allocation0]]
  $region66: #{tpu_custom_call.1} parent=0
    _
  %s12 = ssub.s32 1, %s10
  %s13 = scalar_select 0, %s12, %s10
  $region1: #{tpu_custom_call.1} parent=0
    #allocation2 [shape = 'u8[28672]{0}', space=vmem, size = 0x7000, scoped, tag = 'input window, operand 0, single buffered']
    #allocation3 [shape = 's32[1]{0}', space=sflag, size = 0x4, scoped, tag = 'scoped memory for tpu_custom_call.1']
    #allocation4 [shape = 's32[1]{0}', space=sflag, size = 0x4, scoped, tag = 'scoped memory for tpu_custom_call.1']
    #allocation5 [shape = 'u8[802816]{0}', space=vmem, size = 0xc4000, scoped, tag = 'input window, operand 1, single buffered']
    #allocation6 [shape = 's32[1]{0}', space=sflag, size = 0x4, scoped, tag = 'scoped memory for tpu_custom_call.1']
    #allocation7 [shape = 'u8[524288]{0}', space=vmem, size = 0x80000, scoped, tag = 'input window, operand 3, single buffered']
    #allocation8 [shape = 'u8[524288]{0}', space=vmem, size = 0x80000, scoped, tag = 'input window, operand 5, single buffered']
    #allocation9 [shape = 's32[1]{0}', space=sflag, size = 0x4, scoped, tag = 'scoped memory for tpu_custom_call.1']
    #allocation10 [shape = 'u8[131072]{0}', space=vmem, size = 0x20000, scoped, tag = 'input window, operand 7, single buffered']
    #allocation11 [shape = 'u8[4096]{0}', space=vmem, size = 0x1000, scoped, tag = 'output window, operand 0, single buffered']
    %14 = vsyncpa [#allocation3], 0
    %15 = vsyncpa [#allocation6], 0
    %16 = vsyncpa [#allocation9], 0
    %17 = vsyncpa [#allocation4], 0
    // Predicated region
    $region2: #{tpu_custom_call.1} parent=1 // pred_check
      _
    $region3: #{tpu_custom_call.1} parent=1 // pred_check_branch
      %19 = sbr.rel (0) target = $region5
    $region4: #{tpu_custom_call.1} parent=1 // pred_region
      %s21 = ssub.s32 896, 896
      %22 = vsyncadd [#allocation3], %s21
      %s24 = sshll.u32 [#allocation2], 4
      %s25 = int_to_ptr.vmem [resolvable:$true] %s24
      %27 = dma.hbm_to_vmem [thread:$0]  %s0, 896, %s25, [#allocation3]
    $region5: #{tpu_custom_call.1} parent=1 // pred_fallthru
      _
    // Predicated region
    $region6: #{tpu_custom_call.1} parent=1 // pred_check
      _
    $region7: #{tpu_custom_call.1} parent=1 // pred_check_branch
      %29 = sbr.rel (0) target = $region9
    $region8: #{tpu_custom_call.1} parent=1 // pred_region
      %s31 = ssub.s32 25088, 25088
      %32 = vsyncadd [#allocation6], %s31
      %s33 = sshll.u32 [#allocation5], 4
      %s34 = int_to_ptr.vmem [resolvable:$true] %s33
      %39 = dma.hbm_to_vmem [thread:$0]  %s1, 25088, %s34, [#allocation6], 256, 256, 16
    $region9: #{tpu_custom_call.1} parent=1 // pred_fallthru
      _
    // Predicated region
    $region10: #{tpu_custom_call.1} parent=1 // pred_check
      _
    $region11: #{tpu_custom_call.1} parent=1 // pred_check_branch
      %41 = sbr.rel (0) target = $region13
    $region12: #{tpu_custom_call.1} parent=1 // pred_region
      _
    $region13: #{tpu_custom_call.1} parent=1 // pred_fallthru
      _
    // Predicated region
    $region14: #{tpu_custom_call.1} parent=1 // pred_check
      _
    $region15: #{tpu_custom_call.1} parent=1 // pred_check_branch
      %43 = sbr.rel (0) target = $region17
    $region16: #{tpu_custom_call.1} parent=1 // pred_region
      %s45 = ssub.s32 16384, 16384
      %46 = vsyncadd [#allocation6], %s45
      %s47 = sshll.u32 [#allocation7], 4
      %s48 = int_to_ptr.vmem [resolvable:$true] %s47
      %53 = dma.hbm_to_vmem [thread:$0]  %s3, 16384, %s48, [#allocation6], 256, 256, 16
    $region17: #{tpu_custom_call.1} parent=1 // pred_fallthru
      _
    // Predicated region
    $region18: #{tpu_custom_call.1} parent=1 // pred_check
      _
    $region19: #{tpu_custom_call.1} parent=1 // pred_check_branch
      %55 = sbr.rel (0) target = $region21
    $region20: #{tpu_custom_call.1} parent=1 // pred_region
      _
    $region21: #{tpu_custom_call.1} parent=1 // pred_fallthru
      _
    // Predicated region
    $region22: #{tpu_custom_call.1} parent=1 // pred_check
      _
    $region23: #{tpu_custom_call.1} parent=1 // pred_check_branch
      %57 = sbr.rel (0) target = $region25
    $region24: #{tpu_custom_call.1} parent=1 // pred_region
      %s59 = ssub.s32 16384, 16384
      %60 = vsyncadd [#allocation9], %s59
      %s61 = sshll.u32 [#allocation8], 4
      %s62 = int_to_ptr.vmem [resolvable:$true] %s61
      %67 = dma.hbm_to_vmem [thread:$0]  %s5, 16384, %s62, [#allocation9], 256, 256, 16
    $region25: #{tpu_custom_call.1} parent=1 // pred_fallthru
      _
    // Predicated region
    $region26: #{tpu_custom_call.1} parent=1 // pred_check
      _
    $region27: #{tpu_custom_call.1} parent=1 // pred_check_branch
      %69 = sbr.rel (0) target = $region29
    $region28: #{tpu_custom_call.1} parent=1 // pred_region
      _
    $region29: #{tpu_custom_call.1} parent=1 // pred_fallthru
      _
    // Predicated region
    $region30: #{tpu_custom_call.1} parent=1 // pred_check
      _
    $region31: #{tpu_custom_call.1} parent=1 // pred_check_branch
      %71 = sbr.rel (0) target = $region33
    $region32: #{tpu_custom_call.1} parent=1 // pred_region
      %s73 = ssub.s32 4096, 4096
      %74 = vsyncadd [#allocation9], %s73
      %s75 = sshll.u32 [#allocation10], 4
      %s76 = int_to_ptr.vmem [resolvable:$true] %s75
      %81 = dma.hbm_to_vmem [thread:$0]  %s7, 4096, %s76, [#allocation9], 64, 64, 4
    $region33: #{tpu_custom_call.1} parent=1 // pred_fallthru
      _
    // Predicated region
    $region34: #{tpu_custom_call.1} parent=1 // pred_check
      _
    $region35: #{tpu_custom_call.1} parent=1 // pred_check_branch
      %83 = sbr.rel (0) target = $region37
    $region36: #{tpu_custom_call.1} parent=1 // pred_region
      _
    $region37: #{tpu_custom_call.1} parent=1 // pred_fallthru
      _
    // Predicated region
    $region38: #{tpu_custom_call.1} parent=1 // pred_check
      _
    $region39: #{tpu_custom_call.1} parent=1 // pred_check_branch
      %85 = sbr.rel (0) target = $region41
    $region40: #{tpu_custom_call.1} parent=1 // pred_region
      %86 = dma.done [#allocation3], 896
    $region41: #{tpu_custom_call.1} parent=1 // pred_fallthru
      _
    // Predicated region
    $region42: #{tpu_custom_call.1} parent=1 // pred_check
      _
    $region43: #{tpu_custom_call.1} parent=1 // pred_check_branch
      %88 = sbr.rel (0) target = $region45
    $region44: #{tpu_custom_call.1} parent=1 // pred_region
      %89 = dma.done [#allocation6], 25088
    $region45: #{tpu_custom_call.1} parent=1 // pred_fallthru
      _
    // Predicated region
    $region46: #{tpu_custom_call.1} parent=1 // pred_check
      _
    $region47: #{tpu_custom_call.1} parent=1 // pred_check_branch
      %91 = sbr.rel (0) target = $region49
    $region48: #{tpu_custom_call.1} parent=1 // pred_region
      %92 = dma.done [#allocation6], 16384
    $region49: #{tpu_custom_call.1} parent=1 // pred_fallthru
      _
    // Predicated region
    $region50: #{tpu_custom_call.1} parent=1 // pred_check
      _
    $region51: #{tpu_custom_call.1} parent=1 // pred_check_branch
      %94 = sbr.rel (0) target = $region53
    $region52: #{tpu_custom_call.1} parent=1 // pred_region
      %95 = dma.done [#allocation9], 16384
    $region53: #{tpu_custom_call.1} parent=1 // pred_fallthru
      _
    // Predicated region
    $region54: #{tpu_custom_call.1} parent=1 // pred_check
      _
    $region55: #{tpu_custom_call.1} parent=1 // pred_check_branch
      %97 = sbr.rel (0) target = $region57
    $region56: #{tpu_custom_call.1} parent=1 // pred_region
      %98 = dma.done [#allocation9], 4096
    $region57: #{tpu_custom_call.1} parent=1 // pred_fallthru
      _
    %v100 = vld [vmem:[#allocation2] sm:$0xff]
    %v101 = vld [vmem:[#allocation2 + $0x8] sm:$0xff]
    %v102 = vld [vmem:[#allocation2 + $0x10] sm:$0xff]
    %v103 = vld [vmem:[#allocation2 + $0x18] sm:$0xff]
    %v104 = vld [vmem:[#allocation2 + $0x20] sm:$0xff]
    %v105 = vld [vmem:[#allocation2 + $0x28] sm:$0xff]
    %v106 = vld [vmem:[#allocation2 + $0x30] sm:$0xff]
    %v107 = vpack.c.bf16 %v100, %v100
    %v108 = vpack.c.bf16 %v101, %v101
    %v109 = vpack.c.bf16 %v102, %v102
    %v110 = vpack.c.bf16 %v103, %v103
    %v111 = vpack.c.bf16 %v104, %v104
    %v112 = vpack.c.bf16 %v105, %v105
    %v113 = vpack.c.bf16 %v106, %v106
    %v114 = vld [vmem:[#allocation5] sm:$0xff]
    %v115 = vld [vmem:[#allocation5 + $0x8] sm:$0xff]
    %v116 = vld [vmem:[#allocation5 + $0x10] sm:$0xff]
    %v117 = vld [vmem:[#allocation5 + $0x18] sm:$0xff]
    %v118 = vld [vmem:[#allocation5 + $0x20] sm:$0xff]
    %v119 = vld [vmem:[#allocation5 + $0x28] sm:$0xff]
    %v120 = vld [vmem:[#allocation5 + $0x30] sm:$0xff]
    %v121 = vld [vmem:[#allocation5 + $0x38] sm:$0xff]
    %v122 = vld [vmem:[#allocation5 + $0x40] sm:$0xff]
    %v123 = vld [vmem:[#allocation5 + $0x48] sm:$0xff]
    %v124 = vld [vmem:[#allocation5 + $0x50] sm:$0xff]
    %v125 = vld [vmem:[#allocation5 + $0x58] sm:$0xff]
    %v126 = vld [vmem:[#allocation5 + $0x60] sm:$0xff]
    %v127 = vld [vmem:[#allocation5 + $0x68] sm:$0xff]
    %v128 = vld [vmem:[#allocation5 + $0x70] sm:$0xff]
    %v129 = vld [vmem:[#allocation5 + $0x78] sm:$0xff]
    %v130 = vld [vmem:[#allocation5 + $0x80] sm:$0xff]
    %v131 = vld [vmem:[#allocation5 + $0x88] sm:$0xff]
    %v132 = vld [vmem:[#allocation5 + $0x90] sm:$0xff]
    %v133 = vld [vmem:[#allocation5 + $0x98] sm:$0xff]
    %v134 = vld [vmem:[#allocation5 + $0xa0] sm:$0xff]
    %v135 = vld [vmem:[#allocation5 + $0xa8] sm:$0xff]
    %v136 = vld [vmem:[#allocation5 + $0xb0] sm:$0xff]
    %v137 = vld [vmem:[#allocation5 + $0xb8] sm:$0xff]
    %v138 = vld [vmem:[#allocation5 + $0xc0] sm:$0xff]
    %v139 = vld [vmem:[#allocation5 + $0xc8] sm:$0xff]
    %v140 = vld [vmem:[#allocation5 + $0xd0] sm:$0xff]
    %v141 = vld [vmem:[#allocation5 + $0xd8] sm:$0xff]
    %v142 = vld [vmem:[#allocation5 + $0xe0] sm:$0xff]
    %v143 = vld [vmem:[#allocation5 + $0xe8] sm:$0xff]
    %v144 = vld [vmem:[#allocation5 + $0xf0] sm:$0xff]
    %v145 = vld [vmem:[#allocation5 + $0xf8] sm:$0xff]
    %v146 = vld [vmem:[#allocation5 + $0x100] sm:$0xff]
    %v147 = vld [vmem:[#allocation5 + $0x108] sm:$0xff]
    %v148 = vld [vmem:[#allocation5 + $0x110] sm:$0xff]
    %v149 = vld [vmem:[#allocation5 + $0x118] sm:$0xff]
    %v150 = vld [vmem:[#allocation5 + $0x120] sm:$0xff]
    %v151 = vld [vmem:[#allocation5 + $0x128] sm:$0xff]
    %v152 = vld [vmem:[#allocation5 + $0x130] sm:$0xff]
    %v153 = vld [vmem:[#allocation5 + $0x138] sm:$0xff]
    %v154 = vld [vmem:[#allocation5 + $0x140] sm:$0xff]
    %v155 = vld [vmem:[#allocation5 + $0x148] sm:$0xff]
    %v156 = vld [vmem:[#allocation5 + $0x150] sm:$0xff]
    %v157 = vld [vmem:[#allocation5 + $0x158] sm:$0xff]
    %v158 = vld [vmem:[#allocation5 + $0x160] sm:$0xff]
    %v159 = vld [vmem:[#allocation5 + $0x168] sm:$0xff]
    %v160 = vld [vmem:[#allocation5 + $0x170] sm:$0xff]
    %v161 = vld [vmem:[#allocation5 + $0x178] sm:$0xff]
    %v162 = vld [vmem:[#allocation5 + $0x180] sm:$0xff]
    %v163 = vld [vmem:[#allocation5 + $0x188] sm:$0xff]
    %v164 = vld [vmem:[#allocation5 + $0x190] sm:$0xff]
    %v165 = vld [vmem:[#allocation5 + $0x198] sm:$0xff]
    %v166 = vld [vmem:[#allocation5 + $0x1a0] sm:$0xff]
    %v167 = vld [vmem:[#allocation5 + $0x1a8] sm:$0xff]
    %v168 = vld [vmem:[#allocation5 + $0x1b0] sm:$0xff]
    %v169 = vld [vmem:[#allocation5 + $0x1b8] sm:$0xff]
    %v170 = vld [vmem:[#allocation5 + $0x1c0] sm:$0xff]
    %v171 = vld [vmem:[#allocation5 + $0x1c8] sm:$0xff]
    %v172 = vld [vmem:[#allocation5 + $0x1d0] sm:$0xff]
    %v173 = vld [vmem:[#allocation5 + $0x1d8] sm:$0xff]
    %v174 = vld [vmem:[#allocation5 + $0x1e0] sm:$0xff]
    %v175 = vld [vmem:[#allocation5 + $0x1e8] sm:$0xff]
    %v176 = vld [vmem:[#allocation5 + $0x1f0] sm:$0xff]
    %v177 = vld [vmem:[#allocation5 + $0x1f8] sm:$0xff]
    %v178 = vld [vmem:[#allocation5 + $0x200] sm:$0xff]
    %v179 = vld [vmem:[#allocation5 + $0x208] sm:$0xff]
    %v180 = vld [vmem:[#allocation5 + $0x210] sm:$0xff]
    %v181 = vld [vmem:[#allocation5 + $0x218] sm:$0xff]
    %v182 = vld [vmem:[#allocation5 + $0x220] sm:$0xff]
    %v183 = vld [vmem:[#allocation5 + $0x228] sm:$0xff]
    %v184 = vld [vmem:[#allocation5 + $0x230] sm:$0xff]
    %v185 = vld [vmem:[#allocation5 + $0x238] sm:$0xff]
    %v186 = vld [vmem:[#allocation5 + $0x240] sm:$0xff]
    %v187 = vld [vmem:[#allocation5 + $0x248] sm:$0xff]
    %v188 = vld [vmem:[#allocation5 + $0x250] sm:$0xff]
    %v189 = vld [vmem:[#allocation5 + $0x258] sm:$0xff]
    %v190 = vld [vmem:[#allocation5 + $0x260] sm:$0xff]
    %v191 = vld [vmem:[#allocation5 + $0x268] sm:$0xff]
    %v192 = vld [vmem:[#allocation5 + $0x270] sm:$0xff]
    %v193 = vld [vmem:[#allocation5 + $0x278] sm:$0xff]
    %v194 = vld [vmem:[#allocation5 + $0x280] sm:$0xff]
    %v195 = vld [vmem:[#allocation5 + $0x288] sm:$0xff]
    %v196 = vld [vmem:[#allocation5 + $0x290] sm:$0xff]
    %v197 = vld [vmem:[#allocation5 + $0x298] sm:$0xff]
    %v198 = vld [vmem:[#allocation5 + $0x2a0] sm:$0xff]
    %v199 = vld [vmem:[#allocation5 + $0x2a8] sm:$0xff]
    %v200 = vld [vmem:[#allocation5 + $0x2b0] sm:$0xff]
    %v201 = vld [vmem:[#allocation5 + $0x2b8] sm:$0xff]
    %v202 = vld [vmem:[#allocation5 + $0x2c0] sm:$0xff]
    %v203 = vld [vmem:[#allocation5 + $0x2c8] sm:$0xff]
    %v204 = vld [vmem:[#allocation5 + $0x2d0] sm:$0xff]
    %v205 = vld [vmem:[#allocation5 + $0x2d8] sm:$0xff]
    %v206 = vld [vmem:[#allocation5 + $0x2e0] sm:$0xff]
    %v207 = vld [vmem:[#allocation5 + $0x2e8] sm:$0xff]
    %v208 = vld [vmem:[#allocation5 + $0x2f0] sm:$0xff]
    %v209 = vld [vmem:[#allocation5 + $0x2f8] sm:$0xff]
    %v210 = vld [vmem:[#allocation5 + $0x300] sm:$0xff]
    %v211 = vld [vmem:[#allocation5 + $0x308] sm:$0xff]
    %v212 = vld [vmem:[#allocation5 + $0x310] sm:$0xff]
    %v213 = vld [vmem:[#allocation5 + $0x318] sm:$0xff]
    %v214 = vld [vmem:[#allocation5 + $0x320] sm:$0xff]
    %v215 = vld [vmem:[#allocation5 + $0x328] sm:$0xff]
    %v216 = vld [vmem:[#allocation5 + $0x330] sm:$0xff]
    %v217 = vld [vmem:[#allocation5 + $0x338] sm:$0xff]
    %v218 = vld [vmem:[#allocation5 + $0x340] sm:$0xff]
    %v219 = vld [vmem:[#allocation5 + $0x348] sm:$0xff]
    %v220 = vld [vmem:[#allocation5 + $0x350] sm:$0xff]
    %v221 = vld [vmem:[#allocation5 + $0x358] sm:$0xff]
    %v222 = vld [vmem:[#allocation5 + $0x360] sm:$0xff]
    %v223 = vld [vmem:[#allocation5 + $0x368] sm:$0xff]
    %v224 = vld [vmem:[#allocation5 + $0x370] sm:$0xff]
    %v225 = vld [vmem:[#allocation5 + $0x378] sm:$0xff]
    %v226 = vld [vmem:[#allocation5 + $0x380] sm:$0xff]
    %v227 = vld [vmem:[#allocation5 + $0x388] sm:$0xff]
    %v228 = vld [vmem:[#allocation5 + $0x390] sm:$0xff]
    %v229 = vld [vmem:[#allocation5 + $0x398] sm:$0xff]
    %v230 = vld [vmem:[#allocation5 + $0x3a0] sm:$0xff]
    %v231 = vld [vmem:[#allocation5 + $0x3a8] sm:$0xff]
    %v232 = vld [vmem:[#allocation5 + $0x3b0] sm:$0xff]
    %v233 = vld [vmem:[#allocation5 + $0x3b8] sm:$0xff]
    %v234 = vld [vmem:[#allocation5 + $0x3c0] sm:$0xff]
    %v235 = vld [vmem:[#allocation5 + $0x3c8] sm:$0xff]
    %v236 = vld [vmem:[#allocation5 + $0x3d0] sm:$0xff]
    %v237 = vld [vmem:[#allocation5 + $0x3d8] sm:$0xff]
    %v238 = vld [vmem:[#allocation5 + $0x3e0] sm:$0xff]
    %v239 = vld [vmem:[#allocation5 + $0x3e8] sm:$0xff]
    %v240 = vld [vmem:[#allocation5 + $0x3f0] sm:$0xff]
    %v241 = vld [vmem:[#allocation5 + $0x3f8] sm:$0xff]
    %v242 = vld [vmem:[#allocation5 + $0x400] sm:$0xff]
    %v243 = vld [vmem:[#allocation5 + $0x408] sm:$0xff]
    %v244 = vld [vmem:[#allocation5 + $0x410] sm:$0xff]
    %v245 = vld [vmem:[#allocation5 + $0x418] sm:$0xff]
    %v246 = vld [vmem:[#allocation5 + $0x420] sm:$0xff]
    %v247 = vld [vmem:[#allocation5 + $0x428] sm:$0xff]
    %v248 = vld [vmem:[#allocation5 + $0x430] sm:$0xff]
    %v249 = vld [vmem:[#allocation5 + $0x438] sm:$0xff]
    %v250 = vld [vmem:[#allocation5 + $0x440] sm:$0xff]
    %v251 = vld [vmem:[#allocation5 + $0x448] sm:$0xff]
    %v252 = vld [vmem:[#allocation5 + $0x450] sm:$0xff]
    %v253 = vld [vmem:[#allocation5 + $0x458] sm:$0xff]
    %v254 = vld [vmem:[#allocation5 + $0x460] sm:$0xff]
    %v255 = vld [vmem:[#allocation5 + $0x468] sm:$0xff]
    %v256 = vld [vmem:[#allocation5 + $0x470] sm:$0xff]
    %v257 = vld [vmem:[#allocation5 + $0x478] sm:$0xff]
    %v258 = vld [vmem:[#allocation5 + $0x480] sm:$0xff]
    %v259 = vld [vmem:[#allocation5 + $0x488] sm:$0xff]
    %v260 = vld [vmem:[#allocation5 + $0x490] sm:$0xff]
    %v261 = vld [vmem:[#allocation5 + $0x498] sm:$0xff]
    %v262 = vld [vmem:[#allocation5 + $0x4a0] sm:$0xff]
    %v263 = vld [vmem:[#allocation5 + $0x4a8] sm:$0xff]
    %v264 = vld [vmem:[#allocation5 + $0x4b0] sm:$0xff]
    %v265 = vld [vmem:[#allocation5 + $0x4b8] sm:$0xff]
    %v266 = vld [vmem:[#allocation5 + $0x4c0] sm:$0xff]
    %v267 = vld [vmem:[#allocation5 + $0x4c8] sm:$0xff]
    %v268 = vld [vmem:[#allocation5 + $0x4d0] sm:$0xff]
    %v269 = vld [vmem:[#allocation5 + $0x4d8] sm:$0xff]
    %v270 = vld [vmem:[#allocation5 + $0x4e0] sm:$0xff]
    %v271 = vld [vmem:[#allocation5 + $0x4e8] sm:$0xff]
    %v272 = vld [vmem:[#allocation5 + $0x4f0] sm:$0xff]
    %v273 = vld [vmem:[#allocation5 + $0x4f8] sm:$0xff]
    %v274 = vld [vmem:[#allocation5 + $0x500] sm:$0xff]
    %v275 = vld [vmem:[#allocation5 + $0x508] sm:$0xff]
    %v276 = vld [vmem:[#allocation5 + $0x510] sm:$0xff]
    %v277 = vld [vmem:[#allocation5 + $0x518] sm:$0xff]
    %v278 = vld [vmem:[#allocation5 + $0x520] sm:$0xff]
    %v279 = vld [vmem:[#allocation5 + $0x528] sm:$0xff]
    %v280 = vld [vmem:[#allocation5 + $0x530] sm:$0xff]
    %v281 = vld [vmem:[#allocation5 + $0x538] sm:$0xff]
    %v282 = vld [vmem:[#allocation5 + $0x540] sm:$0xff]
    %v283 = vld [vmem:[#allocation5 + $0x548] sm:$0xff]
    %v284 = vld [vmem:[#allocation5 + $0x550] sm:$0xff]
    %v285 = vld [vmem:[#allocation5 + $0x558] sm:$0xff]
    %v286 = vld [vmem:[#allocation5 + $0x560] sm:$0xff]
    %v287 = vld [vmem:[#allocation5 + $0x568] sm:$0xff]
    %v288 = vld [vmem:[#allocation5 + $0x570] sm:$0xff]
    %v289 = vld [vmem:[#allocation5 + $0x578] sm:$0xff]
    %v290 = vld [vmem:[#allocation5 + $0x580] sm:$0xff]
    %v291 = vld [vmem:[#allocation5 + $0x588] sm:$0xff]
    %v292 = vld [vmem:[#allocation5 + $0x590] sm:$0xff]
    %v293 = vld [vmem:[#allocation5 + $0x598] sm:$0xff]
    %v294 = vld [vmem:[#allocation5 + $0x5a0] sm:$0xff]
    %v295 = vld [vmem:[#allocation5 + $0x5a8] sm:$0xff]
    %v296 = vld [vmem:[#allocation5 + $0x5b0] sm:$0xff]
    %v297 = vld [vmem:[#allocation5 + $0x5b8] sm:$0xff]
    %v298 = vld [vmem:[#allocation5 + $0x5c0] sm:$0xff]
    %v299 = vld [vmem:[#allocation5 + $0x5c8] sm:$0xff]
    %v300 = vld [vmem:[#allocation5 + $0x5d0] sm:$0xff]
    %v301 = vld [vmem:[#allocation5 + $0x5d8] sm:$0xff]
    %v302 = vld [vmem:[#allocation5 + $0x5e0] sm:$0xff]
    %v303 = vld [vmem:[#allocation5 + $0x5e8] sm:$0xff]
    %v304 = vld [vmem:[#allocation5 + $0x5f0] sm:$0xff]
    %v305 = vld [vmem:[#allocation5 + $0x5f8] sm:$0xff]
    %v306 = vld [vmem:[#allocation5 + $0x600] sm:$0xff]
    %v307 = vld [vmem:[#allocation5 + $0x608] sm:$0xff]
    %v308 = vld [vmem:[#allocation5 + $0x610] sm:$0xff]
    %v309 = vld [vmem:[#allocation5 + $0x618] sm:$0xff]
    %v310 = vld [vmem:[%s2] sm:$0xf]
    %v312 = vlaneseq
    %v313 = vshrl.u32 %v312, 7
    %v314 = vsub.s32 0, %v313
    %v315 = vrot.slane %v310, %v314
    %v316 = vlaneseq
    %v317 = vshrl.u32 %v316, 7
    %v318 = vsub.s32 1, %v317
    %v319 = vrot.slane %v310, %v318
    %v320 = vlaneseq
    %v321 = vshrl.u32 %v320, 7
    %v322 = vsub.s32 2, %v321
    %v323 = vrot.slane %v310, %v322
    %v324 = vlaneseq
    %v325 = vshrl.u32 %v324, 7
    %v326 = vsub.s32 3, %v325
    %v327 = vrot.slane %v310, %v326
    %v528 = vunpack.c.l.b16 %v114
    %v529 = vunpack.c.h.b16 %v114
    %v530 = vunpack.c.l.b16 %v115
    %v531 = vunpack.c.h.b16 %v115
    %v532 = vunpack.c.l.b16 %v116
    %v533 = vunpack.c.h.b16 %v116
    %v534 = vunpack.c.l.b16 %v117
    %v535 = vunpack.c.h.b16 %v117
    %v536 = vunpack.c.l.b16 %v118
    %v537 = vunpack.c.h.b16 %v118
    %v538 = vunpack.c.l.b16 %v119
    %v539 = vunpack.c.h.b16 %v119
    %v540 = vunpack.c.l.b16 %v120
    %v541 = vunpack.c.h.b16 %v120
    %v542 = vunpack.c.l.b16 %v121
    %v543 = vunpack.c.h.b16 %v121
    %v544 = vunpack.c.l.b16 %v122
    %v545 = vunpack.c.h.b16 %v122
    %v546 = vunpack.c.l.b16 %v123
    %v547 = vunpack.c.h.b16 %v123
    %v548 = vunpack.c.l.b16 %v124
    %v549 = vunpack.c.h.b16 %v124
    %v550 = vunpack.c.l.b16 %v125
    %v551 = vunpack.c.h.b16 %v125
    %v552 = vunpack.c.l.b16 %v126
    %v553 = vunpack.c.h.b16 %v126
    %v554 = vunpack.c.l.b16 %v127
    %v555 = vunpack.c.h.b16 %v127
    %v556 = vunpack.c.l.b16 %v128
    %v557 = vunpack.c.h.b16 %v128
    %v558 = vunpack.c.l.b16 %v129
    %v559 = vunpack.c.h.b16 %v129
    %v560 = vunpack.c.l.b16 %v130
    %v561 = vunpack.c.h.b16 %v130
    %v562 = vunpack.c.l.b16 %v131
    %v563 = vunpack.c.h.b16 %v131
    %v564 = vunpack.c.l.b16 %v132
    %v565 = vunpack.c.h.b16 %v132
    %v566 = vunpack.c.l.b16 %v133
    %v567 = vunpack.c.h.b16 %v133
    %v568 = vunpack.c.l.b16 %v134
    %v569 = vunpack.c.h.b16 %v134
    %v570 = vunpack.c.l.b16 %v135
    %v571 = vunpack.c.h.b16 %v135
    %v572 = vunpack.c.l.b16 %v136
    %v573 = vunpack.c.h.b16 %v136
    %v574 = vunpack.c.l.b16 %v137
    %v575 = vunpack.c.h.b16 %v137
    %v576 = vunpack.c.l.b16 %v138
    %v577 = vunpack.c.h.b16 %v138
    %v578 = vunpack.c.l.b16 %v139
    %v579 = vunpack.c.h.b16 %v139
    %v580 = vunpack.c.l.b16 %v140
    %v581 = vunpack.c.h.b16 %v140
    %v582 = vunpack.c.l.b16 %v141
    %v583 = vunpack.c.h.b16 %v141
    %v584 = vunpack.c.l.b16 %v142
    %v585 = vunpack.c.h.b16 %v142
    %v586 = vunpack.c.l.b16 %v143
    %v587 = vunpack.c.h.b16 %v143
    %v588 = vunpack.c.l.b16 %v144
    %v589 = vunpack.c.h.b16 %v144
    %v590 = vunpack.c.l.b16 %v145
    %v591 = vunpack.c.h.b16 %v145
    %v592 = vunpack.c.l.b16 %v146
    %v593 = vunpack.c.h.b16 %v146
    %v594 = vunpack.c.l.b16 %v147
    %v595 = vunpack.c.h.b16 %v147
    %v596 = vunpack.c.l.b16 %v148
    %v597 = vunpack.c.h.b16 %v148
    %v598 = vunpack.c.l.b16 %v149
    %v599 = vunpack.c.h.b16 %v149
    %v600 = vunpack.c.l.b16 %v150
    %v601 = vunpack.c.h.b16 %v150
    %v602 = vunpack.c.l.b16 %v151
    %v603 = vunpack.c.h.b16 %v151
    %v604 = vunpack.c.l.b16 %v152
    %v605 = vunpack.c.h.b16 %v152
    %v606 = vunpack.c.l.b16 %v153
    %v607 = vunpack.c.h.b16 %v153
    %v608 = vunpack.c.l.b16 %v154
    %v609 = vunpack.c.h.b16 %v154
    %v610 = vunpack.c.l.b16 %v155
    %v611 = vunpack.c.h.b16 %v155
    %v612 = vunpack.c.l.b16 %v156
    %v613 = vunpack.c.h.b16 %v156
    %v614 = vunpack.c.l.b16 %v157
    %v615 = vunpack.c.h.b16 %v157
    %v616 = vunpack.c.l.b16 %v158
    %v617 = vunpack.c.h.b16 %v158
    %v618 = vunpack.c.l.b16 %v159
    %v619 = vunpack.c.h.b16 %v159
    %v620 = vunpack.c.l.b16 %v160
    %v621 = vunpack.c.h.b16 %v160
    %v622 = vunpack.c.l.b16 %v161
    %v623 = vunpack.c.h.b16 %v161
    %v624 = vunpack.c.l.b16 %v162
    %v625 = vunpack.c.h.b16 %v162
    %v626 = vunpack.c.l.b16 %v163
    %v627 = vunpack.c.h.b16 %v163
    %v628 = vunpack.c.l.b16 %v164
    %v629 = vunpack.c.h.b16 %v164
    %v630 = vunpack.c.l.b16 %v165
    %v631 = vunpack.c.h.b16 %v165
    %v632 = vunpack.c.l.b16 %v166
    %v633 = vunpack.c.h.b16 %v166
    %v634 = vunpack.c.l.b16 %v167
    %v635 = vunpack.c.h.b16 %v167
    %v636 = vunpack.c.l.b16 %v168
    %v637 = vunpack.c.h.b16 %v168
    %v638 = vunpack.c.l.b16 %v169
    %v639 = vunpack.c.h.b16 %v169
    %v640 = vunpack.c.l.b16 %v170
    %v641 = vunpack.c.h.b16 %v170
    %v642 = vunpack.c.l.b16 %v171
    %v643 = vunpack.c.h.b16 %v171
    %v644 = vunpack.c.l.b16 %v172
    %v645 = vunpack.c.h.b16 %v172
    %v646 = vunpack.c.l.b16 %v173
    %v647 = vunpack.c.h.b16 %v173
    %v648 = vunpack.c.l.b16 %v174
    %v649 = vunpack.c.h.b16 %v174
    %v650 = vunpack.c.l.b16 %v175
    %v651 = vunpack.c.h.b16 %v175
    %v652 = vunpack.c.l.b16 %v176
    %v653 = vunpack.c.h.b16 %v176
    %v654 = vunpack.c.l.b16 %v177
    %v655 = vunpack.c.h.b16 %v177
    %v656 = vunpack.c.l.b16 %v178
    %v657 = vunpack.c.h.b16 %v178
    %v658 = vunpack.c.l.b16 %v179
    %v659 = vunpack.c.h.b16 %v179
    %v660 = vunpack.c.l.b16 %v180
    %v661 = vunpack.c.h.b16 %v180
    %v662 = vunpack.c.l.b16 %v181
    %v663 = vunpack.c.h.b16 %v181
    %v664 = vunpack.c.l.b16 %v182
    %v665 = vunpack.c.h.b16 %v182
    %v666 = vunpack.c.l.b16 %v183
    %v667 = vunpack.c.h.b16 %v183
    %v668 = vunpack.c.l.b16 %v184
    %v669 = vunpack.c.h.b16 %v184
    %v670 = vunpack.c.l.b16 %v185
    %v671 = vunpack.c.h.b16 %v185
    %v672 = vunpack.c.l.b16 %v186
    %v673 = vunpack.c.h.b16 %v186
    %v674 = vunpack.c.l.b16 %v187
    %v675 = vunpack.c.h.b16 %v187
    %v676 = vunpack.c.l.b16 %v188
    %v677 = vunpack.c.h.b16 %v188
    %v678 = vunpack.c.l.b16 %v189
    %v679 = vunpack.c.h.b16 %v189
    %v680 = vunpack.c.l.b16 %v190
    %v681 = vunpack.c.h.b16 %v190
    %v682 = vunpack.c.l.b16 %v191
    %v683 = vunpack.c.h.b16 %v191
    %v684 = vunpack.c.l.b16 %v192
    %v685 = vunpack.c.h.b16 %v192
    %v686 = vunpack.c.l.b16 %v193
    %v687 = vunpack.c.h.b16 %v193
    %v688 = vunpack.c.l.b16 %v194
    %v689 = vunpack.c.h.b16 %v194
    %v690 = vunpack.c.l.b16 %v195
    %v691 = vunpack.c.h.b16 %v195
    %v692 = vunpack.c.l.b16 %v196
    %v693 = vunpack.c.h.b16 %v196
    %v694 = vunpack.c.l.b16 %v197
    %v695 = vunpack.c.h.b16 %v197
    %v696 = vunpack.c.l.b16 %v198
    %v697 = vunpack.c.h.b16 %v198
    %v698 = vunpack.c.l.b16 %v199
    %v699 = vunpack.c.h.b16 %v199
    %v700 = vunpack.c.l.b16 %v200
    %v701 = vunpack.c.h.b16 %v200
    %v702 = vunpack.c.l.b16 %v201
    %v703 = vunpack.c.h.b16 %v201
    %v704 = vunpack.c.l.b16 %v202
    %v705 = vunpack.c.h.b16 %v202
    %v706 = vunpack.c.l.b16 %v203
    %v707 = vunpack.c.h.b16 %v203
    %v708 = vunpack.c.l.b16 %v204
    %v709 = vunpack.c.h.b16 %v204
    %v710 = vunpack.c.l.b16 %v205
    %v711 = vunpack.c.h.b16 %v205
    %v712 = vunpack.c.l.b16 %v206
    %v713 = vunpack.c.h.b16 %v206
    %v714 = vunpack.c.l.b16 %v207
    %v715 = vunpack.c.h.b16 %v207
    %v716 = vunpack.c.l.b16 %v208
    %v717 = vunpack.c.h.b16 %v208
    %v718 = vunpack.c.l.b16 %v209
    %v719 = vunpack.c.h.b16 %v209
    %v720 = vunpack.c.l.b16 %v210
    %v721 = vunpack.c.h.b16 %v210
    %v722 = vunpack.c.l.b16 %v211
    %v723 = vunpack.c.h.b16 %v211
    %v724 = vunpack.c.l.b16 %v212
    %v725 = vunpack.c.h.b16 %v212
    %v726 = vunpack.c.l.b16 %v213
    %v727 = vunpack.c.h.b16 %v213
    %v728 = vunpack.c.l.b16 %v214
    %v729 = vunpack.c.h.b16 %v214
    %v730 = vunpack.c.l.b16 %v215
    %v731 = vunpack.c.h.b16 %v215
    %v732 = vunpack.c.l.b16 %v216
    %v733 = vunpack.c.h.b16 %v216
    %v734 = vunpack.c.l.b16 %v217
    %v735 = vunpack.c.h.b16 %v217
    %v736 = vunpack.c.l.b16 %v218
    %v737 = vunpack.c.h.b16 %v218
    %v738 = vunpack.c.l.b16 %v219
    %v739 = vunpack.c.h.b16 %v219
    %v740 = vunpack.c.l.b16 %v220
    %v741 = vunpack.c.h.b16 %v220
    %v742 = vunpack.c.l.b16 %v221
    %v743 = vunpack.c.h.b16 %v221
    %v744 = vunpack.c.l.b16 %v222
    %v745 = vunpack.c.h.b16 %v222
    %v746 = vunpack.c.l.b16 %v223
    %v747 = vunpack.c.h.b16 %v223
    %v748 = vunpack.c.l.b16 %v224
    %v749 = vunpack.c.h.b16 %v224
    %v750 = vunpack.c.l.b16 %v225
    %v751 = vunpack.c.h.b16 %v225
    %v752 = vunpack.c.l.b16 %v226
    %v753 = vunpack.c.h.b16 %v226
    %v754 = vunpack.c.l.b16 %v227
    %v755 = vunpack.c.h.b16 %v227
    %v756 = vunpack.c.l.b16 %v228
    %v757 = vunpack.c.h.b16 %v228
    %v758 = vunpack.c.l.b16 %v229
    %v759 = vunpack.c.h.b16 %v229
    %v760 = vunpack.c.l.b16 %v230
    %v761 = vunpack.c.h.b16 %v230
    %v762 = vunpack.c.l.b16 %v231
    %v763 = vunpack.c.h.b16 %v231
    %v764 = vunpack.c.l.b16 %v232
    %v765 = vunpack.c.h.b16 %v232
    %v766 = vunpack.c.l.b16 %v233
    %v767 = vunpack.c.h.b16 %v233
    %v768 = vunpack.c.l.b16 %v234
    %v769 = vunpack.c.h.b16 %v234
    %v770 = vunpack.c.l.b16 %v235
    %v771 = vunpack.c.h.b16 %v235
    %v772 = vunpack.c.l.b16 %v236
    %v773 = vunpack.c.h.b16 %v236
    %v774 = vunpack.c.l.b16 %v237
    %v775 = vunpack.c.h.b16 %v237
    %v776 = vunpack.c.l.b16 %v238
    %v777 = vunpack.c.h.b16 %v238
    %v778 = vunpack.c.l.b16 %v239
    %v779 = vunpack.c.h.b16 %v239
    %v780 = vunpack.c.l.b16 %v240
    %v781 = vunpack.c.h.b16 %v240
    %v782 = vunpack.c.l.b16 %v241
    %v783 = vunpack.c.h.b16 %v241
    %v784 = vunpack.c.l.b16 %v242
    %v785 = vunpack.c.h.b16 %v242
    %v786 = vunpack.c.l.b16 %v243
    %v787 = vunpack.c.h.b16 %v243
    %v788 = vunpack.c.l.b16 %v244
    %v789 = vunpack.c.h.b16 %v244
    %v790 = vunpack.c.l.b16 %v245
    %v791 = vunpack.c.h.b16 %v245
    %v792 = vunpack.c.l.b16 %v246
    %v793 = vunpack.c.h.b16 %v246
    %v794 = vunpack.c.l.b16 %v247
    %v795 = vunpack.c.h.b16 %v247
    %v796 = vunpack.c.l.b16 %v248
    %v797 = vunpack.c.h.b16 %v248
    %v798 = vunpack.c.l.b16 %v249
    %v799 = vunpack.c.h.b16 %v249
    %v800 = vunpack.c.l.b16 %v250
    %v801 = vunpack.c.h.b16 %v250
    %v802 = vunpack.c.l.b16 %v251
    %v803 = vunpack.c.h.b16 %v251
    %v804 = vunpack.c.l.b16 %v252
    %v805 = vunpack.c.h.b16 %v252
    %v806 = vunpack.c.l.b16 %v253
    %v807 = vunpack.c.h.b16 %v253
    %v808 = vunpack.c.l.b16 %v254
    %v809 = vunpack.c.h.b16 %v254
    %v810 = vunpack.c.l.b16 %v255
    %v811 = vunpack.c.h.b16 %v255
    %v812 = vunpack.c.l.b16 %v256
    %v813 = vunpack.c.h.b16 %v256
    %v814 = vunpack.c.l.b16 %v257
    %v815 = vunpack.c.h.b16 %v257
    %v816 = vunpack.c.l.b16 %v258
    %v817 = vunpack.c.h.b16 %v258
    %v818 = vunpack.c.l.b16 %v259
    %v819 = vunpack.c.h.b16 %v259
    %v820 = vunpack.c.l.b16 %v260
    %v821 = vunpack.c.h.b16 %v260
    %v822 = vunpack.c.l.b16 %v261
    %v823 = vunpack.c.h.b16 %v261
    %v824 = vunpack.c.l.b16 %v262
    %v825 = vunpack.c.h.b16 %v262
    %v826 = vunpack.c.l.b16 %v263
    %v827 = vunpack.c.h.b16 %v263
    %v828 = vunpack.c.l.b16 %v264
    %v829 = vunpack.c.h.b16 %v264
    %v830 = vunpack.c.l.b16 %v265
    %v831 = vunpack.c.h.b16 %v265
    %v832 = vunpack.c.l.b16 %v266
    %v833 = vunpack.c.h.b16 %v266
    %v834 = vunpack.c.l.b16 %v267
    %v835 = vunpack.c.h.b16 %v267
    %v836 = vunpack.c.l.b16 %v268
    %v837 = vunpack.c.h.b16 %v268
    %v838 = vunpack.c.l.b16 %v269
    %v839 = vunpack.c.h.b16 %v269
    %v840 = vunpack.c.l.b16 %v270
    %v841 = vunpack.c.h.b16 %v270
    %v842 = vunpack.c.l.b16 %v271
    %v843 = vunpack.c.h.b16 %v271
    %v844 = vunpack.c.l.b16 %v272
    %v845 = vunpack.c.h.b16 %v272
    %v846 = vunpack.c.l.b16 %v273
    %v847 = vunpack.c.h.b16 %v273
    %v848 = vunpack.c.l.b16 %v274
    %v849 = vunpack.c.h.b16 %v274
    %v850 = vunpack.c.l.b16 %v275
    %v851 = vunpack.c.h.b16 %v275
    %v852 = vunpack.c.l.b16 %v276
    %v853 = vunpack.c.h.b16 %v276
    %v854 = vunpack.c.l.b16 %v277
    %v855 = vunpack.c.h.b16 %v277
    %v856 = vunpack.c.l.b16 %v278
    %v857 = vunpack.c.h.b16 %v278
    %v858 = vunpack.c.l.b16 %v279
    %v859 = vunpack.c.h.b16 %v279
    %v860 = vunpack.c.l.b16 %v280
    %v861 = vunpack.c.h.b16 %v280
    %v862 = vunpack.c.l.b16 %v281
    %v863 = vunpack.c.h.b16 %v281
    %v864 = vunpack.c.l.b16 %v282
    %v865 = vunpack.c.h.b16 %v282
    %v866 = vunpack.c.l.b16 %v283
    %v867 = vunpack.c.h.b16 %v283
    %v868 = vunpack.c.l.b16 %v284
    %v869 = vunpack.c.h.b16 %v284
    %v870 = vunpack.c.l.b16 %v285
    %v871 = vunpack.c.h.b16 %v285
    %v872 = vunpack.c.l.b16 %v286
    %v873 = vunpack.c.h.b16 %v286
    %v874 = vunpack.c.l.b16 %v287
    %v875 = vunpack.c.h.b16 %v287
    %v876 = vunpack.c.l.b16 %v288
    %v877 = vunpack.c.h.b16 %v288
    %v878 = vunpack.c.l.b16 %v289
    %v879 = vunpack.c.h.b16 %v289
    %v880 = vunpack.c.l.b16 %v290
    %v881 = vunpack.c.h.b16 %v290
    %v882 = vunpack.c.l.b16 %v291
    %v883 = vunpack.c.h.b16 %v291
    %v884 = vunpack.c.l.b16 %v292
    %v885 = vunpack.c.h.b16 %v292
    %v886 = vunpack.c.l.b16 %v293
    %v887 = vunpack.c.h.b16 %v293
    %v888 = vunpack.c.l.b16 %v294
    %v889 = vunpack.c.h.b16 %v294
    %v890 = vunpack.c.l.b16 %v295
    %v891 = vunpack.c.h.b16 %v295
    %v892 = vunpack.c.l.b16 %v296
    %v893 = vunpack.c.h.b16 %v296
    %v894 = vunpack.c.l.b16 %v297
    %v895 = vunpack.c.h.b16 %v297
    %v896 = vunpack.c.l.b16 %v298
    %v897 = vunpack.c.h.b16 %v298
    %v898 = vunpack.c.l.b16 %v299
    %v899 = vunpack.c.h.b16 %v299
    %v900 = vunpack.c.l.b16 %v300
    %v901 = vunpack.c.h.b16 %v300
    %v902 = vunpack.c.l.b16 %v301
    %v903 = vunpack.c.h.b16 %v301
    %v904 = vunpack.c.l.b16 %v302
    %v905 = vunpack.c.h.b16 %v302
    %v906 = vunpack.c.l.b16 %v303
    %v907 = vunpack.c.h.b16 %v303
    %v908 = vunpack.c.l.b16 %v304
    %v909 = vunpack.c.h.b16 %v304
    %v910 = vunpack.c.l.b16 %v305
    %v911 = vunpack.c.h.b16 %v305
    %v912 = vunpack.c.l.b16 %v306
    %v913 = vunpack.c.h.b16 %v306
    %v914 = vunpack.c.l.b16 %v307
    %v915 = vunpack.c.h.b16 %v307
    %v916 = vunpack.c.l.b16 %v308
    %v917 = vunpack.c.h.b16 %v308
    %v918 = vunpack.c.l.b16 %v309
    %v919 = vunpack.c.h.b16 %v309
    %v920 = vpack.c.b16 %v532, %v528
    %v921 = vpack.c.b16 %v533, %v529
    %v922 = vpack.c.b16 %v534, %v530
    %v923 = vpack.c.b16 %v535, %v531
    %v924 = vpack.c.b16 %v540, %v536
    %v925 = vpack.c.b16 %v541, %v537
    %v926 = vpack.c.b16 %v542, %v538
    %v927 = vpack.c.b16 %v543, %v539
    %v928 = vpack.c.b16 %v548, %v544
    %v929 = vpack.c.b16 %v549, %v545
    %v930 = vpack.c.b16 %v550, %v546
    %v931 = vpack.c.b16 %v551, %v547
    %v932 = vpack.c.b16 %v556, %v552
    %v933 = vpack.c.b16 %v557, %v553
    %v934 = vpack.c.b16 %v558, %v554
    %v935 = vpack.c.b16 %v559, %v555
    %v936 = vpack.c.b16 %v564, %v560
    %v937 = vpack.c.b16 %v565, %v561
    %v938 = vpack.c.b16 %v566, %v562
    %v939 = vpack.c.b16 %v567, %v563
    %v940 = vpack.c.b16 %v572, %v568
    %v941 = vpack.c.b16 %v573, %v569
    %v942 = vpack.c.b16 %v574, %v570
    %v943 = vpack.c.b16 %v575, %v571
    %v944 = vpack.c.b16 %v580, %v576
    %v945 = vpack.c.b16 %v581, %v577
    %v946 = vpack.c.b16 %v582, %v578
    %v947 = vpack.c.b16 %v583, %v579
    %v948 = vpack.c.b16 %v588, %v584
    %v949 = vpack.c.b16 %v589, %v585
    %v950 = vpack.c.b16 %v590, %v586
    %v951 = vpack.c.b16 %v591, %v587
    %v952 = vpack.c.b16 %v596, %v592
    %v953 = vpack.c.b16 %v597, %v593
    %v954 = vpack.c.b16 %v598, %v594
    %v955 = vpack.c.b16 %v599, %v595
    %v956 = vpack.c.b16 %v604, %v600
    %v957 = vpack.c.b16 %v605, %v601
    %v958 = vpack.c.b16 %v606, %v602
    %v959 = vpack.c.b16 %v607, %v603
    %v960 = vpack.c.b16 %v612, %v608
    %v961 = vpack.c.b16 %v613, %v609
    %v962 = vpack.c.b16 %v614, %v610
    %v963 = vpack.c.b16 %v615, %v611
    %v964 = vpack.c.b16 %v620, %v616
    %v965 = vpack.c.b16 %v621, %v617
    %v966 = vpack.c.b16 %v622, %v618
    %v967 = vpack.c.b16 %v623, %v619
    %v968 = vpack.c.b16 %v628, %v624
    %v969 = vpack.c.b16 %v629, %v625
    %v970 = vpack.c.b16 %v630, %v626
    %v971 = vpack.c.b16 %v631, %v627
    %v972 = vpack.c.b16 %v636, %v632
    %v973 = vpack.c.b16 %v637, %v633
    %v974 = vpack.c.b16 %v638, %v634
    %v975 = vpack.c.b16 %v639, %v635
    %v976 = vpack.c.b16 %v644, %v640
    %v977 = vpack.c.b16 %v645, %v641
    %v978 = vpack.c.b16 %v646, %v642
    %v979 = vpack.c.b16 %v647, %v643
    %v980 = vpack.c.b16 %v652, %v648
    %v981 = vpack.c.b16 %v653, %v649
    %v982 = vpack.c.b16 %v654, %v650
    %v983 = vpack.c.b16 %v655, %v651
    %v984 = vpack.c.b16 %v660, %v656
    %v985 = vpack.c.b16 %v661, %v657
    %v986 = vpack.c.b16 %v662, %v658
    %v987 = vpack.c.b16 %v663, %v659
    %v988 = vpack.c.b16 %v668, %v664
    %v989 = vpack.c.b16 %v669, %v665
    %v990 = vpack.c.b16 %v670, %v666
    %v991 = vpack.c.b16 %v671, %v667
    %v992 = vpack.c.b16 %v676, %v672
    %v993 = vpack.c.b16 %v677, %v673
    %v994 = vpack.c.b16 %v678, %v674
    %v995 = vpack.c.b16 %v679, %v675
    %v996 = vpack.c.b16 %v684, %v680
    %v997 = vpack.c.b16 %v685, %v681
    %v998 = vpack.c.b16 %v686, %v682
    %v999 = vpack.c.b16 %v687, %v683
    %v1000 = vpack.c.b16 %v692, %v688
    %v1001 = vpack.c.b16 %v693, %v689
    %v1002 = vpack.c.b16 %v694, %v690
    %v1003 = vpack.c.b16 %v695, %v691
    %v1004 = vpack.c.b16 %v700, %v696
    %v1005 = vpack.c.b16 %v701, %v697
    %v1006 = vpack.c.b16 %v702, %v698
    %v1007 = vpack.c.b16 %v703, %v699
    %v1008 = vpack.c.b16 %v708, %v704
    %v1009 = vpack.c.b16 %v709, %v705
    %v1010 = vpack.c.b16 %v710, %v706
    %v1011 = vpack.c.b16 %v711, %v707
    %v1012 = vpack.c.b16 %v716, %v712
    %v1013 = vpack.c.b16 %v717, %v713
    %v1014 = vpack.c.b16 %v718, %v714
    %v1015 = vpack.c.b16 %v719, %v715
    %v1016 = vpack.c.b16 %v724, %v720
    %v1017 = vpack.c.b16 %v725, %v721
    %v1018 = vpack.c.b16 %v726, %v722
    %v1019 = vpack.c.b16 %v727, %v723
    %v1020 = vpack.c.b16 %v732, %v728
    %v1021 = vpack.c.b16 %v733, %v729
    %v1022 = vpack.c.b16 %v734, %v730
    %v1023 = vpack.c.b16 %v735, %v731
    %v1024 = vpack.c.b16 %v740, %v736
    %v1025 = vpack.c.b16 %v741, %v737
    %v1026 = vpack.c.b16 %v742, %v738
    %v1027 = vpack.c.b16 %v743, %v739
    %v1028 = vpack.c.b16 %v748, %v744
    %v1029 = vpack.c.b16 %v749, %v745
    %v1030 = vpack.c.b16 %v750, %v746
    %v1031 = vpack.c.b16 %v751, %v747
    %v1032 = vpack.c.b16 %v756, %v752
    %v1033 = vpack.c.b16 %v757, %v753
    %v1034 = vpack.c.b16 %v758, %v754
    %v1035 = vpack.c.b16 %v759, %v755
    %v1036 = vpack.c.b16 %v764, %v760
    %v1037 = vpack.c.b16 %v765, %v761
    %v1038 = vpack.c.b16 %v766, %v762
    %v1039 = vpack.c.b16 %v767, %v763
    %v1040 = vpack.c.b16 %v772, %v768
    %v1041 = vpack.c.b16 %v773, %v769
    %v1042 = vpack.c.b16 %v774, %v770
    %v1043 = vpack.c.b16 %v775, %v771
    %v1044 = vpack.c.b16 %v780, %v776
    %v1045 = vpack.c.b16 %v781, %v777
    %v1046 = vpack.c.b16 %v782, %v778
    %v1047 = vpack.c.b16 %v783, %v779
    %v1048 = vpack.c.b16 %v788, %v784
    %v1049 = vpack.c.b16 %v789, %v785
    %v1050 = vpack.c.b16 %v790, %v786
    %v1051 = vpack.c.b16 %v791, %v787
    %v1052 = vpack.c.b16 %v796, %v792
    %v1053 = vpack.c.b16 %v797, %v793
    %v1054 = vpack.c.b16 %v798, %v794
    %v1055 = vpack.c.b16 %v799, %v795
    %v1056 = vpack.c.b16 %v804, %v800
    %v1057 = vpack.c.b16 %v805, %v801
    %v1058 = vpack.c.b16 %v806, %v802
    %v1059 = vpack.c.b16 %v807, %v803
    %v1060 = vpack.c.b16 %v812, %v808
    %v1061 = vpack.c.b16 %v813, %v809
    %v1062 = vpack.c.b16 %v814, %v810
    %v1063 = vpack.c.b16 %v815, %v811
    %v1064 = vpack.c.b16 %v820, %v816
    %v1065 = vpack.c.b16 %v821, %v817
    %v1066 = vpack.c.b16 %v822, %v818
    %v1067 = vpack.c.b16 %v823, %v819
    %v1068 = vpack.c.b16 %v828, %v824
    %v1069 = vpack.c.b16 %v829, %v825
    %v1070 = vpack.c.b16 %v830, %v826
    %v1071 = vpack.c.b16 %v831, %v827
    %v1072 = vpack.c.b16 %v836, %v832
    %v1073 = vpack.c.b16 %v837, %v833
    %v1074 = vpack.c.b16 %v838, %v834
    %v1075 = vpack.c.b16 %v839, %v835
    %v1076 = vpack.c.b16 %v844, %v840
    %v1077 = vpack.c.b16 %v845, %v841
    %v1078 = vpack.c.b16 %v846, %v842
    %v1079 = vpack.c.b16 %v847, %v843
    %v1080 = vpack.c.b16 %v852, %v848
    %v1081 = vpack.c.b16 %v853, %v849
    %v1082 = vpack.c.b16 %v854, %v850
    %v1083 = vpack.c.b16 %v855, %v851
    %v1084 = vpack.c.b16 %v860, %v856
    %v1085 = vpack.c.b16 %v861, %v857
    %v1086 = vpack.c.b16 %v862, %v858
    %v1087 = vpack.c.b16 %v863, %v859
    %v1088 = vpack.c.b16 %v868, %v864
    %v1089 = vpack.c.b16 %v869, %v865
    %v1090 = vpack.c.b16 %v870, %v866
    %v1091 = vpack.c.b16 %v871, %v867
    %v1092 = vpack.c.b16 %v876, %v872
    %v1093 = vpack.c.b16 %v877, %v873
    %v1094 = vpack.c.b16 %v878, %v874
    %v1095 = vpack.c.b16 %v879, %v875
    %v1096 = vpack.c.b16 %v884, %v880
    %v1097 = vpack.c.b16 %v885, %v881
    %v1098 = vpack.c.b16 %v886, %v882
    %v1099 = vpack.c.b16 %v887, %v883
    %v1100 = vpack.c.b16 %v892, %v888
    %v1101 = vpack.c.b16 %v893, %v889
    %v1102 = vpack.c.b16 %v894, %v890
    %v1103 = vpack.c.b16 %v895, %v891
    %v1104 = vpack.c.b16 %v900, %v896
    %v1105 = vpack.c.b16 %v901, %v897
    %v1106 = vpack.c.b16 %v902, %v898
    %v1107 = vpack.c.b16 %v903, %v899
    %v1108 = vpack.c.b16 %v908, %v904
    %v1109 = vpack.c.b16 %v909, %v905
    %v1110 = vpack.c.b16 %v910, %v906
    %v1111 = vpack.c.b16 %v911, %v907
    %v1112 = vpack.c.b16 %v916, %v912
    %v1113 = vpack.c.b16 %v917, %v913
    %v1114 = vpack.c.b16 %v918, %v914
    %v1115 = vpack.c.b16 %v919, %v915
    %vm1312 = vcmask 130048
    %v1314 = vsel %vm1312, %v113, 0
    %1316 = vmatprep.subr.bf16.mxu0 %v921
    %1317 = vmatpush1.bf16.msra.mxu0 %v920
    %1318 = vmatprep.subr.bf16.mxu0 %v925
    %1319 = vmatpush1.bf16.msra.mxu0 %v924
    %1320 = vmatprep.subr.bf16.mxu0 %v929
    %1321 = vmatpush1.bf16.msra.mxu0 %v928
    %1322 = vmatprep.subr.bf16.mxu0 %v933
    %1323 = vmatpush1.bf16.msra.mxu0 %v932
    %1324 = vmatprep.subr.bf16.mxu0 %v937
    %1325 = vmatpush1.bf16.msra.mxu0 %v936
    %1326 = vmatprep.subr.bf16.mxu0 %v941
    %1327 = vmatpush1.bf16.msra.mxu0 %v940
    %1328 = vmatprep.subr.bf16.mxu0 %v945
    %1329 = vmatpush1.bf16.msra.mxu0 %v944
    %1330 = vmatprep.subr.bf16.mxu0 %v949
    %1331 = vmatpush1.bf16.msra.mxu0 %v948
    %1332 = vmatprep.subr.bf16.mxu0 %v953
    %1333 = vmatpush1.bf16.msra.mxu0 %v952
    %1334 = vmatprep.subr.bf16.mxu0 %v957
    %1335 = vmatpush1.bf16.msra.mxu0 %v956
    %1336 = vmatprep.subr.bf16.mxu0 %v961
    %1337 = vmatpush1.bf16.msra.mxu0 %v960
    %1338 = vmatprep.subr.bf16.mxu0 %v965
    %1339 = vmatpush1.bf16.msra.mxu0 %v964
    %1340 = vmatprep.subr.bf16.mxu0 %v969
    %1341 = vmatpush1.bf16.msra.mxu0 %v968
    %1342 = vmatprep.subr.bf16.mxu0 %v973
    %1343 = vmatpush1.bf16.msra.mxu0 %v972
    %1344 = vmatprep.subr.bf16.mxu0 %v977
    %1345 = vmatpush1.bf16.msra.mxu0 %v976
    %1346 = vmatprep.subr.bf16.mxu0 %v981
    %1347 = vmatpush1.bf16.msra.mxu0 %v980
    %1348 = vmatprep.mubr.bf16.mxu0 %v108
    %1349 = vmatmul.mubr.bf16.gmra.mrb[0].mxu0 %v107
    %v1350 = vpop.f32.mrb[0].mxu0
    %v1351 = vadd.f32 %v315, %v1350
    %v1352 = vpop.f32.mrb[0].mxu0
    %v1353 = vadd.f32 %v319, %v1352
    %v1354 = vpop.f32.mrb[0].mxu0
    %v1355 = vpop.f32.mrb[0].mxu0
    %1356 = vdwg.mxu0
    %1357 = vmatprep.subr.bf16.mxu0 %v985
    %1358 = vmatpush1.bf16.msra.mxu0 %v984
    %1359 = vmatprep.subr.bf16.mxu0 %v989
    %1360 = vmatpush1.bf16.msra.mxu0 %v988
    %1361 = vmatprep.subr.bf16.mxu0 %v993
    %1362 = vmatpush1.bf16.msra.mxu0 %v992
    %1363 = vmatprep.subr.bf16.mxu0 %v997
    %1364 = vmatpush1.bf16.msra.mxu0 %v996
    %1365 = vmatprep.subr.bf16.mxu0 %v1001
    %1366 = vmatpush1.bf16.msra.mxu0 %v1000
    %1367 = vmatprep.subr.bf16.mxu0 %v1005
    %1368 = vmatpush1.bf16.msra.mxu0 %v1004
    %1369 = vmatprep.subr.bf16.mxu0 %v1009
    %1370 = vmatpush1.bf16.msra.mxu0 %v1008
    %1371 = vmatprep.subr.bf16.mxu0 %v1013
    %1372 = vmatpush1.bf16.msra.mxu0 %v1012
    %1373 = vmatprep.subr.bf16.mxu0 %v1017
    %1374 = vmatpush1.bf16.msra.mxu0 %v1016
    %1375 = vmatprep.subr.bf16.mxu0 %v1021
    %1376 = vmatpush1.bf16.msra.mxu0 %v1020
    %1377 = vmatprep.subr.bf16.mxu0 %v1025
    %1378 = vmatpush1.bf16.msra.mxu0 %v1024
    %1379 = vmatprep.subr.bf16.mxu0 %v1029
    %1380 = vmatpush1.bf16.msra.mxu0 %v1028
    %1381 = vmatprep.subr.bf16.mxu0 %v1033
    %1382 = vmatpush1.bf16.msra.mxu0 %v1032
    %1383 = vmatprep.subr.bf16.mxu0 %v1037
    %1384 = vmatpush1.bf16.msra.mxu0 %v1036
    %1385 = vmatprep.subr.bf16.mxu0 %v1041
    %1386 = vmatpush1.bf16.msra.mxu0 %v1040
    %1387 = vmatprep.subr.bf16.mxu0 %v1045
    %1388 = vmatpush1.bf16.msra.mxu0 %v1044
    %1389 = vmatprep.mubr.bf16.mxu0 %v110
    %1390 = vmatmul.mubr.bf16.gmra.mrb[0].mxu0 %v109
    %v1391 = vpop.f32.mrb[0].mxu0
    %v1392 = vadd.f32 %v1351, %v1391
    %v1393 = vpop.f32.mrb[0].mxu0
    %v1394 = vadd.f32 %v1353, %v1393
    %v1395 = vpop.f32.mrb[0].mxu0
    %v1396 = vpop.f32.mrb[0].mxu0
    %1397 = vdwg.mxu0
    %1398 = vmatprep.subr.bf16.mxu0 %v1049
    %1399 = vmatpush1.bf16.msra.mxu0 %v1048
    %1400 = vmatprep.subr.bf16.mxu0 %v1053
    %1401 = vmatpush1.bf16.msra.mxu0 %v1052
    %1402 = vmatprep.subr.bf16.mxu0 %v1057
    %1403 = vmatpush1.bf16.msra.mxu0 %v1056
    %1404 = vmatprep.subr.bf16.mxu0 %v1061
    %1405 = vmatpush1.bf16.msra.mxu0 %v1060
    %1406 = vmatprep.subr.bf16.mxu0 %v1065
    %1407 = vmatpush1.bf16.msra.mxu0 %v1064
    %1408 = vmatprep.subr.bf16.mxu0 %v1069
    %1409 = vmatpush1.bf16.msra.mxu0 %v1068
    %1410 = vmatprep.subr.bf16.mxu0 %v1073
    %1411 = vmatpush1.bf16.msra.mxu0 %v1072
    %1412 = vmatprep.subr.bf16.mxu0 %v1077
    %1413 = vmatpush1.bf16.msra.mxu0 %v1076
    %1414 = vmatprep.subr.bf16.mxu0 %v1081
    %1415 = vmatpush1.bf16.msra.mxu0 %v1080
    %1416 = vmatprep.subr.bf16.mxu0 %v1085
    %1417 = vmatpush1.bf16.msra.mxu0 %v1084
    %1418 = vmatprep.subr.bf16.mxu0 %v1089
    %1419 = vmatpush1.bf16.msra.mxu0 %v1088
    %1420 = vmatprep.subr.bf16.mxu0 %v1093
    %1421 = vmatpush1.bf16.msra.mxu0 %v1092
    %1422 = vmatprep.subr.bf16.mxu0 %v1097
    %1423 = vmatpush1.bf16.msra.mxu0 %v1096
    %1424 = vmatprep.subr.bf16.mxu0 %v1101
    %1425 = vmatpush1.bf16.msra.mxu0 %v1100
    %1426 = vmatprep.subr.bf16.mxu0 %v1105
    %1427 = vmatpush1.bf16.msra.mxu0 %v1104
    %1428 = vmatprep.subr.bf16.mxu0 %v1109
    %1429 = vmatpush1.bf16.msra.mxu0 %v1108
    %1430 = vmatprep.mubr.bf16.mxu0 %v112
    %1431 = vmatmul.mubr.bf16.gmra.mrb[0].mxu0 %v111
    %v1432 = vpop.f32.mrb[0].mxu0
    %v1433 = vadd.f32 %v1392, %v1432
    %v1434 = vpop.f32.mrb[0].mxu0
    %v1435 = vadd.f32 %v1394, %v1434
    %v1436 = vpop.f32.mrb[0].mxu0
    %v1437 = vpop.f32.mrb[0].mxu0
    %1438 = vdwg.mxu0
    %1439 = vmatprep.subr.bf16.mxu0 %v1113
    %1440 = vmatpush1.bf16.msra.mxu0 %v1112
    %1441 = vmatprep.subr.bf16.mxu0 0
    %1442 = vmatpush1.bf16.msra.mxu0 0
    %1443 = vmatprep.subr.bf16.mxu0 0
    %1444 = vmatpush1.bf16.msra.mxu0 0
    %1445 = vmatprep.subr.bf16.mxu0 0
    %1446 = vmatpush1.bf16.msra.mxu0 0
    %1447 = vmatprep.subr.bf16.mxu0 0
    %1448 = vmatpush1.bf16.msra.mxu0 0
    %1449 = vmatprep.subr.bf16.mxu0 0
    %1450 = vmatpush1.bf16.msra.mxu0 0
    %1451 = vmatprep.subr.bf16.mxu0 0
    %1452 = vmatpush1.bf16.msra.mxu0 0
    %1453 = vmatprep.subr.bf16.mxu0 0
    %1454 = vmatpush1.bf16.msra.mxu0 0
    %1455 = vmatprep.subr.bf16.mxu0 0
    %1456 = vmatpush1.bf16.msra.mxu0 0
    %1457 = vmatprep.subr.bf16.mxu0 0
    %1458 = vmatpush1.bf16.msra.mxu0 0
    %1459 = vmatprep.subr.bf16.mxu0 0
    %1460 = vmatpush1.bf16.msra.mxu0 0
    %1461 = vmatprep.subr.bf16.mxu0 0
    %1462 = vmatpush1.bf16.msra.mxu0 0
    %1463 = vmatprep.subr.bf16.mxu0 0
    %1464 = vmatpush1.bf16.msra.mxu0 0
    %1465 = vmatprep.subr.bf16.mxu0 0
    %1466 = vmatpush1.bf16.msra.mxu0 0
    %1467 = vmatprep.subr.bf16.mxu0 0
    %1468 = vmatpush1.bf16.msra.mxu0 0
    %1469 = vmatprep.subr.bf16.mxu0 0
    %1470 = vmatpush1.bf16.msra.mxu0 0
    %1471 = vmatprep.mubr.bf16.mxu0 0
    %1472 = vmatmul.mubr.bf16.gmra.mrb[0].mxu0 %v1314
    %v1473 = vpop.f32.mrb[0].mxu0
    %v1474 = vadd.f32 %v1433, %v1473
    %v1475 = vpop.f32.mrb[0].mxu0
    %v1476 = vadd.f32 %v1435, %v1475
    %v1477 = vpop.f32.mrb[0].mxu0
    %v1478 = vpop.f32.mrb[0].mxu0
    %1479 = vdwg.mxu0
    %1480 = vmatprep.subr.bf16.mxu0 %v923
    %1481 = vmatpush1.bf16.msra.mxu0 %v922
    %1482 = vmatprep.subr.bf16.mxu0 %v927
    %1483 = vmatpush1.bf16.msra.mxu0 %v926
    %1484 = vmatprep.subr.bf16.mxu0 %v931
    %1485 = vmatpush1.bf16.msra.mxu0 %v930
    %1486 = vmatprep.subr.bf16.mxu0 %v935
    %1487 = vmatpush1.bf16.msra.mxu0 %v934
    %1488 = vmatprep.subr.bf16.mxu0 %v939
    %1489 = vmatpush1.bf16.msra.mxu0 %v938
    %1490 = vmatprep.subr.bf16.mxu0 %v943
    %1491 = vmatpush1.bf16.msra.mxu0 %v942
    %1492 = vmatprep.subr.bf16.mxu0 %v947
    %1493 = vmatpush1.bf16.msra.mxu0 %v946
    %1494 = vmatprep.subr.bf16.mxu0 %v951
    %1495 = vmatpush1.bf16.msra.mxu0 %v950
    %1496 = vmatprep.subr.bf16.mxu0 %v955
    %1497 = vmatpush1.bf16.msra.mxu0 %v954
    %1498 = vmatprep.subr.bf16.mxu0 %v959
    %1499 = vmatpush1.bf16.msra.mxu0 %v958
    %1500 = vmatprep.subr.bf16.mxu0 %v963
    %1501 = vmatpush1.bf16.msra.mxu0 %v962
    %1502 = vmatprep.subr.bf16.mxu0 %v967
    %1503 = vmatpush1.bf16.msra.mxu0 %v966
    %1504 = vmatprep.subr.bf16.mxu0 %v971
    %1505 = vmatpush1.bf16.msra.mxu0 %v970
    %1506 = vmatprep.subr.bf16.mxu0 %v975
    %1507 = vmatpush1.bf16.msra.mxu0 %v974
    %1508 = vmatprep.subr.bf16.mxu0 %v979
    %1509 = vmatpush1.bf16.msra.mxu0 %v978
    %1510 = vmatprep.subr.bf16.mxu0 %v983
    %1511 = vmatpush1.bf16.msra.mxu0 %v982
    %1512 = vmatprep.mubr.bf16.mxu0 %v108
    %1513 = vmatmul.mubr.bf16.gmra.mrb[0].mxu0 %v107
    %v1514 = vpop.f32.mrb[0].mxu0
    %v1515 = vadd.f32 %v323, %v1514
    %v1516 = vpop.f32.mrb[0].mxu0
    %v1517 = vadd.f32 %v327, %v1516
    %v1518 = vpop.f32.mrb[0].mxu0
    %v1519 = vpop.f32.mrb[0].mxu0
    %1520 = vdwg.mxu0
    %1521 = vmatprep.subr.bf16.mxu0 %v987
    %1522 = vmatpush1.bf16.msra.mxu0 %v986
    %1523 = vmatprep.subr.bf16.mxu0 %v991
    %1524 = vmatpush1.bf16.msra.mxu0 %v990
    %1525 = vmatprep.subr.bf16.mxu0 %v995
    %1526 = vmatpush1.bf16.msra.mxu0 %v994
    %1527 = vmatprep.subr.bf16.mxu0 %v999
    %1528 = vmatpush1.bf16.msra.mxu0 %v998
    %1529 = vmatprep.subr.bf16.mxu0 %v1003
    %1530 = vmatpush1.bf16.msra.mxu0 %v1002
    %1531 = vmatprep.subr.bf16.mxu0 %v1007
    %1532 = vmatpush1.bf16.msra.mxu0 %v1006
    %1533 = vmatprep.subr.bf16.mxu0 %v1011
    %1534 = vmatpush1.bf16.msra.mxu0 %v1010
    %1535 = vmatprep.subr.bf16.mxu0 %v1015
    %1536 = vmatpush1.bf16.msra.mxu0 %v1014
    %1537 = vmatprep.subr.bf16.mxu0 %v1019
    %1538 = vmatpush1.bf16.msra.mxu0 %v1018
    %1539 = vmatprep.subr.bf16.mxu0 %v1023
    %1540 = vmatpush1.bf16.msra.mxu0 %v1022
    %1541 = vmatprep.subr.bf16.mxu0 %v1027
    %1542 = vmatpush1.bf16.msra.mxu0 %v1026
    %1543 = vmatprep.subr.bf16.mxu0 %v1031
    %1544 = vmatpush1.bf16.msra.mxu0 %v1030
    %1545 = vmatprep.subr.bf16.mxu0 %v1035
    %1546 = vmatpush1.bf16.msra.mxu0 %v1034
    %1547 = vmatprep.subr.bf16.mxu0 %v1039
    %1548 = vmatpush1.bf16.msra.mxu0 %v1038
    %1549 = vmatprep.subr.bf16.mxu0 %v1043
    %1550 = vmatpush1.bf16.msra.mxu0 %v1042
    %1551 = vmatprep.subr.bf16.mxu0 %v1047
    %1552 = vmatpush1.bf16.msra.mxu0 %v1046
    %1553 = vmatprep.mubr.bf16.mxu0 %v110
    %1554 = vmatmul.mubr.bf16.gmra.mrb[0].mxu0 %v109
    %v1555 = vpop.f32.mrb[0].mxu0
    %v1556 = vadd.f32 %v1515, %v1555
    %v1557 = vpop.f32.mrb[0].mxu0
    %v1558 = vadd.f32 %v1517, %v1557
    %v1559 = vpop.f32.mrb[0].mxu0
    %v1560 = vpop.f32.mrb[0].mxu0
    %1561 = vdwg.mxu0
    %1562 = vmatprep.subr.bf16.mxu0 %v1051
    %1563 = vmatpush1.bf16.msra.mxu0 %v1050
    %1564 = vmatprep.subr.bf16.mxu0 %v1055
    %1565 = vmatpush1.bf16.msra.mxu0 %v1054
    %1566 = vmatprep.subr.bf16.mxu0 %v1059
    %1567 = vmatpush1.bf16.msra.mxu0 %v1058
    %1568 = vmatprep.subr.bf16.mxu0 %v1063
    %1569 = vmatpush1.bf16.msra.mxu0 %v1062
    %1570 = vmatprep.subr.bf16.mxu0 %v1067
    %1571 = vmatpush1.bf16.msra.mxu0 %v1066
    %1572 = vmatprep.subr.bf16.mxu0 %v1071
    %1573 = vmatpush1.bf16.msra.mxu0 %v1070
    %1574 = vmatprep.subr.bf16.mxu0 %v1075
    %1575 = vmatpush1.bf16.msra.mxu0 %v1074
    %1576 = vmatprep.subr.bf16.mxu0 %v1079
    %1577 = vmatpush1.bf16.msra.mxu0 %v1078
    %1578 = vmatprep.subr.bf16.mxu0 %v1083
    %1579 = vmatpush1.bf16.msra.mxu0 %v1082
    %1580 = vmatprep.subr.bf16.mxu0 %v1087
    %1581 = vmatpush1.bf16.msra.mxu0 %v1086
    %1582 = vmatprep.subr.bf16.mxu0 %v1091
    %1583 = vmatpush1.bf16.msra.mxu0 %v1090
    %1584 = vmatprep.subr.bf16.mxu0 %v1095
    %1585 = vmatpush1.bf16.msra.mxu0 %v1094
    %1586 = vmatprep.subr.bf16.mxu0 %v1099
    %1587 = vmatpush1.bf16.msra.mxu0 %v1098
    %1588 = vmatprep.subr.bf16.mxu0 %v1103
    %1589 = vmatpush1.bf16.msra.mxu0 %v1102
    %1590 = vmatprep.subr.bf16.mxu0 %v1107
    %1591 = vmatpush1.bf16.msra.mxu0 %v1106
    %1592 = vmatprep.subr.bf16.mxu0 %v1111
    %1593 = vmatpush1.bf16.msra.mxu0 %v1110
    %1594 = vmatprep.mubr.bf16.mxu0 %v112
    %1595 = vmatmul.mubr.bf16.gmra.mrb[0].mxu0 %v111
    %v1596 = vpop.f32.mrb[0].mxu0
    %v1597 = vadd.f32 %v1556, %v1596
    %v1598 = vpop.f32.mrb[0].mxu0
    %v1599 = vadd.f32 %v1558, %v1598
    %v1600 = vpop.f32.mrb[0].mxu0
    %v1601 = vpop.f32.mrb[0].mxu0
    %1602 = vdwg.mxu0
    %1603 = vmatprep.subr.bf16.mxu0 %v1115
    %1604 = vmatpush1.bf16.msra.mxu0 %v1114
    %1605 = vmatprep.subr.bf16.mxu0 0
    %1606 = vmatpush1.bf16.msra.mxu0 0
    %1607 = vmatprep.subr.bf16.mxu0 0
    %1608 = vmatpush1.bf16.msra.mxu0 0
    %1609 = vmatprep.subr.bf16.mxu0 0
    %1610 = vmatpush1.bf16.msra.mxu0 0
    %1611 = vmatprep.subr.bf16.mxu0 0
    %1612 = vmatpush1.bf16.msra.mxu0 0
    %1613 = vmatprep.subr.bf16.mxu0 0
    %1614 = vmatpush1.bf16.msra.mxu0 0
    %1615 = vmatprep.subr.bf16.mxu0 0
    %1616 = vmatpush1.bf16.msra.mxu0 0
    %1617 = vmatprep.subr.bf16.mxu0 0
    %1618 = vmatpush1.bf16.msra.mxu0 0
    %1619 = vmatprep.subr.bf16.mxu0 0
    %1620 = vmatpush1.bf16.msra.mxu0 0
    %1621 = vmatprep.subr.bf16.mxu0 0
    %1622 = vmatpush1.bf16.msra.mxu0 0
    %1623 = vmatprep.subr.bf16.mxu0 0
    %1624 = vmatpush1.bf16.msra.mxu0 0
    %1625 = vmatprep.subr.bf16.mxu0 0
    %1626 = vmatpush1.bf16.msra.mxu0 0
    %1627 = vmatprep.subr.bf16.mxu0 0
    %1628 = vmatpush1.bf16.msra.mxu0 0
    %1629 = vmatprep.subr.bf16.mxu0 0
    %1630 = vmatpush1.bf16.msra.mxu0 0
    %1631 = vmatprep.subr.bf16.mxu0 0
    %1632 = vmatpush1.bf16.msra.mxu0 0
    %1633 = vmatprep.subr.bf16.mxu0 0
    %1634 = vmatpush1.bf16.msra.mxu0 0
    %1635 = vmatprep.mubr.bf16.mxu0 0
    %1636 = vmatmul.mubr.bf16.gmra.mrb[0].mxu0 %v1314
    %v1637 = vpop.f32.mrb[0].mxu0
    %v1638 = vadd.f32 %v1597, %v1637
    %v1639 = vpop.f32.mrb[0].mxu0
    %v1640 = vadd.f32 %v1599, %v1639
    %v1641 = vpop.f32.mrb[0].mxu0
    %v1642 = vpop.f32.mrb[0].mxu0
    %1643 = vdwg.mxu0
    %v1644 = vpack.c.bf16 %v1474, %v1474
    %v1645 = vpack.c.bf16 %v1476, %v1476
    %v1646 = vpack.c.bf16 %v1638, %v1638
    %v1647 = vpack.c.bf16 %v1640, %v1640
    %v1648 = vld [vmem:[#allocation7] sm:$0xff]
    %v1649 = vld [vmem:[#allocation7 + $0x8] sm:$0xff]
    %v1650 = vld [vmem:[#allocation7 + $0x10] sm:$0xff]
    %v1651 = vld [vmem:[#allocation7 + $0x18] sm:$0xff]
    %v1652 = vld [vmem:[#allocation7 + $0x20] sm:$0xff]
    %v1653 = vld [vmem:[#allocation7 + $0x28] sm:$0xff]
    %v1654 = vld [vmem:[#allocation7 + $0x30] sm:$0xff]
    %v1655 = vld [vmem:[#allocation7 + $0x38] sm:$0xff]
    %v1656 = vld [vmem:[#allocation7 + $0x40] sm:$0xff]
    %v1657 = vld [vmem:[#allocation7 + $0x48] sm:$0xff]
    %v1658 = vld [vmem:[#allocation7 + $0x50] sm:$0xff]
    %v1659 = vld [vmem:[#allocation7 + $0x58] sm:$0xff]
    %v1660 = vld [vmem:[#allocation7 + $0x60] sm:$0xff]
    %v1661 = vld [vmem:[#allocation7 + $0x68] sm:$0xff]
    %v1662 = vld [vmem:[#allocation7 + $0x70] sm:$0xff]
    %v1663 = vld [vmem:[#allocation7 + $0x78] sm:$0xff]
    %v1664 = vld [vmem:[#allocation7 + $0x80] sm:$0xff]
    %v1665 = vld [vmem:[#allocation7 + $0x88] sm:$0xff]
    %v1666 = vld [vmem:[#allocation7 + $0x90] sm:$0xff]
    %v1667 = vld [vmem:[#allocation7 + $0x98] sm:$0xff]
    %v1668 = vld [vmem:[#allocation7 + $0xa0] sm:$0xff]
    %v1669 = vld [vmem:[#allocation7 + $0xa8] sm:$0xff]
    %v1670 = vld [vmem:[#allocation7 + $0xb0] sm:$0xff]
    %v1671 = vld [vmem:[#allocation7 + $0xb8] sm:$0xff]
    %v1672 = vld [vmem:[#allocation7 + $0xc0] sm:$0xff]
    %v1673 = vld [vmem:[#allocation7 + $0xc8] sm:$0xff]
    %v1674 = vld [vmem:[#allocation7 + $0xd0] sm:$0xff]
    %v1675 = vld [vmem:[#allocation7 + $0xd8] sm:$0xff]
    %v1676 = vld [vmem:[#allocation7 + $0xe0] sm:$0xff]
    %v1677 = vld [vmem:[#allocation7 + $0xe8] sm:$0xff]
    %v1678 = vld [vmem:[#allocation7 + $0xf0] sm:$0xff]
    %v1679 = vld [vmem:[#allocation7 + $0xf8] sm:$0xff]
    %v1680 = vld [vmem:[#allocation7 + $0x100] sm:$0xff]
    %v1681 = vld [vmem:[#allocation7 + $0x108] sm:$0xff]
    %v1682 = vld [vmem:[#allocation7 + $0x110] sm:$0xff]
    %v1683 = vld [vmem:[#allocation7 + $0x118] sm:$0xff]
    %v1684 = vld [vmem:[#allocation7 + $0x120] sm:$0xff]
    %v1685 = vld [vmem:[#allocation7 + $0x128] sm:$0xff]
    %v1686 = vld [vmem:[#allocation7 + $0x130] sm:$0xff]
    %v1687 = vld [vmem:[#allocation7 + $0x138] sm:$0xff]
    %v1688 = vld [vmem:[#allocation7 + $0x140] sm:$0xff]
    %v1689 = vld [vmem:[#allocation7 + $0x148] sm:$0xff]
    %v1690 = vld [vmem:[#allocation7 + $0x150] sm:$0xff]
    %v1691 = vld [vmem:[#allocation7 + $0x158] sm:$0xff]
    %v1692 = vld [vmem:[#allocation7 + $0x160] sm:$0xff]
    %v1693 = vld [vmem:[#allocation7 + $0x168] sm:$0xff]
    %v1694 = vld [vmem:[#allocation7 + $0x170] sm:$0xff]
    %v1695 = vld [vmem:[#allocation7 + $0x178] sm:$0xff]
    %v1696 = vld [vmem:[#allocation7 + $0x180] sm:$0xff]
    %v1697 = vld [vmem:[#allocation7 + $0x188] sm:$0xff]
    %v1698 = vld [vmem:[#allocation7 + $0x190] sm:$0xff]
    %v1699 = vld [vmem:[#allocation7 + $0x198] sm:$0xff]
    %v1700 = vld [vmem:[#allocation7 + $0x1a0] sm:$0xff]
    %v1701 = vld [vmem:[#allocation7 + $0x1a8] sm:$0xff]
    %v1702 = vld [vmem:[#allocation7 + $0x1b0] sm:$0xff]
    %v1703 = vld [vmem:[#allocation7 + $0x1b8] sm:$0xff]
    %v1704 = vld [vmem:[#allocation7 + $0x1c0] sm:$0xff]
    %v1705 = vld [vmem:[#allocation7 + $0x1c8] sm:$0xff]
    %v1706 = vld [vmem:[#allocation7 + $0x1d0] sm:$0xff]
    %v1707 = vld [vmem:[#allocation7 + $0x1d8] sm:$0xff]
    %v1708 = vld [vmem:[#allocation7 + $0x1e0] sm:$0xff]
    %v1709 = vld [vmem:[#allocation7 + $0x1e8] sm:$0xff]
    %v1710 = vld [vmem:[#allocation7 + $0x1f0] sm:$0xff]
    %v1711 = vld [vmem:[#allocation7 + $0x1f8] sm:$0xff]
    %v1712 = vld [vmem:[#allocation7 + $0x200] sm:$0xff]
    %v1713 = vld [vmem:[#allocation7 + $0x208] sm:$0xff]
    %v1714 = vld [vmem:[#allocation7 + $0x210] sm:$0xff]
    %v1715 = vld [vmem:[#allocation7 + $0x218] sm:$0xff]
    %v1716 = vld [vmem:[#allocation7 + $0x220] sm:$0xff]
    %v1717 = vld [vmem:[#allocation7 + $0x228] sm:$0xff]
    %v1718 = vld [vmem:[#allocation7 + $0x230] sm:$0xff]
    %v1719 = vld [vmem:[#allocation7 + $0x238] sm:$0xff]
    %v1720 = vld [vmem:[#allocation7 + $0x240] sm:$0xff]
    %v1721 = vld [vmem:[#allocation7 + $0x248] sm:$0xff]
    %v1722 = vld [vmem:[#allocation7 + $0x250] sm:$0xff]
    %v1723 = vld [vmem:[#allocation7 + $0x258] sm:$0xff]
    %v1724 = vld [vmem:[#allocation7 + $0x260] sm:$0xff]
    %v1725 = vld [vmem:[#allocation7 + $0x268] sm:$0xff]
    %v1726 = vld [vmem:[#allocation7 + $0x270] sm:$0xff]
    %v1727 = vld [vmem:[#allocation7 + $0x278] sm:$0xff]
    %v1728 = vld [vmem:[#allocation7 + $0x280] sm:$0xff]
    %v1729 = vld [vmem:[#allocation7 + $0x288] sm:$0xff]
    %v1730 = vld [vmem:[#allocation7 + $0x290] sm:$0xff]
    %v1731 = vld [vmem:[#allocation7 + $0x298] sm:$0xff]
    %v1732 = vld [vmem:[#allocation7 + $0x2a0] sm:$0xff]
    %v1733 = vld [vmem:[#allocation7 + $0x2a8] sm:$0xff]
    %v1734 = vld [vmem:[#allocation7 + $0x2b0] sm:$0xff]
    %v1735 = vld [vmem:[#allocation7 + $0x2b8] sm:$0xff]
    %v1736 = vld [vmem:[#allocation7 + $0x2c0] sm:$0xff]
    %v1737 = vld [vmem:[#allocation7 + $0x2c8] sm:$0xff]
    %v1738 = vld [vmem:[#allocation7 + $0x2d0] sm:$0xff]
    %v1739 = vld [vmem:[#allocation7 + $0x2d8] sm:$0xff]
    %v1740 = vld [vmem:[#allocation7 + $0x2e0] sm:$0xff]
    %v1741 = vld [vmem:[#allocation7 + $0x2e8] sm:$0xff]
    %v1742 = vld [vmem:[#allocation7 + $0x2f0] sm:$0xff]
    %v1743 = vld [vmem:[#allocation7 + $0x2f8] sm:$0xff]
    %v1744 = vld [vmem:[#allocation7 + $0x300] sm:$0xff]
    %v1745 = vld [vmem:[#allocation7 + $0x308] sm:$0xff]
    %v1746 = vld [vmem:[#allocation7 + $0x310] sm:$0xff]
    %v1747 = vld [vmem:[#allocation7 + $0x318] sm:$0xff]
    %v1748 = vld [vmem:[#allocation7 + $0x320] sm:$0xff]
    %v1749 = vld [vmem:[#allocation7 + $0x328] sm:$0xff]
    %v1750 = vld [vmem:[#allocation7 + $0x330] sm:$0xff]
    %v1751 = vld [vmem:[#allocation7 + $0x338] sm:$0xff]
    %v1752 = vld [vmem:[#allocation7 + $0x340] sm:$0xff]
    %v1753 = vld [vmem:[#allocation7 + $0x348] sm:$0xff]
    %v1754 = vld [vmem:[#allocation7 + $0x350] sm:$0xff]
    %v1755 = vld [vmem:[#allocation7 + $0x358] sm:$0xff]
    %v1756 = vld [vmem:[#allocation7 + $0x360] sm:$0xff]
    %v1757 = vld [vmem:[#allocation7 + $0x368] sm:$0xff]
    %v1758 = vld [vmem:[#allocation7 + $0x370] sm:$0xff]
    %v1759 = vld [vmem:[#allocation7 + $0x378] sm:$0xff]
    %v1760 = vld [vmem:[#allocation7 + $0x380] sm:$0xff]
    %v1761 = vld [vmem:[#allocation7 + $0x388] sm:$0xff]
    %v1762 = vld [vmem:[#allocation7 + $0x390] sm:$0xff]
    %v1763 = vld [vmem:[#allocation7 + $0x398] sm:$0xff]
    %v1764 = vld [vmem:[#allocation7 + $0x3a0] sm:$0xff]
    %v1765 = vld [vmem:[#allocation7 + $0x3a8] sm:$0xff]
    %v1766 = vld [vmem:[#allocation7 + $0x3b0] sm:$0xff]
    %v1767 = vld [vmem:[#allocation7 + $0x3b8] sm:$0xff]
    %v1768 = vld [vmem:[#allocation7 + $0x3c0] sm:$0xff]
    %v1769 = vld [vmem:[#allocation7 + $0x3c8] sm:$0xff]
    %v1770 = vld [vmem:[#allocation7 + $0x3d0] sm:$0xff]
    %v1771 = vld [vmem:[#allocation7 + $0x3d8] sm:$0xff]
    %v1772 = vld [vmem:[#allocation7 + $0x3e0] sm:$0xff]
    %v1773 = vld [vmem:[#allocation7 + $0x3e8] sm:$0xff]
    %v1774 = vld [vmem:[#allocation7 + $0x3f0] sm:$0xff]
    %v1775 = vld [vmem:[#allocation7 + $0x3f8] sm:$0xff]
    %v1776 = vld [vmem:[%s4] sm:$0xf]
    %v1778 = vlaneseq
    %v1779 = vshrl.u32 %v1778, 7
    %v1780 = vsub.s32 0, %v1779
    %v1781 = vrot.slane %v1776, %v1780
    %v1782 = vlaneseq
    %v1783 = vshrl.u32 %v1782, 7
    %v1784 = vsub.s32 1, %v1783
    %v1785 = vrot.slane %v1776, %v1784
    %v1786 = vlaneseq
    %v1787 = vshrl.u32 %v1786, 7
    %v1788 = vsub.s32 2, %v1787
    %v1789 = vrot.slane %v1776, %v1788
    %v1790 = vlaneseq
    %v1791 = vshrl.u32 %v1790, 7
    %v1792 = vsub.s32 3, %v1791
    %v1793 = vrot.slane %v1776, %v1792
    %v1926 = vunpack.c.l.b16 %v1648
    %v1927 = vunpack.c.h.b16 %v1648
    %v1928 = vunpack.c.l.b16 %v1649
    %v1929 = vunpack.c.h.b16 %v1649
    %v1930 = vunpack.c.l.b16 %v1650
    %v1931 = vunpack.c.h.b16 %v1650
    %v1932 = vunpack.c.l.b16 %v1651
    %v1933 = vunpack.c.h.b16 %v1651
    %v1934 = vunpack.c.l.b16 %v1652
    %v1935 = vunpack.c.h.b16 %v1652
    %v1936 = vunpack.c.l.b16 %v1653
    %v1937 = vunpack.c.h.b16 %v1653
    %v1938 = vunpack.c.l.b16 %v1654
    %v1939 = vunpack.c.h.b16 %v1654
    %v1940 = vunpack.c.l.b16 %v1655
    %v1941 = vunpack.c.h.b16 %v1655
    %v1942 = vunpack.c.l.b16 %v1656
    %v1943 = vunpack.c.h.b16 %v1656
    %v1944 = vunpack.c.l.b16 %v1657
    %v1945 = vunpack.c.h.b16 %v1657
    %v1946 = vunpack.c.l.b16 %v1658
    %v1947 = vunpack.c.h.b16 %v1658
    %v1948 = vunpack.c.l.b16 %v1659
    %v1949 = vunpack.c.h.b16 %v1659
    %v1950 = vunpack.c.l.b16 %v1660
    %v1951 = vunpack.c.h.b16 %v1660
    %v1952 = vunpack.c.l.b16 %v1661
    %v1953 = vunpack.c.h.b16 %v1661
    %v1954 = vunpack.c.l.b16 %v1662
    %v1955 = vunpack.c.h.b16 %v1662
    %v1956 = vunpack.c.l.b16 %v1663
    %v1957 = vunpack.c.h.b16 %v1663
    %v1958 = vunpack.c.l.b16 %v1664
    %v1959 = vunpack.c.h.b16 %v1664
    %v1960 = vunpack.c.l.b16 %v1665
    %v1961 = vunpack.c.h.b16 %v1665
    %v1962 = vunpack.c.l.b16 %v1666
    %v1963 = vunpack.c.h.b16 %v1666
    %v1964 = vunpack.c.l.b16 %v1667
    %v1965 = vunpack.c.h.b16 %v1667
    %v1966 = vunpack.c.l.b16 %v1668
    %v1967 = vunpack.c.h.b16 %v1668
    %v1968 = vunpack.c.l.b16 %v1669
    %v1969 = vunpack.c.h.b16 %v1669
    %v1970 = vunpack.c.l.b16 %v1670
    %v1971 = vunpack.c.h.b16 %v1670
    %v1972 = vunpack.c.l.b16 %v1671
    %v1973 = vunpack.c.h.b16 %v1671
    %v1974 = vunpack.c.l.b16 %v1672
    %v1975 = vunpack.c.h.b16 %v1672
    %v1976 = vunpack.c.l.b16 %v1673
    %v1977 = vunpack.c.h.b16 %v1673
    %v1978 = vunpack.c.l.b16 %v1674
    %v1979 = vunpack.c.h.b16 %v1674
    %v1980 = vunpack.c.l.b16 %v1675
    %v1981 = vunpack.c.h.b16 %v1675
    %v1982 = vunpack.c.l.b16 %v1676
    %v1983 = vunpack.c.h.b16 %v1676
    %v1984 = vunpack.c.l.b16 %v1677
    %v1985 = vunpack.c.h.b16 %v1677
    %v1986 = vunpack.c.l.b16 %v1678
    %v1987 = vunpack.c.h.b16 %v1678
    %v1988 = vunpack.c.l.b16 %v1679
    %v1989 = vunpack.c.h.b16 %v1679
    %v1990 = vunpack.c.l.b16 %v1680
    %v1991 = vunpack.c.h.b16 %v1680
    %v1992 = vunpack.c.l.b16 %v1681
    %v1993 = vunpack.c.h.b16 %v1681
    %v1994 = vunpack.c.l.b16 %v1682
    %v1995 = vunpack.c.h.b16 %v1682
    %v1996 = vunpack.c.l.b16 %v1683
    %v1997 = vunpack.c.h.b16 %v1683
    %v1998 = vunpack.c.l.b16 %v1684
    %v1999 = vunpack.c.h.b16 %v1684
    %v2000 = vunpack.c.l.b16 %v1685
    %v2001 = vunpack.c.h.b16 %v1685
    %v2002 = vunpack.c.l.b16 %v1686
    %v2003 = vunpack.c.h.b16 %v1686
    %v2004 = vunpack.c.l.b16 %v1687
    %v2005 = vunpack.c.h.b16 %v1687
    %v2006 = vunpack.c.l.b16 %v1688
    %v2007 = vunpack.c.h.b16 %v1688
    %v2008 = vunpack.c.l.b16 %v1689
    %v2009 = vunpack.c.h.b16 %v1689
    %v2010 = vunpack.c.l.b16 %v1690
    %v2011 = vunpack.c.h.b16 %v1690
    %v2012 = vunpack.c.l.b16 %v1691
    %v2013 = vunpack.c.h.b16 %v1691
    %v2014 = vunpack.c.l.b16 %v1692
    %v2015 = vunpack.c.h.b16 %v1692
    %v2016 = vunpack.c.l.b16 %v1693
    %v2017 = vunpack.c.h.b16 %v1693
    %v2018 = vunpack.c.l.b16 %v1694
    %v2019 = vunpack.c.h.b16 %v1694
    %v2020 = vunpack.c.l.b16 %v1695
    %v2021 = vunpack.c.h.b16 %v1695
    %v2022 = vunpack.c.l.b16 %v1696
    %v2023 = vunpack.c.h.b16 %v1696
    %v2024 = vunpack.c.l.b16 %v1697
    %v2025 = vunpack.c.h.b16 %v1697
    %v2026 = vunpack.c.l.b16 %v1698
    %v2027 = vunpack.c.h.b16 %v1698
    %v2028 = vunpack.c.l.b16 %v1699
    %v2029 = vunpack.c.h.b16 %v1699
    %v2030 = vunpack.c.l.b16 %v1700
    %v2031 = vunpack.c.h.b16 %v1700
    %v2032 = vunpack.c.l.b16 %v1701
    %v2033 = vunpack.c.h.b16 %v1701
    %v2034 = vunpack.c.l.b16 %v1702
    %v2035 = vunpack.c.h.b16 %v1702
    %v2036 = vunpack.c.l.b16 %v1703
    %v2037 = vunpack.c.h.b16 %v1703
    %v2038 = vunpack.c.l.b16 %v1704
    %v2039 = vunpack.c.h.b16 %v1704
    %v2040 = vunpack.c.l.b16 %v1705
    %v2041 = vunpack.c.h.b16 %v1705
    %v2042 = vunpack.c.l.b16 %v1706
    %v2043 = vunpack.c.h.b16 %v1706
    %v2044 = vunpack.c.l.b16 %v1707
    %v2045 = vunpack.c.h.b16 %v1707
    %v2046 = vunpack.c.l.b16 %v1708
    %v2047 = vunpack.c.h.b16 %v1708
    %v2048 = vunpack.c.l.b16 %v1709
    %v2049 = vunpack.c.h.b16 %v1709
    %v2050 = vunpack.c.l.b16 %v1710
    %v2051 = vunpack.c.h.b16 %v1710
    %v2052 = vunpack.c.l.b16 %v1711
    %v2053 = vunpack.c.h.b16 %v1711
    %v2054 = vunpack.c.l.b16 %v1712
    %v2055 = vunpack.c.h.b16 %v1712
    %v2056 = vunpack.c.l.b16 %v1713
    %v2057 = vunpack.c.h.b16 %v1713
    %v2058 = vunpack.c.l.b16 %v1714
    %v2059 = vunpack.c.h.b16 %v1714
    %v2060 = vunpack.c.l.b16 %v1715
    %v2061 = vunpack.c.h.b16 %v1715
    %v2062 = vunpack.c.l.b16 %v1716
    %v2063 = vunpack.c.h.b16 %v1716
    %v2064 = vunpack.c.l.b16 %v1717
    %v2065 = vunpack.c.h.b16 %v1717
    %v2066 = vunpack.c.l.b16 %v1718
    %v2067 = vunpack.c.h.b16 %v1718
    %v2068 = vunpack.c.l.b16 %v1719
    %v2069 = vunpack.c.h.b16 %v1719
    %v2070 = vunpack.c.l.b16 %v1720
    %v2071 = vunpack.c.h.b16 %v1720
    %v2072 = vunpack.c.l.b16 %v1721
    %v2073 = vunpack.c.h.b16 %v1721
    %v2074 = vunpack.c.l.b16 %v1722
    %v2075 = vunpack.c.h.b16 %v1722
    %v2076 = vunpack.c.l.b16 %v1723
    %v2077 = vunpack.c.h.b16 %v1723
    %v2078 = vunpack.c.l.b16 %v1724
    %v2079 = vunpack.c.h.b16 %v1724
    %v2080 = vunpack.c.l.b16 %v1725
    %v2081 = vunpack.c.h.b16 %v1725
    %v2082 = vunpack.c.l.b16 %v1726
    %v2083 = vunpack.c.h.b16 %v1726
    %v2084 = vunpack.c.l.b16 %v1727
    %v2085 = vunpack.c.h.b16 %v1727
    %v2086 = vunpack.c.l.b16 %v1728
    %v2087 = vunpack.c.h.b16 %v1728
    %v2088 = vunpack.c.l.b16 %v1729
    %v2089 = vunpack.c.h.b16 %v1729
    %v2090 = vunpack.c.l.b16 %v1730
    %v2091 = vunpack.c.h.b16 %v1730
    %v2092 = vunpack.c.l.b16 %v1731
    %v2093 = vunpack.c.h.b16 %v1731
    %v2094 = vunpack.c.l.b16 %v1732
    %v2095 = vunpack.c.h.b16 %v1732
    %v2096 = vunpack.c.l.b16 %v1733
    %v2097 = vunpack.c.h.b16 %v1733
    %v2098 = vunpack.c.l.b16 %v1734
    %v2099 = vunpack.c.h.b16 %v1734
    %v2100 = vunpack.c.l.b16 %v1735
    %v2101 = vunpack.c.h.b16 %v1735
    %v2102 = vunpack.c.l.b16 %v1736
    %v2103 = vunpack.c.h.b16 %v1736
    %v2104 = vunpack.c.l.b16 %v1737
    %v2105 = vunpack.c.h.b16 %v1737
    %v2106 = vunpack.c.l.b16 %v1738
    %v2107 = vunpack.c.h.b16 %v1738
    %v2108 = vunpack.c.l.b16 %v1739
    %v2109 = vunpack.c.h.b16 %v1739
    %v2110 = vunpack.c.l.b16 %v1740
    %v2111 = vunpack.c.h.b16 %v1740
    %v2112 = vunpack.c.l.b16 %v1741
    %v2113 = vunpack.c.h.b16 %v1741
    %v2114 = vunpack.c.l.b16 %v1742
    %v2115 = vunpack.c.h.b16 %v1742
    %v2116 = vunpack.c.l.b16 %v1743
    %v2117 = vunpack.c.h.b16 %v1743
    %v2118 = vunpack.c.l.b16 %v1744
    %v2119 = vunpack.c.h.b16 %v1744
    %v2120 = vunpack.c.l.b16 %v1745
    %v2121 = vunpack.c.h.b16 %v1745
    %v2122 = vunpack.c.l.b16 %v1746
    %v2123 = vunpack.c.h.b16 %v1746
    %v2124 = vunpack.c.l.b16 %v1747
    %v2125 = vunpack.c.h.b16 %v1747
    %v2126 = vunpack.c.l.b16 %v1748
    %v2127 = vunpack.c.h.b16 %v1748
    %v2128 = vunpack.c.l.b16 %v1749
    %v2129 = vunpack.c.h.b16 %v1749
    %v2130 = vunpack.c.l.b16 %v1750
    %v2131 = vunpack.c.h.b16 %v1750
    %v2132 = vunpack.c.l.b16 %v1751
    %v2133 = vunpack.c.h.b16 %v1751
    %v2134 = vunpack.c.l.b16 %v1752
    %v2135 = vunpack.c.h.b16 %v1752
    %v2136 = vunpack.c.l.b16 %v1753
    %v2137 = vunpack.c.h.b16 %v1753
    %v2138 = vunpack.c.l.b16 %v1754
    %v2139 = vunpack.c.h.b16 %v1754
    %v2140 = vunpack.c.l.b16 %v1755
    %v2141 = vunpack.c.h.b16 %v1755
    %v2142 = vunpack.c.l.b16 %v1756
    %v2143 = vunpack.c.h.b16 %v1756
    %v2144 = vunpack.c.l.b16 %v1757
    %v2145 = vunpack.c.h.b16 %v1757
    %v2146 = vunpack.c.l.b16 %v1758
    %v2147 = vunpack.c.h.b16 %v1758
    %v2148 = vunpack.c.l.b16 %v1759
    %v2149 = vunpack.c.h.b16 %v1759
    %v2150 = vunpack.c.l.b16 %v1760
    %v2151 = vunpack.c.h.b16 %v1760
    %v2152 = vunpack.c.l.b16 %v1761
    %v2153 = vunpack.c.h.b16 %v1761
    %v2154 = vunpack.c.l.b16 %v1762
    %v2155 = vunpack.c.h.b16 %v1762
    %v2156 = vunpack.c.l.b16 %v1763
    %v2157 = vunpack.c.h.b16 %v1763
    %v2158 = vunpack.c.l.b16 %v1764
    %v2159 = vunpack.c.h.b16 %v1764
    %v2160 = vunpack.c.l.b16 %v1765
    %v2161 = vunpack.c.h.b16 %v1765
    %v2162 = vunpack.c.l.b16 %v1766
    %v2163 = vunpack.c.h.b16 %v1766
    %v2164 = vunpack.c.l.b16 %v1767
    %v2165 = vunpack.c.h.b16 %v1767
    %v2166 = vunpack.c.l.b16 %v1768
    %v2167 = vunpack.c.h.b16 %v1768
    %v2168 = vunpack.c.l.b16 %v1769
    %v2169 = vunpack.c.h.b16 %v1769
    %v2170 = vunpack.c.l.b16 %v1770
    %v2171 = vunpack.c.h.b16 %v1770
    %v2172 = vunpack.c.l.b16 %v1771
    %v2173 = vunpack.c.h.b16 %v1771
    %v2174 = vunpack.c.l.b16 %v1772
    %v2175 = vunpack.c.h.b16 %v1772
    %v2176 = vunpack.c.l.b16 %v1773
    %v2177 = vunpack.c.h.b16 %v1773
    %v2178 = vunpack.c.l.b16 %v1774
    %v2179 = vunpack.c.h.b16 %v1774
    %v2180 = vunpack.c.l.b16 %v1775
    %v2181 = vunpack.c.h.b16 %v1775
    %v2182 = vpack.c.b16 %v1930, %v1926
    %v2183 = vpack.c.b16 %v1931, %v1927
    %v2184 = vpack.c.b16 %v1932, %v1928
    %v2185 = vpack.c.b16 %v1933, %v1929
    %v2186 = vpack.c.b16 %v1938, %v1934
    %v2187 = vpack.c.b16 %v1939, %v1935
    %v2188 = vpack.c.b16 %v1940, %v1936
    %v2189 = vpack.c.b16 %v1941, %v1937
    %v2190 = vpack.c.b16 %v1946, %v1942
    %v2191 = vpack.c.b16 %v1947, %v1943
    %v2192 = vpack.c.b16 %v1948, %v1944
    %v2193 = vpack.c.b16 %v1949, %v1945
    %v2194 = vpack.c.b16 %v1954, %v1950
    %v2195 = vpack.c.b16 %v1955, %v1951
    %v2196 = vpack.c.b16 %v1956, %v1952
    %v2197 = vpack.c.b16 %v1957, %v1953
    %v2198 = vpack.c.b16 %v1962, %v1958
    %v2199 = vpack.c.b16 %v1963, %v1959
    %v2200 = vpack.c.b16 %v1964, %v1960
    %v2201 = vpack.c.b16 %v1965, %v1961
    %v2202 = vpack.c.b16 %v1970, %v1966
    %v2203 = vpack.c.b16 %v1971, %v1967
    %v2204 = vpack.c.b16 %v1972, %v1968
    %v2205 = vpack.c.b16 %v1973, %v1969
    %v2206 = vpack.c.b16 %v1978, %v1974
    %v2207 = vpack.c.b16 %v1979, %v1975
    %v2208 = vpack.c.b16 %v1980, %v1976
    %v2209 = vpack.c.b16 %v1981, %v1977
    %v2210 = vpack.c.b16 %v1986, %v1982
    %v2211 = vpack.c.b16 %v1987, %v1983
    %v2212 = vpack.c.b16 %v1988, %v1984
    %v2213 = vpack.c.b16 %v1989, %v1985
    %v2214 = vpack.c.b16 %v1994, %v1990
    %v2215 = vpack.c.b16 %v1995, %v1991
    %v2216 = vpack.c.b16 %v1996, %v1992
    %v2217 = vpack.c.b16 %v1997, %v1993
    %v2218 = vpack.c.b16 %v2002, %v1998
    %v2219 = vpack.c.b16 %v2003, %v1999
    %v2220 = vpack.c.b16 %v2004, %v2000
    %v2221 = vpack.c.b16 %v2005, %v2001
    %v2222 = vpack.c.b16 %v2010, %v2006
    %v2223 = vpack.c.b16 %v2011, %v2007
    %v2224 = vpack.c.b16 %v2012, %v2008
    %v2225 = vpack.c.b16 %v2013, %v2009
    %v2226 = vpack.c.b16 %v2018, %v2014
    %v2227 = vpack.c.b16 %v2019, %v2015
    %v2228 = vpack.c.b16 %v2020, %v2016
    %v2229 = vpack.c.b16 %v2021, %v2017
    %v2230 = vpack.c.b16 %v2026, %v2022
    %v2231 = vpack.c.b16 %v2027, %v2023
    %v2232 = vpack.c.b16 %v2028, %v2024
    %v2233 = vpack.c.b16 %v2029, %v2025
    %v2234 = vpack.c.b16 %v2034, %v2030
    %v2235 = vpack.c.b16 %v2035, %v2031
    %v2236 = vpack.c.b16 %v2036, %v2032
    %v2237 = vpack.c.b16 %v2037, %v2033
    %v2238 = vpack.c.b16 %v2042, %v2038
    %v2239 = vpack.c.b16 %v2043, %v2039
    %v2240 = vpack.c.b16 %v2044, %v2040
    %v2241 = vpack.c.b16 %v2045, %v2041
    %v2242 = vpack.c.b16 %v2050, %v2046
    %v2243 = vpack.c.b16 %v2051, %v2047
    %v2244 = vpack.c.b16 %v2052, %v2048
    %v2245 = vpack.c.b16 %v2053, %v2049
    %v2246 = vpack.c.b16 %v2058, %v2054
    %v2247 = vpack.c.b16 %v2059, %v2055
    %v2248 = vpack.c.b16 %v2060, %v2056
    %v2249 = vpack.c.b16 %v2061, %v2057
    %v2250 = vpack.c.b16 %v2066, %v2062
    %v2251 = vpack.c.b16 %v2067, %v2063
    %v2252 = vpack.c.b16 %v2068, %v2064
    %v2253 = vpack.c.b16 %v2069, %v2065
    %v2254 = vpack.c.b16 %v2074, %v2070
    %v2255 = vpack.c.b16 %v2075, %v2071
    %v2256 = vpack.c.b16 %v2076, %v2072
    %v2257 = vpack.c.b16 %v2077, %v2073
    %v2258 = vpack.c.b16 %v2082, %v2078
    %v2259 = vpack.c.b16 %v2083, %v2079
    %v2260 = vpack.c.b16 %v2084, %v2080
    %v2261 = vpack.c.b16 %v2085, %v2081
    %v2262 = vpack.c.b16 %v2090, %v2086
    %v2263 = vpack.c.b16 %v2091, %v2087
    %v2264 = vpack.c.b16 %v2092, %v2088
    %v2265 = vpack.c.b16 %v2093, %v2089
    %v2266 = vpack.c.b16 %v2098, %v2094
    %v2267 = vpack.c.b16 %v2099, %v2095
    %v2268 = vpack.c.b16 %v2100, %v2096
    %v2269 = vpack.c.b16 %v2101, %v2097
    %v2270 = vpack.c.b16 %v2106, %v2102
    %v2271 = vpack.c.b16 %v2107, %v2103
    %v2272 = vpack.c.b16 %v2108, %v2104
    %v2273 = vpack.c.b16 %v2109, %v2105
    %v2274 = vpack.c.b16 %v2114, %v2110
    %v2275 = vpack.c.b16 %v2115, %v2111
    %v2276 = vpack.c.b16 %v2116, %v2112
    %v2277 = vpack.c.b16 %v2117, %v2113
    %v2278 = vpack.c.b16 %v2122, %v2118
    %v2279 = vpack.c.b16 %v2123, %v2119
    %v2280 = vpack.c.b16 %v2124, %v2120
    %v2281 = vpack.c.b16 %v2125, %v2121
    %v2282 = vpack.c.b16 %v2130, %v2126
    %v2283 = vpack.c.b16 %v2131, %v2127
    %v2284 = vpack.c.b16 %v2132, %v2128
    %v2285 = vpack.c.b16 %v2133, %v2129
    %v2286 = vpack.c.b16 %v2138, %v2134
    %v2287 = vpack.c.b16 %v2139, %v2135
    %v2288 = vpack.c.b16 %v2140, %v2136
    %v2289 = vpack.c.b16 %v2141, %v2137
    %v2290 = vpack.c.b16 %v2146, %v2142
    %v2291 = vpack.c.b16 %v2147, %v2143
    %v2292 = vpack.c.b16 %v2148, %v2144
    %v2293 = vpack.c.b16 %v2149, %v2145
    %v2294 = vpack.c.b16 %v2154, %v2150
    %v2295 = vpack.c.b16 %v2155, %v2151
    %v2296 = vpack.c.b16 %v2156, %v2152
    %v2297 = vpack.c.b16 %v2157, %v2153
    %v2298 = vpack.c.b16 %v2162, %v2158
    %v2299 = vpack.c.b16 %v2163, %v2159
    %v2300 = vpack.c.b16 %v2164, %v2160
    %v2301 = vpack.c.b16 %v2165, %v2161
    %v2302 = vpack.c.b16 %v2170, %v2166
    %v2303 = vpack.c.b16 %v2171, %v2167
    %v2304 = vpack.c.b16 %v2172, %v2168
    %v2305 = vpack.c.b16 %v2173, %v2169
    %v2306 = vpack.c.b16 %v2178, %v2174
    %v2307 = vpack.c.b16 %v2179, %v2175
    %v2308 = vpack.c.b16 %v2180, %v2176
    %v2309 = vpack.c.b16 %v2181, %v2177
    %2438 = vmatprep.subr.bf16.mxu0 %v2183
    %2439 = vmatpush1.bf16.msra.mxu0 %v2182
    %2440 = vmatprep.subr.bf16.mxu0 %v2187
    %2441 = vmatpush1.bf16.msra.mxu0 %v2186
    %2442 = vmatprep.subr.bf16.mxu0 %v2191
    %2443 = vmatpush1.bf16.msra.mxu0 %v2190
    %2444 = vmatprep.subr.bf16.mxu0 %v2195
    %2445 = vmatpush1.bf16.msra.mxu0 %v2194
    %2446 = vmatprep.subr.bf16.mxu0 %v2199
    %2447 = vmatpush1.bf16.msra.mxu0 %v2198
    %2448 = vmatprep.subr.bf16.mxu0 %v2203
    %2449 = vmatpush1.bf16.msra.mxu0 %v2202
    %2450 = vmatprep.subr.bf16.mxu0 %v2207
    %2451 = vmatpush1.bf16.msra.mxu0 %v2206
    %2452 = vmatprep.subr.bf16.mxu0 %v2211
    %2453 = vmatpush1.bf16.msra.mxu0 %v2210
    %2454 = vmatprep.subr.bf16.mxu0 %v2215
    %2455 = vmatpush1.bf16.msra.mxu0 %v2214
    %2456 = vmatprep.subr.bf16.mxu0 %v2219
    %2457 = vmatpush1.bf16.msra.mxu0 %v2218
    %2458 = vmatprep.subr.bf16.mxu0 %v2223
    %2459 = vmatpush1.bf16.msra.mxu0 %v2222
    %2460 = vmatprep.subr.bf16.mxu0 %v2227
    %2461 = vmatpush1.bf16.msra.mxu0 %v2226
    %2462 = vmatprep.subr.bf16.mxu0 %v2231
    %2463 = vmatpush1.bf16.msra.mxu0 %v2230
    %2464 = vmatprep.subr.bf16.mxu0 %v2235
    %2465 = vmatpush1.bf16.msra.mxu0 %v2234
    %2466 = vmatprep.subr.bf16.mxu0 %v2239
    %2467 = vmatpush1.bf16.msra.mxu0 %v2238
    %2468 = vmatprep.subr.bf16.mxu0 %v2243
    %2469 = vmatpush1.bf16.msra.mxu0 %v2242
    %2470 = vmatprep.mubr.bf16.mxu0 %v1645
    %2471 = vmatmul.mubr.bf16.gmra.mrb[0].mxu0 %v1644
    %v2472 = vpop.f32.mrb[0].mxu0
    %v2473 = vadd.f32 %v1781, %v2472
    %v2474 = vpop.f32.mrb[0].mxu0
    %v2475 = vadd.f32 %v1785, %v2474
    %v2476 = vpop.f32.mrb[0].mxu0
    %v2477 = vpop.f32.mrb[0].mxu0
    %2478 = vdwg.mxu0
    %2479 = vmatprep.subr.bf16.mxu0 %v2247
    %2480 = vmatpush1.bf16.msra.mxu0 %v2246
    %2481 = vmatprep.subr.bf16.mxu0 %v2251
    %2482 = vmatpush1.bf16.msra.mxu0 %v2250
    %2483 = vmatprep.subr.bf16.mxu0 %v2255
    %2484 = vmatpush1.bf16.msra.mxu0 %v2254
    %2485 = vmatprep.subr.bf16.mxu0 %v2259
    %2486 = vmatpush1.bf16.msra.mxu0 %v2258
    %2487 = vmatprep.subr.bf16.mxu0 %v2263
    %2488 = vmatpush1.bf16.msra.mxu0 %v2262
    %2489 = vmatprep.subr.bf16.mxu0 %v2267
    %2490 = vmatpush1.bf16.msra.mxu0 %v2266
    %2491 = vmatprep.subr.bf16.mxu0 %v2271
    %2492 = vmatpush1.bf16.msra.mxu0 %v2270
    %2493 = vmatprep.subr.bf16.mxu0 %v2275
    %2494 = vmatpush1.bf16.msra.mxu0 %v2274
    %2495 = vmatprep.subr.bf16.mxu0 %v2279
    %2496 = vmatpush1.bf16.msra.mxu0 %v2278
    %2497 = vmatprep.subr.bf16.mxu0 %v2283
    %2498 = vmatpush1.bf16.msra.mxu0 %v2282
    %2499 = vmatprep.subr.bf16.mxu0 %v2287
    %2500 = vmatpush1.bf16.msra.mxu0 %v2286
    %2501 = vmatprep.subr.bf16.mxu0 %v2291
    %2502 = vmatpush1.bf16.msra.mxu0 %v2290
    %2503 = vmatprep.subr.bf16.mxu0 %v2295
    %2504 = vmatpush1.bf16.msra.mxu0 %v2294
    %2505 = vmatprep.subr.bf16.mxu0 %v2299
    %2506 = vmatpush1.bf16.msra.mxu0 %v2298
    %2507 = vmatprep.subr.bf16.mxu0 %v2303
    %2508 = vmatpush1.bf16.msra.mxu0 %v2302
    %2509 = vmatprep.subr.bf16.mxu0 %v2307
    %2510 = vmatpush1.bf16.msra.mxu0 %v2306
    %2511 = vmatprep.mubr.bf16.mxu0 %v1647
    %2512 = vmatmul.mubr.bf16.gmra.mrb[0].mxu0 %v1646
    %v2513 = vpop.f32.mrb[0].mxu0
    %v2514 = vadd.f32 %v2473, %v2513
    %v2515 = vpop.f32.mrb[0].mxu0
    %v2516 = vadd.f32 %v2475, %v2515
    %v2517 = vpop.f32.mrb[0].mxu0
    %v2518 = vpop.f32.mrb[0].mxu0
    %2519 = vdwg.mxu0
    %2520 = vmatprep.subr.bf16.mxu0 %v2185
    %2521 = vmatpush1.bf16.msra.mxu0 %v2184
    %2522 = vmatprep.subr.bf16.mxu0 %v2189
    %2523 = vmatpush1.bf16.msra.mxu0 %v2188
    %2524 = vmatprep.subr.bf16.mxu0 %v2193
    %2525 = vmatpush1.bf16.msra.mxu0 %v2192
    %2526 = vmatprep.subr.bf16.mxu0 %v2197
    %2527 = vmatpush1.bf16.msra.mxu0 %v2196
    %2528 = vmatprep.subr.bf16.mxu0 %v2201
    %2529 = vmatpush1.bf16.msra.mxu0 %v2200
    %2530 = vmatprep.subr.bf16.mxu0 %v2205
    %2531 = vmatpush1.bf16.msra.mxu0 %v2204
    %2532 = vmatprep.subr.bf16.mxu0 %v2209
    %2533 = vmatpush1.bf16.msra.mxu0 %v2208
    %2534 = vmatprep.subr.bf16.mxu0 %v2213
    %2535 = vmatpush1.bf16.msra.mxu0 %v2212
    %2536 = vmatprep.subr.bf16.mxu0 %v2217
    %2537 = vmatpush1.bf16.msra.mxu0 %v2216
    %2538 = vmatprep.subr.bf16.mxu0 %v2221
    %2539 = vmatpush1.bf16.msra.mxu0 %v2220
    %2540 = vmatprep.subr.bf16.mxu0 %v2225
    %2541 = vmatpush1.bf16.msra.mxu0 %v2224
    %2542 = vmatprep.subr.bf16.mxu0 %v2229
    %2543 = vmatpush1.bf16.msra.mxu0 %v2228
    %2544 = vmatprep.subr.bf16.mxu0 %v2233
    %2545 = vmatpush1.bf16.msra.mxu0 %v2232
    %2546 = vmatprep.subr.bf16.mxu0 %v2237
    %2547 = vmatpush1.bf16.msra.mxu0 %v2236
    %2548 = vmatprep.subr.bf16.mxu0 %v2241
    %2549 = vmatpush1.bf16.msra.mxu0 %v2240
    %2550 = vmatprep.subr.bf16.mxu0 %v2245
    %2551 = vmatpush1.bf16.msra.mxu0 %v2244
    %2552 = vmatprep.mubr.bf16.mxu0 %v1645
    %2553 = vmatmul.mubr.bf16.gmra.mrb[0].mxu0 %v1644
    %v2554 = vpop.f32.mrb[0].mxu0
    %v2555 = vadd.f32 %v1789, %v2554
    %v2556 = vpop.f32.mrb[0].mxu0
    %v2557 = vadd.f32 %v1793, %v2556
    %v2558 = vpop.f32.mrb[0].mxu0
    %v2559 = vpop.f32.mrb[0].mxu0
    %2560 = vdwg.mxu0
    %2561 = vmatprep.subr.bf16.mxu0 %v2249
    %2562 = vmatpush1.bf16.msra.mxu0 %v2248
    %2563 = vmatprep.subr.bf16.mxu0 %v2253
    %2564 = vmatpush1.bf16.msra.mxu0 %v2252
    %2565 = vmatprep.subr.bf16.mxu0 %v2257
    %2566 = vmatpush1.bf16.msra.mxu0 %v2256
    %2567 = vmatprep.subr.bf16.mxu0 %v2261
    %2568 = vmatpush1.bf16.msra.mxu0 %v2260
    %2569 = vmatprep.subr.bf16.mxu0 %v2265
    %2570 = vmatpush1.bf16.msra.mxu0 %v2264
    %2571 = vmatprep.subr.bf16.mxu0 %v2269
    %2572 = vmatpush1.bf16.msra.mxu0 %v2268
    %2573 = vmatprep.subr.bf16.mxu0 %v2273
    %2574 = vmatpush1.bf16.msra.mxu0 %v2272
    %2575 = vmatprep.subr.bf16.mxu0 %v2277
    %2576 = vmatpush1.bf16.msra.mxu0 %v2276
    %2577 = vmatprep.subr.bf16.mxu0 %v2281
    %2578 = vmatpush1.bf16.msra.mxu0 %v2280
    %2579 = vmatprep.subr.bf16.mxu0 %v2285
    %2580 = vmatpush1.bf16.msra.mxu0 %v2284
    %2581 = vmatprep.subr.bf16.mxu0 %v2289
    %2582 = vmatpush1.bf16.msra.mxu0 %v2288
    %2583 = vmatprep.subr.bf16.mxu0 %v2293
    %2584 = vmatpush1.bf16.msra.mxu0 %v2292
    %2585 = vmatprep.subr.bf16.mxu0 %v2297
    %2586 = vmatpush1.bf16.msra.mxu0 %v2296
    %2587 = vmatprep.subr.bf16.mxu0 %v2301
    %2588 = vmatpush1.bf16.msra.mxu0 %v2300
    %2589 = vmatprep.subr.bf16.mxu0 %v2305
    %2590 = vmatpush1.bf16.msra.mxu0 %v2304
    %2591 = vmatprep.subr.bf16.mxu0 %v2309
    %2592 = vmatpush1.bf16.msra.mxu0 %v2308
    %2593 = vmatprep.mubr.bf16.mxu0 %v1647
    %2594 = vmatmul.mubr.bf16.gmra.mrb[0].mxu0 %v1646
    %v2595 = vpop.f32.mrb[0].mxu0
    %v2596 = vadd.f32 %v2555, %v2595
    %v2597 = vpop.f32.mrb[0].mxu0
    %v2598 = vadd.f32 %v2557, %v2597
    %v2599 = vpop.f32.mrb[0].mxu0
    %v2600 = vpop.f32.mrb[0].mxu0
    %2601 = vdwg.mxu0
    %v2602 = vpack.c.bf16 %v2514, %v2514
    %v2603 = vpack.c.bf16 %v2516, %v2516
    %v2604 = vpack.c.bf16 %v2596, %v2596
    %v2605 = vpack.c.bf16 %v2598, %v2598
    %v2606 = vld [vmem:[#allocation8] sm:$0xff]
    %v2607 = vld [vmem:[#allocation8 + $0x8] sm:$0xff]
    %v2608 = vld [vmem:[#allocation8 + $0x10] sm:$0xff]
    %v2609 = vld [vmem:[#allocation8 + $0x18] sm:$0xff]
    %v2610 = vld [vmem:[#allocation8 + $0x20] sm:$0xff]
    %v2611 = vld [vmem:[#allocation8 + $0x28] sm:$0xff]
    %v2612 = vld [vmem:[#allocation8 + $0x30] sm:$0xff]
    %v2613 = vld [vmem:[#allocation8 + $0x38] sm:$0xff]
    %v2614 = vld [vmem:[#allocation8 + $0x40] sm:$0xff]
    %v2615 = vld [vmem:[#allocation8 + $0x48] sm:$0xff]
    %v2616 = vld [vmem:[#allocation8 + $0x50] sm:$0xff]
    %v2617 = vld [vmem:[#allocation8 + $0x58] sm:$0xff]
    %v2618 = vld [vmem:[#allocation8 + $0x60] sm:$0xff]
    %v2619 = vld [vmem:[#allocation8 + $0x68] sm:$0xff]
    %v2620 = vld [vmem:[#allocation8 + $0x70] sm:$0xff]
    %v2621 = vld [vmem:[#allocation8 + $0x78] sm:$0xff]
    %v2622 = vld [vmem:[#allocation8 + $0x80] sm:$0xff]
    %v2623 = vld [vmem:[#allocation8 + $0x88] sm:$0xff]
    %v2624 = vld [vmem:[#allocation8 + $0x90] sm:$0xff]
    %v2625 = vld [vmem:[#allocation8 + $0x98] sm:$0xff]
    %v2626 = vld [vmem:[#allocation8 + $0xa0] sm:$0xff]
    %v2627 = vld [vmem:[#allocation8 + $0xa8] sm:$0xff]
    %v2628 = vld [vmem:[#allocation8 + $0xb0] sm:$0xff]
    %v2629 = vld [vmem:[#allocation8 + $0xb8] sm:$0xff]
    %v2630 = vld [vmem:[#allocation8 + $0xc0] sm:$0xff]
    %v2631 = vld [vmem:[#allocation8 + $0xc8] sm:$0xff]
    %v2632 = vld [vmem:[#allocation8 + $0xd0] sm:$0xff]
    %v2633 = vld [vmem:[#allocation8 + $0xd8] sm:$0xff]
    %v2634 = vld [vmem:[#allocation8 + $0xe0] sm:$0xff]
    %v2635 = vld [vmem:[#allocation8 + $0xe8] sm:$0xff]
    %v2636 = vld [vmem:[#allocation8 + $0xf0] sm:$0xff]
    %v2637 = vld [vmem:[#allocation8 + $0xf8] sm:$0xff]
    %v2638 = vld [vmem:[#allocation8 + $0x100] sm:$0xff]
    %v2639 = vld [vmem:[#allocation8 + $0x108] sm:$0xff]
    %v2640 = vld [vmem:[#allocation8 + $0x110] sm:$0xff]
    %v2641 = vld [vmem:[#allocation8 + $0x118] sm:$0xff]
    %v2642 = vld [vmem:[#allocation8 + $0x120] sm:$0xff]
    %v2643 = vld [vmem:[#allocation8 + $0x128] sm:$0xff]
    %v2644 = vld [vmem:[#allocation8 + $0x130] sm:$0xff]
    %v2645 = vld [vmem:[#allocation8 + $0x138] sm:$0xff]
    %v2646 = vld [vmem:[#allocation8 + $0x140] sm:$0xff]
    %v2647 = vld [vmem:[#allocation8 + $0x148] sm:$0xff]
    %v2648 = vld [vmem:[#allocation8 + $0x150] sm:$0xff]
    %v2649 = vld [vmem:[#allocation8 + $0x158] sm:$0xff]
    %v2650 = vld [vmem:[#allocation8 + $0x160] sm:$0xff]
    %v2651 = vld [vmem:[#allocation8 + $0x168] sm:$0xff]
    %v2652 = vld [vmem:[#allocation8 + $0x170] sm:$0xff]
    %v2653 = vld [vmem:[#allocation8 + $0x178] sm:$0xff]
    %v2654 = vld [vmem:[#allocation8 + $0x180] sm:$0xff]
    %v2655 = vld [vmem:[#allocation8 + $0x188] sm:$0xff]
    %v2656 = vld [vmem:[#allocation8 + $0x190] sm:$0xff]
    %v2657 = vld [vmem:[#allocation8 + $0x198] sm:$0xff]
    %v2658 = vld [vmem:[#allocation8 + $0x1a0] sm:$0xff]
    %v2659 = vld [vmem:[#allocation8 + $0x1a8] sm:$0xff]
    %v2660 = vld [vmem:[#allocation8 + $0x1b0] sm:$0xff]
    %v2661 = vld [vmem:[#allocation8 + $0x1b8] sm:$0xff]
    %v2662 = vld [vmem:[#allocation8 + $0x1c0] sm:$0xff]
    %v2663 = vld [vmem:[#allocation8 + $0x1c8] sm:$0xff]
    %v2664 = vld [vmem:[#allocation8 + $0x1d0] sm:$0xff]
    %v2665 = vld [vmem:[#allocation8 + $0x1d8] sm:$0xff]
    %v2666 = vld [vmem:[#allocation8 + $0x1e0] sm:$0xff]
    %v2667 = vld [vmem:[#allocation8 + $0x1e8] sm:$0xff]
    %v2668 = vld [vmem:[#allocation8 + $0x1f0] sm:$0xff]
    %v2669 = vld [vmem:[#allocation8 + $0x1f8] sm:$0xff]
    %v2670 = vld [vmem:[#allocation8 + $0x200] sm:$0xff]
    %v2671 = vld [vmem:[#allocation8 + $0x208] sm:$0xff]
    %v2672 = vld [vmem:[#allocation8 + $0x210] sm:$0xff]
    %v2673 = vld [vmem:[#allocation8 + $0x218] sm:$0xff]
    %v2674 = vld [vmem:[#allocation8 + $0x220] sm:$0xff]
    %v2675 = vld [vmem:[#allocation8 + $0x228] sm:$0xff]
    %v2676 = vld [vmem:[#allocation8 + $0x230] sm:$0xff]
    %v2677 = vld [vmem:[#allocation8 + $0x238] sm:$0xff]
    %v2678 = vld [vmem:[#allocation8 + $0x240] sm:$0xff]
    %v2679 = vld [vmem:[#allocation8 + $0x248] sm:$0xff]
    %v2680 = vld [vmem:[#allocation8 + $0x250] sm:$0xff]
    %v2681 = vld [vmem:[#allocation8 + $0x258] sm:$0xff]
    %v2682 = vld [vmem:[#allocation8 + $0x260] sm:$0xff]
    %v2683 = vld [vmem:[#allocation8 + $0x268] sm:$0xff]
    %v2684 = vld [vmem:[#allocation8 + $0x270] sm:$0xff]
    %v2685 = vld [vmem:[#allocation8 + $0x278] sm:$0xff]
    %v2686 = vld [vmem:[#allocation8 + $0x280] sm:$0xff]
    %v2687 = vld [vmem:[#allocation8 + $0x288] sm:$0xff]
    %v2688 = vld [vmem:[#allocation8 + $0x290] sm:$0xff]
    %v2689 = vld [vmem:[#allocation8 + $0x298] sm:$0xff]
    %v2690 = vld [vmem:[#allocation8 + $0x2a0] sm:$0xff]
    %v2691 = vld [vmem:[#allocation8 + $0x2a8] sm:$0xff]
    %v2692 = vld [vmem:[#allocation8 + $0x2b0] sm:$0xff]
    %v2693 = vld [vmem:[#allocation8 + $0x2b8] sm:$0xff]
    %v2694 = vld [vmem:[#allocation8 + $0x2c0] sm:$0xff]
    %v2695 = vld [vmem:[#allocation8 + $0x2c8] sm:$0xff]
    %v2696 = vld [vmem:[#allocation8 + $0x2d0] sm:$0xff]
    %v2697 = vld [vmem:[#allocation8 + $0x2d8] sm:$0xff]
    %v2698 = vld [vmem:[#allocation8 + $0x2e0] sm:$0xff]
    %v2699 = vld [vmem:[#allocation8 + $0x2e8] sm:$0xff]
    %v2700 = vld [vmem:[#allocation8 + $0x2f0] sm:$0xff]
    %v2701 = vld [vmem:[#allocation8 + $0x2f8] sm:$0xff]
    %v2702 = vld [vmem:[#allocation8 + $0x300] sm:$0xff]
    %v2703 = vld [vmem:[#allocation8 + $0x308] sm:$0xff]
    %v2704 = vld [vmem:[#allocation8 + $0x310] sm:$0xff]
    %v2705 = vld [vmem:[#allocation8 + $0x318] sm:$0xff]
    %v2706 = vld [vmem:[#allocation8 + $0x320] sm:$0xff]
    %v2707 = vld [vmem:[#allocation8 + $0x328] sm:$0xff]
    %v2708 = vld [vmem:[#allocation8 + $0x330] sm:$0xff]
    %v2709 = vld [vmem:[#allocation8 + $0x338] sm:$0xff]
    %v2710 = vld [vmem:[#allocation8 + $0x340] sm:$0xff]
    %v2711 = vld [vmem:[#allocation8 + $0x348] sm:$0xff]
    %v2712 = vld [vmem:[#allocation8 + $0x350] sm:$0xff]
    %v2713 = vld [vmem:[#allocation8 + $0x358] sm:$0xff]
    %v2714 = vld [vmem:[#allocation8 + $0x360] sm:$0xff]
    %v2715 = vld [vmem:[#allocation8 + $0x368] sm:$0xff]
    %v2716 = vld [vmem:[#allocation8 + $0x370] sm:$0xff]
    %v2717 = vld [vmem:[#allocation8 + $0x378] sm:$0xff]
    %v2718 = vld [vmem:[#allocation8 + $0x380] sm:$0xff]
    %v2719 = vld [vmem:[#allocation8 + $0x388] sm:$0xff]
    %v2720 = vld [vmem:[#allocation8 + $0x390] sm:$0xff]
    %v2721 = vld [vmem:[#allocation8 + $0x398] sm:$0xff]
    %v2722 = vld [vmem:[#allocation8 + $0x3a0] sm:$0xff]
    %v2723 = vld [vmem:[#allocation8 + $0x3a8] sm:$0xff]
    %v2724 = vld [vmem:[#allocation8 + $0x3b0] sm:$0xff]
    %v2725 = vld [vmem:[#allocation8 + $0x3b8] sm:$0xff]
    %v2726 = vld [vmem:[#allocation8 + $0x3c0] sm:$0xff]
    %v2727 = vld [vmem:[#allocation8 + $0x3c8] sm:$0xff]
    %v2728 = vld [vmem:[#allocation8 + $0x3d0] sm:$0xff]
    %v2729 = vld [vmem:[#allocation8 + $0x3d8] sm:$0xff]
    %v2730 = vld [vmem:[#allocation8 + $0x3e0] sm:$0xff]
    %v2731 = vld [vmem:[#allocation8 + $0x3e8] sm:$0xff]
    %v2732 = vld [vmem:[#allocation8 + $0x3f0] sm:$0xff]
    %v2733 = vld [vmem:[#allocation8 + $0x3f8] sm:$0xff]
    %v2734 = vld [vmem:[%s6] sm:$0xf]
    %v2736 = vlaneseq
    %v2737 = vshrl.u32 %v2736, 7
    %v2738 = vsub.s32 0, %v2737
    %v2739 = vrot.slane %v2734, %v2738
    %v2740 = vlaneseq
    %v2741 = vshrl.u32 %v2740, 7
    %v2742 = vsub.s32 1, %v2741
    %v2743 = vrot.slane %v2734, %v2742
    %v2744 = vlaneseq
    %v2745 = vshrl.u32 %v2744, 7
    %v2746 = vsub.s32 2, %v2745
    %v2747 = vrot.slane %v2734, %v2746
    %v2748 = vlaneseq
    %v2749 = vshrl.u32 %v2748, 7
    %v2750 = vsub.s32 3, %v2749
    %v2751 = vrot.slane %v2734, %v2750
    %v2884 = vunpack.c.l.b16 %v2606
    %v2885 = vunpack.c.h.b16 %v2606
    %v2886 = vunpack.c.l.b16 %v2607
    %v2887 = vunpack.c.h.b16 %v2607
    %v2888 = vunpack.c.l.b16 %v2608
    %v2889 = vunpack.c.h.b16 %v2608
    %v2890 = vunpack.c.l.b16 %v2609
    %v2891 = vunpack.c.h.b16 %v2609
    %v2892 = vunpack.c.l.b16 %v2610
    %v2893 = vunpack.c.h.b16 %v2610
    %v2894 = vunpack.c.l.b16 %v2611
    %v2895 = vunpack.c.h.b16 %v2611
    %v2896 = vunpack.c.l.b16 %v2612
    %v2897 = vunpack.c.h.b16 %v2612
    %v2898 = vunpack.c.l.b16 %v2613
    %v2899 = vunpack.c.h.b16 %v2613
    %v2900 = vunpack.c.l.b16 %v2614
    %v2901 = vunpack.c.h.b16 %v2614
    %v2902 = vunpack.c.l.b16 %v2615
    %v2903 = vunpack.c.h.b16 %v2615
    %v2904 = vunpack.c.l.b16 %v2616
    %v2905 = vunpack.c.h.b16 %v2616
    %v2906 = vunpack.c.l.b16 %v2617
    %v2907 = vunpack.c.h.b16 %v2617
    %v2908 = vunpack.c.l.b16 %v2618
    %v2909 = vunpack.c.h.b16 %v2618
    %v2910 = vunpack.c.l.b16 %v2619
    %v2911 = vunpack.c.h.b16 %v2619
    %v2912 = vunpack.c.l.b16 %v2620
    %v2913 = vunpack.c.h.b16 %v2620
    %v2914 = vunpack.c.l.b16 %v2621
    %v2915 = vunpack.c.h.b16 %v2621
    %v2916 = vunpack.c.l.b16 %v2622
    %v2917 = vunpack.c.h.b16 %v2622
    %v2918 = vunpack.c.l.b16 %v2623
    %v2919 = vunpack.c.h.b16 %v2623
    %v2920 = vunpack.c.l.b16 %v2624
    %v2921 = vunpack.c.h.b16 %v2624
    %v2922 = vunpack.c.l.b16 %v2625
    %v2923 = vunpack.c.h.b16 %v2625
    %v2924 = vunpack.c.l.b16 %v2626
    %v2925 = vunpack.c.h.b16 %v2626
    %v2926 = vunpack.c.l.b16 %v2627
    %v2927 = vunpack.c.h.b16 %v2627
    %v2928 = vunpack.c.l.b16 %v2628
    %v2929 = vunpack.c.h.b16 %v2628
    %v2930 = vunpack.c.l.b16 %v2629
    %v2931 = vunpack.c.h.b16 %v2629
    %v2932 = vunpack.c.l.b16 %v2630
    %v2933 = vunpack.c.h.b16 %v2630
    %v2934 = vunpack.c.l.b16 %v2631
    %v2935 = vunpack.c.h.b16 %v2631
    %v2936 = vunpack.c.l.b16 %v2632
    %v2937 = vunpack.c.h.b16 %v2632
    %v2938 = vunpack.c.l.b16 %v2633
    %v2939 = vunpack.c.h.b16 %v2633
    %v2940 = vunpack.c.l.b16 %v2634
    %v2941 = vunpack.c.h.b16 %v2634
    %v2942 = vunpack.c.l.b16 %v2635
    %v2943 = vunpack.c.h.b16 %v2635
    %v2944 = vunpack.c.l.b16 %v2636
    %v2945 = vunpack.c.h.b16 %v2636
    %v2946 = vunpack.c.l.b16 %v2637
    %v2947 = vunpack.c.h.b16 %v2637
    %v2948 = vunpack.c.l.b16 %v2638
    %v2949 = vunpack.c.h.b16 %v2638
    %v2950 = vunpack.c.l.b16 %v2639
    %v2951 = vunpack.c.h.b16 %v2639
    %v2952 = vunpack.c.l.b16 %v2640
    %v2953 = vunpack.c.h.b16 %v2640
    %v2954 = vunpack.c.l.b16 %v2641
    %v2955 = vunpack.c.h.b16 %v2641
    %v2956 = vunpack.c.l.b16 %v2642
    %v2957 = vunpack.c.h.b16 %v2642
    %v2958 = vunpack.c.l.b16 %v2643
    %v2959 = vunpack.c.h.b16 %v2643
    %v2960 = vunpack.c.l.b16 %v2644
    %v2961 = vunpack.c.h.b16 %v2644
    %v2962 = vunpack.c.l.b16 %v2645
    %v2963 = vunpack.c.h.b16 %v2645
    %v2964 = vunpack.c.l.b16 %v2646
    %v2965 = vunpack.c.h.b16 %v2646
    %v2966 = vunpack.c.l.b16 %v2647
    %v2967 = vunpack.c.h.b16 %v2647
    %v2968 = vunpack.c.l.b16 %v2648
    %v2969 = vunpack.c.h.b16 %v2648
    %v2970 = vunpack.c.l.b16 %v2649
    %v2971 = vunpack.c.h.b16 %v2649
    %v2972 = vunpack.c.l.b16 %v2650
    %v2973 = vunpack.c.h.b16 %v2650
    %v2974 = vunpack.c.l.b16 %v2651
    %v2975 = vunpack.c.h.b16 %v2651
    %v2976 = vunpack.c.l.b16 %v2652
    %v2977 = vunpack.c.h.b16 %v2652
    %v2978 = vunpack.c.l.b16 %v2653
    %v2979 = vunpack.c.h.b16 %v2653
    %v2980 = vunpack.c.l.b16 %v2654
    %v2981 = vunpack.c.h.b16 %v2654
    %v2982 = vunpack.c.l.b16 %v2655
    %v2983 = vunpack.c.h.b16 %v2655
    %v2984 = vunpack.c.l.b16 %v2656
    %v2985 = vunpack.c.h.b16 %v2656
    %v2986 = vunpack.c.l.b16 %v2657
    %v2987 = vunpack.c.h.b16 %v2657
    %v2988 = vunpack.c.l.b16 %v2658
    %v2989 = vunpack.c.h.b16 %v2658
    %v2990 = vunpack.c.l.b16 %v2659
    %v2991 = vunpack.c.h.b16 %v2659
    %v2992 = vunpack.c.l.b16 %v2660
    %v2993 = vunpack.c.h.b16 %v2660
    %v2994 = vunpack.c.l.b16 %v2661
    %v2995 = vunpack.c.h.b16 %v2661
    %v2996 = vunpack.c.l.b16 %v2662
    %v2997 = vunpack.c.h.b16 %v2662
    %v2998 = vunpack.c.l.b16 %v2663
    %v2999 = vunpack.c.h.b16 %v2663
    %v3000 = vunpack.c.l.b16 %v2664
    %v3001 = vunpack.c.h.b16 %v2664
    %v3002 = vunpack.c.l.b16 %v2665
    %v3003 = vunpack.c.h.b16 %v2665
    %v3004 = vunpack.c.l.b16 %v2666
    %v3005 = vunpack.c.h.b16 %v2666
    %v3006 = vunpack.c.l.b16 %v2667
    %v3007 = vunpack.c.h.b16 %v2667
    %v3008 = vunpack.c.l.b16 %v2668
    %v3009 = vunpack.c.h.b16 %v2668
    %v3010 = vunpack.c.l.b16 %v2669
    %v3011 = vunpack.c.h.b16 %v2669
    %v3012 = vunpack.c.l.b16 %v2670
    %v3013 = vunpack.c.h.b16 %v2670
    %v3014 = vunpack.c.l.b16 %v2671
    %v3015 = vunpack.c.h.b16 %v2671
    %v3016 = vunpack.c.l.b16 %v2672
    %v3017 = vunpack.c.h.b16 %v2672
    %v3018 = vunpack.c.l.b16 %v2673
    %v3019 = vunpack.c.h.b16 %v2673
    %v3020 = vunpack.c.l.b16 %v2674
    %v3021 = vunpack.c.h.b16 %v2674
    %v3022 = vunpack.c.l.b16 %v2675
    %v3023 = vunpack.c.h.b16 %v2675
    %v3024 = vunpack.c.l.b16 %v2676
    %v3025 = vunpack.c.h.b16 %v2676
    %v3026 = vunpack.c.l.b16 %v2677
    %v3027 = vunpack.c.h.b16 %v2677
    %v3028 = vunpack.c.l.b16 %v2678
    %v3029 = vunpack.c.h.b16 %v2678
    %v3030 = vunpack.c.l.b16 %v2679
    %v3031 = vunpack.c.h.b16 %v2679
    %v3032 = vunpack.c.l.b16 %v2680
    %v3033 = vunpack.c.h.b16 %v2680
    %v3034 = vunpack.c.l.b16 %v2681
    %v3035 = vunpack.c.h.b16 %v2681
    %v3036 = vunpack.c.l.b16 %v2682
    %v3037 = vunpack.c.h.b16 %v2682
    %v3038 = vunpack.c.l.b16 %v2683
    %v3039 = vunpack.c.h.b16 %v2683
    %v3040 = vunpack.c.l.b16 %v2684
    %v3041 = vunpack.c.h.b16 %v2684
    %v3042 = vunpack.c.l.b16 %v2685
    %v3043 = vunpack.c.h.b16 %v2685
    %v3044 = vunpack.c.l.b16 %v2686
    %v3045 = vunpack.c.h.b16 %v2686
    %v3046 = vunpack.c.l.b16 %v2687
    %v3047 = vunpack.c.h.b16 %v2687
    %v3048 = vunpack.c.l.b16 %v2688
    %v3049 = vunpack.c.h.b16 %v2688
    %v3050 = vunpack.c.l.b16 %v2689
    %v3051 = vunpack.c.h.b16 %v2689
    %v3052 = vunpack.c.l.b16 %v2690
    %v3053 = vunpack.c.h.b16 %v2690
    %v3054 = vunpack.c.l.b16 %v2691
    %v3055 = vunpack.c.h.b16 %v2691
    %v3056 = vunpack.c.l.b16 %v2692
    %v3057 = vunpack.c.h.b16 %v2692
    %v3058 = vunpack.c.l.b16 %v2693
    %v3059 = vunpack.c.h.b16 %v2693
    %v3060 = vunpack.c.l.b16 %v2694
    %v3061 = vunpack.c.h.b16 %v2694
    %v3062 = vunpack.c.l.b16 %v2695
    %v3063 = vunpack.c.h.b16 %v2695
    %v3064 = vunpack.c.l.b16 %v2696
    %v3065 = vunpack.c.h.b16 %v2696
    %v3066 = vunpack.c.l.b16 %v2697
    %v3067 = vunpack.c.h.b16 %v2697
    %v3068 = vunpack.c.l.b16 %v2698
    %v3069 = vunpack.c.h.b16 %v2698
    %v3070 = vunpack.c.l.b16 %v2699
    %v3071 = vunpack.c.h.b16 %v2699
    %v3072 = vunpack.c.l.b16 %v2700
    %v3073 = vunpack.c.h.b16 %v2700
    %v3074 = vunpack.c.l.b16 %v2701
    %v3075 = vunpack.c.h.b16 %v2701
    %v3076 = vunpack.c.l.b16 %v2702
    %v3077 = vunpack.c.h.b16 %v2702
    %v3078 = vunpack.c.l.b16 %v2703
    %v3079 = vunpack.c.h.b16 %v2703
    %v3080 = vunpack.c.l.b16 %v2704
    %v3081 = vunpack.c.h.b16 %v2704
    %v3082 = vunpack.c.l.b16 %v2705
    %v3083 = vunpack.c.h.b16 %v2705
    %v3084 = vunpack.c.l.b16 %v2706
    %v3085 = vunpack.c.h.b16 %v2706
    %v3086 = vunpack.c.l.b16 %v2707
    %v3087 = vunpack.c.h.b16 %v2707
    %v3088 = vunpack.c.l.b16 %v2708
    %v3089 = vunpack.c.h.b16 %v2708
    %v3090 = vunpack.c.l.b16 %v2709
    %v3091 = vunpack.c.h.b16 %v2709
    %v3092 = vunpack.c.l.b16 %v2710
    %v3093 = vunpack.c.h.b16 %v2710
    %v3094 = vunpack.c.l.b16 %v2711
    %v3095 = vunpack.c.h.b16 %v2711
    %v3096 = vunpack.c.l.b16 %v2712
    %v3097 = vunpack.c.h.b16 %v2712
    %v3098 = vunpack.c.l.b16 %v2713
    %v3099 = vunpack.c.h.b16 %v2713
    %v3100 = vunpack.c.l.b16 %v2714
    %v3101 = vunpack.c.h.b16 %v2714
    %v3102 = vunpack.c.l.b16 %v2715
    %v3103 = vunpack.c.h.b16 %v2715
    %v3104 = vunpack.c.l.b16 %v2716
    %v3105 = vunpack.c.h.b16 %v2716
    %v3106 = vunpack.c.l.b16 %v2717
    %v3107 = vunpack.c.h.b16 %v2717
    %v3108 = vunpack.c.l.b16 %v2718
    %v3109 = vunpack.c.h.b16 %v2718
    %v3110 = vunpack.c.l.b16 %v2719
    %v3111 = vunpack.c.h.b16 %v2719
    %v3112 = vunpack.c.l.b16 %v2720
    %v3113 = vunpack.c.h.b16 %v2720
    %v3114 = vunpack.c.l.b16 %v2721
    %v3115 = vunpack.c.h.b16 %v2721
    %v3116 = vunpack.c.l.b16 %v2722
    %v3117 = vunpack.c.h.b16 %v2722
    %v3118 = vunpack.c.l.b16 %v2723
    %v3119 = vunpack.c.h.b16 %v2723
    %v3120 = vunpack.c.l.b16 %v2724
    %v3121 = vunpack.c.h.b16 %v2724
    %v3122 = vunpack.c.l.b16 %v2725
    %v3123 = vunpack.c.h.b16 %v2725
    %v3124 = vunpack.c.l.b16 %v2726
    %v3125 = vunpack.c.h.b16 %v2726
    %v3126 = vunpack.c.l.b16 %v2727
    %v3127 = vunpack.c.h.b16 %v2727
    %v3128 = vunpack.c.l.b16 %v2728
    %v3129 = vunpack.c.h.b16 %v2728
    %v3130 = vunpack.c.l.b16 %v2729
    %v3131 = vunpack.c.h.b16 %v2729
    %v3132 = vunpack.c.l.b16 %v2730
    %v3133 = vunpack.c.h.b16 %v2730
    %v3134 = vunpack.c.l.b16 %v2731
    %v3135 = vunpack.c.h.b16 %v2731
    %v3136 = vunpack.c.l.b16 %v2732
    %v3137 = vunpack.c.h.b16 %v2732
    %v3138 = vunpack.c.l.b16 %v2733
    %v3139 = vunpack.c.h.b16 %v2733
    %v3140 = vpack.c.b16 %v2888, %v2884
    %v3141 = vpack.c.b16 %v2889, %v2885
    %v3142 = vpack.c.b16 %v2890, %v2886
    %v3143 = vpack.c.b16 %v2891, %v2887
    %v3144 = vpack.c.b16 %v2896, %v2892
    %v3145 = vpack.c.b16 %v2897, %v2893
    %v3146 = vpack.c.b16 %v2898, %v2894
    %v3147 = vpack.c.b16 %v2899, %v2895
    %v3148 = vpack.c.b16 %v2904, %v2900
    %v3149 = vpack.c.b16 %v2905, %v2901
    %v3150 = vpack.c.b16 %v2906, %v2902
    %v3151 = vpack.c.b16 %v2907, %v2903
    %v3152 = vpack.c.b16 %v2912, %v2908
    %v3153 = vpack.c.b16 %v2913, %v2909
    %v3154 = vpack.c.b16 %v2914, %v2910
    %v3155 = vpack.c.b16 %v2915, %v2911
    %v3156 = vpack.c.b16 %v2920, %v2916
    %v3157 = vpack.c.b16 %v2921, %v2917
    %v3158 = vpack.c.b16 %v2922, %v2918
    %v3159 = vpack.c.b16 %v2923, %v2919
    %v3160 = vpack.c.b16 %v2928, %v2924
    %v3161 = vpack.c.b16 %v2929, %v2925
    %v3162 = vpack.c.b16 %v2930, %v2926
    %v3163 = vpack.c.b16 %v2931, %v2927
    %v3164 = vpack.c.b16 %v2936, %v2932
    %v3165 = vpack.c.b16 %v2937, %v2933
    %v3166 = vpack.c.b16 %v2938, %v2934
    %v3167 = vpack.c.b16 %v2939, %v2935
    %v3168 = vpack.c.b16 %v2944, %v2940
    %v3169 = vpack.c.b16 %v2945, %v2941
    %v3170 = vpack.c.b16 %v2946, %v2942
    %v3171 = vpack.c.b16 %v2947, %v2943
    %v3172 = vpack.c.b16 %v2952, %v2948
    %v3173 = vpack.c.b16 %v2953, %v2949
    %v3174 = vpack.c.b16 %v2954, %v2950
    %v3175 = vpack.c.b16 %v2955, %v2951
    %v3176 = vpack.c.b16 %v2960, %v2956
    %v3177 = vpack.c.b16 %v2961, %v2957
    %v3178 = vpack.c.b16 %v2962, %v2958
    %v3179 = vpack.c.b16 %v2963, %v2959
    %v3180 = vpack.c.b16 %v2968, %v2964
    %v3181 = vpack.c.b16 %v2969, %v2965
    %v3182 = vpack.c.b16 %v2970, %v2966
    %v3183 = vpack.c.b16 %v2971, %v2967
    %v3184 = vpack.c.b16 %v2976, %v2972
    %v3185 = vpack.c.b16 %v2977, %v2973
    %v3186 = vpack.c.b16 %v2978, %v2974
    %v3187 = vpack.c.b16 %v2979, %v2975
    %v3188 = vpack.c.b16 %v2984, %v2980
    %v3189 = vpack.c.b16 %v2985, %v2981
    %v3190 = vpack.c.b16 %v2986, %v2982
    %v3191 = vpack.c.b16 %v2987, %v2983
    %v3192 = vpack.c.b16 %v2992, %v2988
    %v3193 = vpack.c.b16 %v2993, %v2989
    %v3194 = vpack.c.b16 %v2994, %v2990
    %v3195 = vpack.c.b16 %v2995, %v2991
    %v3196 = vpack.c.b16 %v3000, %v2996
    %v3197 = vpack.c.b16 %v3001, %v2997
    %v3198 = vpack.c.b16 %v3002, %v2998
    %v3199 = vpack.c.b16 %v3003, %v2999
    %v3200 = vpack.c.b16 %v3008, %v3004
    %v3201 = vpack.c.b16 %v3009, %v3005
    %v3202 = vpack.c.b16 %v3010, %v3006
    %v3203 = vpack.c.b16 %v3011, %v3007
    %v3204 = vpack.c.b16 %v3016, %v3012
    %v3205 = vpack.c.b16 %v3017, %v3013
    %v3206 = vpack.c.b16 %v3018, %v3014
    %v3207 = vpack.c.b16 %v3019, %v3015
    %v3208 = vpack.c.b16 %v3024, %v3020
    %v3209 = vpack.c.b16 %v3025, %v3021
    %v3210 = vpack.c.b16 %v3026, %v3022
    %v3211 = vpack.c.b16 %v3027, %v3023
    %v3212 = vpack.c.b16 %v3032, %v3028
    %v3213 = vpack.c.b16 %v3033, %v3029
    %v3214 = vpack.c.b16 %v3034, %v3030
    %v3215 = vpack.c.b16 %v3035, %v3031
    %v3216 = vpack.c.b16 %v3040, %v3036
    %v3217 = vpack.c.b16 %v3041, %v3037
    %v3218 = vpack.c.b16 %v3042, %v3038
    %v3219 = vpack.c.b16 %v3043, %v3039
    %v3220 = vpack.c.b16 %v3048, %v3044
    %v3221 = vpack.c.b16 %v3049, %v3045
    %v3222 = vpack.c.b16 %v3050, %v3046
    %v3223 = vpack.c.b16 %v3051, %v3047
    %v3224 = vpack.c.b16 %v3056, %v3052
    %v3225 = vpack.c.b16 %v3057, %v3053
    %v3226 = vpack.c.b16 %v3058, %v3054
    %v3227 = vpack.c.b16 %v3059, %v3055
    %v3228 = vpack.c.b16 %v3064, %v3060
    %v3229 = vpack.c.b16 %v3065, %v3061
    %v3230 = vpack.c.b16 %v3066, %v3062
    %v3231 = vpack.c.b16 %v3067, %v3063
    %v3232 = vpack.c.b16 %v3072, %v3068
    %v3233 = vpack.c.b16 %v3073, %v3069
    %v3234 = vpack.c.b16 %v3074, %v3070
    %v3235 = vpack.c.b16 %v3075, %v3071
    %v3236 = vpack.c.b16 %v3080, %v3076
    %v3237 = vpack.c.b16 %v3081, %v3077
    %v3238 = vpack.c.b16 %v3082, %v3078
    %v3239 = vpack.c.b16 %v3083, %v3079
    %v3240 = vpack.c.b16 %v3088, %v3084
    %v3241 = vpack.c.b16 %v3089, %v3085
    %v3242 = vpack.c.b16 %v3090, %v3086
    %v3243 = vpack.c.b16 %v3091, %v3087
    %v3244 = vpack.c.b16 %v3096, %v3092
    %v3245 = vpack.c.b16 %v3097, %v3093
    %v3246 = vpack.c.b16 %v3098, %v3094
    %v3247 = vpack.c.b16 %v3099, %v3095
    %v3248 = vpack.c.b16 %v3104, %v3100
    %v3249 = vpack.c.b16 %v3105, %v3101
    %v3250 = vpack.c.b16 %v3106, %v3102
    %v3251 = vpack.c.b16 %v3107, %v3103
    %v3252 = vpack.c.b16 %v3112, %v3108
    %v3253 = vpack.c.b16 %v3113, %v3109
    %v3254 = vpack.c.b16 %v3114, %v3110
    %v3255 = vpack.c.b16 %v3115, %v3111
    %v3256 = vpack.c.b16 %v3120, %v3116
    %v3257 = vpack.c.b16 %v3121, %v3117
    %v3258 = vpack.c.b16 %v3122, %v3118
    %v3259 = vpack.c.b16 %v3123, %v3119
    %v3260 = vpack.c.b16 %v3128, %v3124
    %v3261 = vpack.c.b16 %v3129, %v3125
    %v3262 = vpack.c.b16 %v3130, %v3126
    %v3263 = vpack.c.b16 %v3131, %v3127
    %v3264 = vpack.c.b16 %v3136, %v3132
    %v3265 = vpack.c.b16 %v3137, %v3133
    %v3266 = vpack.c.b16 %v3138, %v3134
    %v3267 = vpack.c.b16 %v3139, %v3135
    %3396 = vmatprep.subr.bf16.mxu0 %v3141
    %3397 = vmatpush1.bf16.msra.mxu0 %v3140
    %3398 = vmatprep.subr.bf16.mxu0 %v3145
    %3399 = vmatpush1.bf16.msra.mxu0 %v3144
    %3400 = vmatprep.subr.bf16.mxu0 %v3149
    %3401 = vmatpush1.bf16.msra.mxu0 %v3148
    %3402 = vmatprep.subr.bf16.mxu0 %v3153
    %3403 = vmatpush1.bf16.msra.mxu0 %v3152
    %3404 = vmatprep.subr.bf16.mxu0 %v3157
    %3405 = vmatpush1.bf16.msra.mxu0 %v3156
    %3406 = vmatprep.subr.bf16.mxu0 %v3161
    %3407 = vmatpush1.bf16.msra.mxu0 %v3160
    %3408 = vmatprep.subr.bf16.mxu0 %v3165
    %3409 = vmatpush1.bf16.msra.mxu0 %v3164
    %3410 = vmatprep.subr.bf16.mxu0 %v3169
    %3411 = vmatpush1.bf16.msra.mxu0 %v3168
    %3412 = vmatprep.subr.bf16.mxu0 %v3173
    %3413 = vmatpush1.bf16.msra.mxu0 %v3172
    %3414 = vmatprep.subr.bf16.mxu0 %v3177
    %3415 = vmatpush1.bf16.msra.mxu0 %v3176
    %3416 = vmatprep.subr.bf16.mxu0 %v3181
    %3417 = vmatpush1.bf16.msra.mxu0 %v3180
    %3418 = vmatprep.subr.bf16.mxu0 %v3185
    %3419 = vmatpush1.bf16.msra.mxu0 %v3184
    %3420 = vmatprep.subr.bf16.mxu0 %v3189
    %3421 = vmatpush1.bf16.msra.mxu0 %v3188
    %3422 = vmatprep.subr.bf16.mxu0 %v3193
    %3423 = vmatpush1.bf16.msra.mxu0 %v3192
    %3424 = vmatprep.subr.bf16.mxu0 %v3197
    %3425 = vmatpush1.bf16.msra.mxu0 %v3196
    %3426 = vmatprep.subr.bf16.mxu0 %v3201
    %3427 = vmatpush1.bf16.msra.mxu0 %v3200
    %3428 = vmatprep.mubr.bf16.mxu0 %v2603
    %3429 = vmatmul.mubr.bf16.gmra.mrb[0].mxu0 %v2602
    %v3430 = vpop.f32.mrb[0].mxu0
    %v3431 = vadd.f32 %v2739, %v3430
    %v3432 = vpop.f32.mrb[0].mxu0
    %v3433 = vadd.f32 %v2743, %v3432
    %v3434 = vpop.f32.mrb[0].mxu0
    %v3435 = vpop.f32.mrb[0].mxu0
    %3436 = vdwg.mxu0
    %3437 = vmatprep.subr.bf16.mxu0 %v3205
    %3438 = vmatpush1.bf16.msra.mxu0 %v3204
    %3439 = vmatprep.subr.bf16.mxu0 %v3209
    %3440 = vmatpush1.bf16.msra.mxu0 %v3208
    %3441 = vmatprep.subr.bf16.mxu0 %v3213
    %3442 = vmatpush1.bf16.msra.mxu0 %v3212
    %3443 = vmatprep.subr.bf16.mxu0 %v3217
    %3444 = vmatpush1.bf16.msra.mxu0 %v3216
    %3445 = vmatprep.subr.bf16.mxu0 %v3221
    %3446 = vmatpush1.bf16.msra.mxu0 %v3220
    %3447 = vmatprep.subr.bf16.mxu0 %v3225
    %3448 = vmatpush1.bf16.msra.mxu0 %v3224
    %3449 = vmatprep.subr.bf16.mxu0 %v3229
    %3450 = vmatpush1.bf16.msra.mxu0 %v3228
    %3451 = vmatprep.subr.bf16.mxu0 %v3233
    %3452 = vmatpush1.bf16.msra.mxu0 %v3232
    %3453 = vmatprep.subr.bf16.mxu0 %v3237
    %3454 = vmatpush1.bf16.msra.mxu0 %v3236
    %3455 = vmatprep.subr.bf16.mxu0 %v3241
    %3456 = vmatpush1.bf16.msra.mxu0 %v3240
    %3457 = vmatprep.subr.bf16.mxu0 %v3245
    %3458 = vmatpush1.bf16.msra.mxu0 %v3244
    %3459 = vmatprep.subr.bf16.mxu0 %v3249
    %3460 = vmatpush1.bf16.msra.mxu0 %v3248
    %3461 = vmatprep.subr.bf16.mxu0 %v3253
    %3462 = vmatpush1.bf16.msra.mxu0 %v3252
    %3463 = vmatprep.subr.bf16.mxu0 %v3257
    %3464 = vmatpush1.bf16.msra.mxu0 %v3256
    %3465 = vmatprep.subr.bf16.mxu0 %v3261
    %3466 = vmatpush1.bf16.msra.mxu0 %v3260
    %3467 = vmatprep.subr.bf16.mxu0 %v3265
    %3468 = vmatpush1.bf16.msra.mxu0 %v3264
    %3469 = vmatprep.mubr.bf16.mxu0 %v2605
    %3470 = vmatmul.mubr.bf16.gmra.mrb[0].mxu0 %v2604
    %v3471 = vpop.f32.mrb[0].mxu0
    %v3472 = vadd.f32 %v3431, %v3471
    %v3473 = vpop.f32.mrb[0].mxu0
    %v3474 = vadd.f32 %v3433, %v3473
    %v3475 = vpop.f32.mrb[0].mxu0
    %v3476 = vpop.f32.mrb[0].mxu0
    %3477 = vdwg.mxu0
    %3478 = vmatprep.subr.bf16.mxu0 %v3143
    %3479 = vmatpush1.bf16.msra.mxu0 %v3142
    %3480 = vmatprep.subr.bf16.mxu0 %v3147
    %3481 = vmatpush1.bf16.msra.mxu0 %v3146
    %3482 = vmatprep.subr.bf16.mxu0 %v3151
    %3483 = vmatpush1.bf16.msra.mxu0 %v3150
    %3484 = vmatprep.subr.bf16.mxu0 %v3155
    %3485 = vmatpush1.bf16.msra.mxu0 %v3154
    %3486 = vmatprep.subr.bf16.mxu0 %v3159
    %3487 = vmatpush1.bf16.msra.mxu0 %v3158
    %3488 = vmatprep.subr.bf16.mxu0 %v3163
    %3489 = vmatpush1.bf16.msra.mxu0 %v3162
    %3490 = vmatprep.subr.bf16.mxu0 %v3167
    %3491 = vmatpush1.bf16.msra.mxu0 %v3166
    %3492 = vmatprep.subr.bf16.mxu0 %v3171
    %3493 = vmatpush1.bf16.msra.mxu0 %v3170
    %3494 = vmatprep.subr.bf16.mxu0 %v3175
    %3495 = vmatpush1.bf16.msra.mxu0 %v3174
    %3496 = vmatprep.subr.bf16.mxu0 %v3179
    %3497 = vmatpush1.bf16.msra.mxu0 %v3178
    %3498 = vmatprep.subr.bf16.mxu0 %v3183
    %3499 = vmatpush1.bf16.msra.mxu0 %v3182
    %3500 = vmatprep.subr.bf16.mxu0 %v3187
    %3501 = vmatpush1.bf16.msra.mxu0 %v3186
    %3502 = vmatprep.subr.bf16.mxu0 %v3191
    %3503 = vmatpush1.bf16.msra.mxu0 %v3190
    %3504 = vmatprep.subr.bf16.mxu0 %v3195
    %3505 = vmatpush1.bf16.msra.mxu0 %v3194
    %3506 = vmatprep.subr.bf16.mxu0 %v3199
    %3507 = vmatpush1.bf16.msra.mxu0 %v3198
    %3508 = vmatprep.subr.bf16.mxu0 %v3203
    %3509 = vmatpush1.bf16.msra.mxu0 %v3202
    %3510 = vmatprep.mubr.bf16.mxu0 %v2603
    %3511 = vmatmul.mubr.bf16.gmra.mrb[0].mxu0 %v2602
    %v3512 = vpop.f32.mrb[0].mxu0
    %v3513 = vadd.f32 %v2747, %v3512
    %v3514 = vpop.f32.mrb[0].mxu0
    %v3515 = vadd.f32 %v2751, %v3514
    %v3516 = vpop.f32.mrb[0].mxu0
    %v3517 = vpop.f32.mrb[0].mxu0
    %3518 = vdwg.mxu0
    %3519 = vmatprep.subr.bf16.mxu0 %v3207
    %3520 = vmatpush1.bf16.msra.mxu0 %v3206
    %3521 = vmatprep.subr.bf16.mxu0 %v3211
    %3522 = vmatpush1.bf16.msra.mxu0 %v3210
    %3523 = vmatprep.subr.bf16.mxu0 %v3215
    %3524 = vmatpush1.bf16.msra.mxu0 %v3214
    %3525 = vmatprep.subr.bf16.mxu0 %v3219
    %3526 = vmatpush1.bf16.msra.mxu0 %v3218
    %3527 = vmatprep.subr.bf16.mxu0 %v3223
    %3528 = vmatpush1.bf16.msra.mxu0 %v3222
    %3529 = vmatprep.subr.bf16.mxu0 %v3227
    %3530 = vmatpush1.bf16.msra.mxu0 %v3226
    %3531 = vmatprep.subr.bf16.mxu0 %v3231
    %3532 = vmatpush1.bf16.msra.mxu0 %v3230
    %3533 = vmatprep.subr.bf16.mxu0 %v3235
    %3534 = vmatpush1.bf16.msra.mxu0 %v3234
    %3535 = vmatprep.subr.bf16.mxu0 %v3239
    %3536 = vmatpush1.bf16.msra.mxu0 %v3238
    %3537 = vmatprep.subr.bf16.mxu0 %v3243
    %3538 = vmatpush1.bf16.msra.mxu0 %v3242
    %3539 = vmatprep.subr.bf16.mxu0 %v3247
    %3540 = vmatpush1.bf16.msra.mxu0 %v3246
    %3541 = vmatprep.subr.bf16.mxu0 %v3251
    %3542 = vmatpush1.bf16.msra.mxu0 %v3250
    %3543 = vmatprep.subr.bf16.mxu0 %v3255
    %3544 = vmatpush1.bf16.msra.mxu0 %v3254
    %3545 = vmatprep.subr.bf16.mxu0 %v3259
    %3546 = vmatpush1.bf16.msra.mxu0 %v3258
    %3547 = vmatprep.subr.bf16.mxu0 %v3263
    %3548 = vmatpush1.bf16.msra.mxu0 %v3262
    %3549 = vmatprep.subr.bf16.mxu0 %v3267
    %3550 = vmatpush1.bf16.msra.mxu0 %v3266
    %3551 = vmatprep.mubr.bf16.mxu0 %v2605
    %3552 = vmatmul.mubr.bf16.gmra.mrb[0].mxu0 %v2604
    %v3553 = vpop.f32.mrb[0].mxu0
    %v3554 = vadd.f32 %v3513, %v3553
    %v3555 = vpop.f32.mrb[0].mxu0
    %v3556 = vadd.f32 %v3515, %v3555
    %v3557 = vpop.f32.mrb[0].mxu0
    %v3558 = vpop.f32.mrb[0].mxu0
    %3559 = vdwg.mxu0
    %v3560 = vpack.c.bf16 %v3472, %v3472
    %v3561 = vpack.c.bf16 %v3474, %v3474
    %v3562 = vpack.c.bf16 %v3554, %v3554
    %v3563 = vpack.c.bf16 %v3556, %v3556
    %v3564 = vld [vmem:[#allocation10] sm:$0xf]
    %v3565 = vld [vmem:[#allocation10 + $0x4] sm:$0xf]
    %v3566 = vld [vmem:[#allocation10 + $0x8] sm:$0xf]
    %v3567 = vld [vmem:[#allocation10 + $0xc] sm:$0xf]
    %v3568 = vld [vmem:[#allocation10 + $0x10] sm:$0xf]
    %v3569 = vld [vmem:[#allocation10 + $0x14] sm:$0xf]
    %v3570 = vld [vmem:[#allocation10 + $0x18] sm:$0xf]
    %v3571 = vld [vmem:[#allocation10 + $0x1c] sm:$0xf]
    %v3572 = vld [vmem:[#allocation10 + $0x20] sm:$0xf]
    %v3573 = vld [vmem:[#allocation10 + $0x24] sm:$0xf]
    %v3574 = vld [vmem:[#allocation10 + $0x28] sm:$0xf]
    %v3575 = vld [vmem:[#allocation10 + $0x2c] sm:$0xf]
    %v3576 = vld [vmem:[#allocation10 + $0x30] sm:$0xf]
    %v3577 = vld [vmem:[#allocation10 + $0x34] sm:$0xf]
    %v3578 = vld [vmem:[#allocation10 + $0x38] sm:$0xf]
    %v3579 = vld [vmem:[#allocation10 + $0x3c] sm:$0xf]
    %v3580 = vld [vmem:[#allocation10 + $0x40] sm:$0xf]
    %v3581 = vld [vmem:[#allocation10 + $0x44] sm:$0xf]
    %v3582 = vld [vmem:[#allocation10 + $0x48] sm:$0xf]
    %v3583 = vld [vmem:[#allocation10 + $0x4c] sm:$0xf]
    %v3584 = vld [vmem:[#allocation10 + $0x50] sm:$0xf]
    %v3585 = vld [vmem:[#allocation10 + $0x54] sm:$0xf]
    %v3586 = vld [vmem:[#allocation10 + $0x58] sm:$0xf]
    %v3587 = vld [vmem:[#allocation10 + $0x5c] sm:$0xf]
    %v3588 = vld [vmem:[#allocation10 + $0x60] sm:$0xf]
    %v3589 = vld [vmem:[#allocation10 + $0x64] sm:$0xf]
    %v3590 = vld [vmem:[#allocation10 + $0x68] sm:$0xf]
    %v3591 = vld [vmem:[#allocation10 + $0x6c] sm:$0xf]
    %v3592 = vld [vmem:[#allocation10 + $0x70] sm:$0xf]
    %v3593 = vld [vmem:[#allocation10 + $0x74] sm:$0xf]
    %v3594 = vld [vmem:[#allocation10 + $0x78] sm:$0xf]
    %v3595 = vld [vmem:[#allocation10 + $0x7c] sm:$0xf]
    %v3596 = vld [vmem:[#allocation10 + $0x80] sm:$0xf]
    %v3597 = vld [vmem:[#allocation10 + $0x84] sm:$0xf]
    %v3598 = vld [vmem:[#allocation10 + $0x88] sm:$0xf]
    %v3599 = vld [vmem:[#allocation10 + $0x8c] sm:$0xf]
    %v3600 = vld [vmem:[#allocation10 + $0x90] sm:$0xf]
    %v3601 = vld [vmem:[#allocation10 + $0x94] sm:$0xf]
    %v3602 = vld [vmem:[#allocation10 + $0x98] sm:$0xf]
    %v3603 = vld [vmem:[#allocation10 + $0x9c] sm:$0xf]
    %v3604 = vld [vmem:[#allocation10 + $0xa0] sm:$0xf]
    %v3605 = vld [vmem:[#allocation10 + $0xa4] sm:$0xf]
    %v3606 = vld [vmem:[#allocation10 + $0xa8] sm:$0xf]
    %v3607 = vld [vmem:[#allocation10 + $0xac] sm:$0xf]
    %v3608 = vld [vmem:[#allocation10 + $0xb0] sm:$0xf]
    %v3609 = vld [vmem:[#allocation10 + $0xb4] sm:$0xf]
    %v3610 = vld [vmem:[#allocation10 + $0xb8] sm:$0xf]
    %v3611 = vld [vmem:[#allocation10 + $0xbc] sm:$0xf]
    %v3612 = vld [vmem:[#allocation10 + $0xc0] sm:$0xf]
    %v3613 = vld [vmem:[#allocation10 + $0xc4] sm:$0xf]
    %v3614 = vld [vmem:[#allocation10 + $0xc8] sm:$0xf]
    %v3615 = vld [vmem:[#allocation10 + $0xcc] sm:$0xf]
    %v3616 = vld [vmem:[#allocation10 + $0xd0] sm:$0xf]
    %v3617 = vld [vmem:[#allocation10 + $0xd4] sm:$0xf]
    %v3618 = vld [vmem:[#allocation10 + $0xd8] sm:$0xf]
    %v3619 = vld [vmem:[#allocation10 + $0xdc] sm:$0xf]
    %v3620 = vld [vmem:[#allocation10 + $0xe0] sm:$0xf]
    %v3621 = vld [vmem:[#allocation10 + $0xe4] sm:$0xf]
    %v3622 = vld [vmem:[#allocation10 + $0xe8] sm:$0xf]
    %v3623 = vld [vmem:[#allocation10 + $0xec] sm:$0xf]
    %v3624 = vld [vmem:[#allocation10 + $0xf0] sm:$0xf]
    %v3625 = vld [vmem:[#allocation10 + $0xf4] sm:$0xf]
    %v3626 = vld [vmem:[#allocation10 + $0xf8] sm:$0xf]
    %v3627 = vld [vmem:[#allocation10 + $0xfc] sm:$0xf]
    %v3628 = vld [vmem:[%s8] sm:$0x1]
    %v3630 = vlaneseq
    %v3631 = vshrl.u32 %v3630, 7
    %v3632 = vsub.s32 0, %v3631
    %v3633 = vrot.slane %v3628, %v3632
    %v3699 = vunpack.c.l.b16 %v3564
    %v3700 = vunpack.c.l.b16 %v3565
    %v3701 = vunpack.c.l.b16 %v3566
    %v3702 = vunpack.c.l.b16 %v3567
    %v3703 = vunpack.c.l.b16 %v3568
    %v3704 = vunpack.c.l.b16 %v3569
    %v3705 = vunpack.c.l.b16 %v3570
    %v3706 = vunpack.c.l.b16 %v3571
    %v3707 = vunpack.c.l.b16 %v3572
    %v3708 = vunpack.c.l.b16 %v3573
    %v3709 = vunpack.c.l.b16 %v3574
    %v3710 = vunpack.c.l.b16 %v3575
    %v3711 = vunpack.c.l.b16 %v3576
    %v3712 = vunpack.c.l.b16 %v3577
    %v3713 = vunpack.c.l.b16 %v3578
    %v3714 = vunpack.c.l.b16 %v3579
    %v3715 = vunpack.c.l.b16 %v3580
    %v3716 = vunpack.c.l.b16 %v3581
    %v3717 = vunpack.c.l.b16 %v3582
    %v3718 = vunpack.c.l.b16 %v3583
    %v3719 = vunpack.c.l.b16 %v3584
    %v3720 = vunpack.c.l.b16 %v3585
    %v3721 = vunpack.c.l.b16 %v3586
    %v3722 = vunpack.c.l.b16 %v3587
    %v3723 = vunpack.c.l.b16 %v3588
    %v3724 = vunpack.c.l.b16 %v3589
    %v3725 = vunpack.c.l.b16 %v3590
    %v3726 = vunpack.c.l.b16 %v3591
    %v3727 = vunpack.c.l.b16 %v3592
    %v3728 = vunpack.c.l.b16 %v3593
    %v3729 = vunpack.c.l.b16 %v3594
    %v3730 = vunpack.c.l.b16 %v3595
    %v3731 = vunpack.c.l.b16 %v3596
    %v3732 = vunpack.c.l.b16 %v3597
    %v3733 = vunpack.c.l.b16 %v3598
    %v3734 = vunpack.c.l.b16 %v3599
    %v3735 = vunpack.c.l.b16 %v3600
    %v3736 = vunpack.c.l.b16 %v3601
    %v3737 = vunpack.c.l.b16 %v3602
    %v3738 = vunpack.c.l.b16 %v3603
    %v3739 = vunpack.c.l.b16 %v3604
    %v3740 = vunpack.c.l.b16 %v3605
    %v3741 = vunpack.c.l.b16 %v3606
    %v3742 = vunpack.c.l.b16 %v3607
    %v3743 = vunpack.c.l.b16 %v3608
    %v3744 = vunpack.c.l.b16 %v3609
    %v3745 = vunpack.c.l.b16 %v3610
    %v3746 = vunpack.c.l.b16 %v3611
    %v3747 = vunpack.c.l.b16 %v3612
    %v3748 = vunpack.c.l.b16 %v3613
    %v3749 = vunpack.c.l.b16 %v3614
    %v3750 = vunpack.c.l.b16 %v3615
    %v3751 = vunpack.c.l.b16 %v3616
    %v3752 = vunpack.c.l.b16 %v3617
    %v3753 = vunpack.c.l.b16 %v3618
    %v3754 = vunpack.c.l.b16 %v3619
    %v3755 = vunpack.c.l.b16 %v3620
    %v3756 = vunpack.c.l.b16 %v3621
    %v3757 = vunpack.c.l.b16 %v3622
    %v3758 = vunpack.c.l.b16 %v3623
    %v3759 = vunpack.c.l.b16 %v3624
    %v3760 = vunpack.c.l.b16 %v3625
    %v3761 = vunpack.c.l.b16 %v3626
    %v3762 = vunpack.c.l.b16 %v3627
    %v3763 = vpack.c.b16 %v3700, %v3699
    %v3764 = vpack.c.b16 %v3702, %v3701
    %v3765 = vpack.c.b16 %v3704, %v3703
    %v3766 = vpack.c.b16 %v3706, %v3705
    %v3767 = vpack.c.b16 %v3708, %v3707
    %v3768 = vpack.c.b16 %v3710, %v3709
    %v3769 = vpack.c.b16 %v3712, %v3711
    %v3770 = vpack.c.b16 %v3714, %v3713
    %v3771 = vpack.c.b16 %v3716, %v3715
    %v3772 = vpack.c.b16 %v3718, %v3717
    %v3773 = vpack.c.b16 %v3720, %v3719
    %v3774 = vpack.c.b16 %v3722, %v3721
    %v3775 = vpack.c.b16 %v3724, %v3723
    %v3776 = vpack.c.b16 %v3726, %v3725
    %v3777 = vpack.c.b16 %v3728, %v3727
    %v3778 = vpack.c.b16 %v3730, %v3729
    %v3779 = vpack.c.b16 %v3732, %v3731
    %v3780 = vpack.c.b16 %v3734, %v3733
    %v3781 = vpack.c.b16 %v3736, %v3735
    %v3782 = vpack.c.b16 %v3738, %v3737
    %v3783 = vpack.c.b16 %v3740, %v3739
    %v3784 = vpack.c.b16 %v3742, %v3741
    %v3785 = vpack.c.b16 %v3744, %v3743
    %v3786 = vpack.c.b16 %v3746, %v3745
    %v3787 = vpack.c.b16 %v3748, %v3747
    %v3788 = vpack.c.b16 %v3750, %v3749
    %v3789 = vpack.c.b16 %v3752, %v3751
    %v3790 = vpack.c.b16 %v3754, %v3753
    %v3791 = vpack.c.b16 %v3756, %v3755
    %v3792 = vpack.c.b16 %v3758, %v3757
    %v3793 = vpack.c.b16 %v3760, %v3759
    %v3794 = vpack.c.b16 %v3762, %v3761
    %3827 = vmatprep.subr.bf16.mxu0 0
    %3828 = vmatpush1.bf16.msra.mxu0 %v3763
    %3829 = vmatprep.subr.bf16.mxu0 0
    %3830 = vmatpush1.bf16.msra.mxu0 %v3764
    %3831 = vmatprep.subr.bf16.mxu0 0
    %3832 = vmatpush1.bf16.msra.mxu0 %v3765
    %3833 = vmatprep.subr.bf16.mxu0 0
    %3834 = vmatpush1.bf16.msra.mxu0 %v3766
    %3835 = vmatprep.subr.bf16.mxu0 0
    %3836 = vmatpush1.bf16.msra.mxu0 %v3767
    %3837 = vmatprep.subr.bf16.mxu0 0
    %3838 = vmatpush1.bf16.msra.mxu0 %v3768
    %3839 = vmatprep.subr.bf16.mxu0 0
    %3840 = vmatpush1.bf16.msra.mxu0 %v3769
    %3841 = vmatprep.subr.bf16.mxu0 0
    %3842 = vmatpush1.bf16.msra.mxu0 %v3770
    %3843 = vmatprep.subr.bf16.mxu0 0
    %3844 = vmatpush1.bf16.msra.mxu0 %v3771
    %3845 = vmatprep.subr.bf16.mxu0 0
    %3846 = vmatpush1.bf16.msra.mxu0 %v3772
    %3847 = vmatprep.subr.bf16.mxu0 0
    %3848 = vmatpush1.bf16.msra.mxu0 %v3773
    %3849 = vmatprep.subr.bf16.mxu0 0
    %3850 = vmatpush1.bf16.msra.mxu0 %v3774
    %3851 = vmatprep.subr.bf16.mxu0 0
    %3852 = vmatpush1.bf16.msra.mxu0 %v3775
    %3853 = vmatprep.subr.bf16.mxu0 0
    %3854 = vmatpush1.bf16.msra.mxu0 %v3776
    %3855 = vmatprep.subr.bf16.mxu0 0
    %3856 = vmatpush1.bf16.msra.mxu0 %v3777
    %3857 = vmatprep.subr.bf16.mxu0 0
    %3858 = vmatpush1.bf16.msra.mxu0 %v3778
    %3859 = vmatprep.mubr.bf16.mxu0 %v3561
    %3860 = vmatmul.mubr.bf16.gmra.mrb[0].mxu0 %v3560
    %v3861 = vpop.f32.mrb[0].mxu0
    %v3862 = vadd.f32 %v3633, %v3861
    %v3863 = vpop.f32.mrb[0].mxu0
    %v3864 = vpop.f32.mrb[0].mxu0
    %v3865 = vpop.f32.mrb[0].mxu0
    %3866 = vdwg.mxu0
    %3867 = vmatprep.subr.bf16.mxu0 0
    %3868 = vmatpush1.bf16.msra.mxu0 %v3779
    %3869 = vmatprep.subr.bf16.mxu0 0
    %3870 = vmatpush1.bf16.msra.mxu0 %v3780
    %3871 = vmatprep.subr.bf16.mxu0 0
    %3872 = vmatpush1.bf16.msra.mxu0 %v3781
    %3873 = vmatprep.subr.bf16.mxu0 0
    %3874 = vmatpush1.bf16.msra.mxu0 %v3782
    %3875 = vmatprep.subr.bf16.mxu0 0
    %3876 = vmatpush1.bf16.msra.mxu0 %v3783
    %3877 = vmatprep.subr.bf16.mxu0 0
    %3878 = vmatpush1.bf16.msra.mxu0 %v3784
    %3879 = vmatprep.subr.bf16.mxu0 0
    %3880 = vmatpush1.bf16.msra.mxu0 %v3785
    %3881 = vmatprep.subr.bf16.mxu0 0
    %3882 = vmatpush1.bf16.msra.mxu0 %v3786
    %3883 = vmatprep.subr.bf16.mxu0 0
    %3884 = vmatpush1.bf16.msra.mxu0 %v3787
    %3885 = vmatprep.subr.bf16.mxu0 0
    %3886 = vmatpush1.bf16.msra.mxu0 %v3788
    %3887 = vmatprep.subr.bf16.mxu0 0
    %3888 = vmatpush1.bf16.msra.mxu0 %v3789
    %3889 = vmatprep.subr.bf16.mxu0 0
    %3890 = vmatpush1.bf16.msra.mxu0 %v3790
    %3891 = vmatprep.subr.bf16.mxu0 0
    %3892 = vmatpush1.bf16.msra.mxu0 %v3791
    %3893 = vmatprep.subr.bf16.mxu0 0
    %3894 = vmatpush1.bf16.msra.mxu0 %v3792
    %3895 = vmatprep.subr.bf16.mxu0 0
    %3896 = vmatpush1.bf16.msra.mxu0 %v3793
    %3897 = vmatprep.subr.bf16.mxu0 0
    %3898 = vmatpush1.bf16.msra.mxu0 %v3794
    %3899 = vmatprep.mubr.bf16.mxu0 %v3563
    %3900 = vmatmul.mubr.bf16.gmra.mrb[0].mxu0 %v3562
    %v3901 = vpop.f32.mrb[0].mxu0
    %v3902 = vadd.f32 %v3862, %v3901
    %v3903 = vpop.f32.mrb[0].mxu0
    %v3904 = vpop.f32.mrb[0].mxu0
    %v3905 = vpop.f32.mrb[0].mxu0
    %3906 = vdwg.mxu0
    %3907 = vst [vmem:[#allocation11] sm:$0xff] %v3902
    // Predicated region
    $region58: #{tpu_custom_call.1} parent=1 // pred_check
      _
    $region59: #{tpu_custom_call.1} parent=1 // pred_check_branch
      %3909 = sbr.rel (0) target = $region61
    $region60: #{tpu_custom_call.1} parent=1 // pred_region
      %s3911 = ssub.s32 128, 128
      %3912 = vsyncadd [#allocation4], %s3911
      %s3914 = sshll.u32 [#allocation11], 4
      %s3915 = int_to_ptr.vmem [resolvable:$true] %s3914
      %3917 = dma.vmem_to_hbm [thread:$0]  %s3915, 128, %s9, [#allocation4]
    $region61: #{tpu_custom_call.1} parent=1 // pred_fallthru
      _
    // Predicated region
    $region62: #{tpu_custom_call.1} parent=1 // pred_check
      _
    $region63: #{tpu_custom_call.1} parent=1 // pred_check_branch
      %3919 = sbr.rel (0) target = $region65
    $region64: #{tpu_custom_call.1} parent=1 // pred_region
      %3920 = dma.done [#allocation4], 128
    $region65: #{tpu_custom_call.1} parent=1 // pred_fallthru
      _
    %3921 = vsyncpa [#allocation3], 1
    %3922 = vsyncpa [#allocation6], 1
    %3923 = vsyncpa [#allocation9], 1
    %3924 = vsyncpa [#allocation4], 1

</llo_original>
